<compile_context>
chip_gen: v5e
topology: v5e:2x2
jax: 0.10.0
libtpu: 0.0.40
codegen_flags: <defaults>
</compile_context>

<pallas_src>
import functools

import jax
import jax.numpy as jnp
from jax import lax
from jax.experimental import pallas as pl
from jax.experimental.pallas import tpu as pltpu


def _fused_conv_kernel(
    x_ref, w1_ref, w2_ref, o_ref, p_ref,
    *, K, Hq, Ho, Wo, stride, dilation, bt,
):
    # x_ref : (bt, s*s*Hq, Wq, Cin)   phase-split, zero-padded NHWC input block
    # w1_ref: (rank, K*K*Cin)         conv1 weights, im2col-ordered
    # w2_ref: (Cout, rank)            conv2 (1x1) weights
    # o_ref : (bt, Cout, S)           channel-major output block (S = Ho*Wo)
    # p_ref : (bt*S, K*K*Cin)         VMEM im2col scratch (MXU operand dtype)
    Cin = x_ref.shape[-1]
    S = Ho * Wo
    s = stride

    # ---- im2col: K*K static, contiguous ref slices -> one lane-dense P -----
    for kh in range(K):
        for kw in range(K):
            t = kh * K + kw
            # phase / within-phase offsets (all Python-static ints)
            rh, qh = (kh * dilation) % s, (kh * dilation) // s
            rw, qw = (kw * dilation) % s, (kw * dilation) // s
            row0 = (rh * s + rw) * Hq + qh
            patch = x_ref[:, pl.ds(row0, Ho), pl.ds(qw, Wo), :]   # (bt,Ho,Wo,Cin)
            p_ref[:, t * Cin:(t + 1) * Cin] = (
                patch.reshape(bt * S, Cin).astype(p_ref.dtype))

    # ---- one deep (K*K*Cin) contraction + tiny rank->Cout epilogue ---------
    pm = p_ref[...]                                               # (bt*S, KKC)
    m1 = lax.dot_general(                                         # (rank, bt*S)
        w1_ref[...], pm, (((1,), (1,)), ((), ())),
        preferred_element_type=jnp.float32)
    out = lax.dot_general(                                        # (Cout, bt*S)
        w2_ref[...], m1.astype(w2_ref.dtype), (((1,), (0,)), ((), ())),
        preferred_element_type=jnp.float32)

    # Per-image store: static lane slices of the lane-dense result.
    for b in range(bt):
        o_ref[b] = out[:, b * S:(b + 1) * S].astype(o_ref.dtype)


def _vmem_budget():
    """(per-step block-bytes budget, scoped vmem limit) per TPU generation."""
    try:
        kind = jax.devices()[0].device_kind.lower()
    except Exception:  # pragma: no cover - be safe on odd backends
        kind = ""
    if "v7" in kind or "tpu7" in kind:
        # v7x: 64 MiB VMEM per TensorCore -> keep per-step blocks modest.
        return 10 << 20, 32 << 20
    # v5e / v6e (and other 128 MiB parts).
    return 24 << 20, 64 << 20


def _pick_batch_block(n, per_image_bytes, budget_bytes):
    """Largest divisor of n whose per-step footprint fits the budget.

    No ">= 2 grid steps" constraint: v5e/v6e are single-TensorCore, so extra
    grid steps only add ~0.35us fixed overhead each.  (On v7x, multiple steps
    arise naturally from the smaller budget once images are big enough.)
    """
    best = 1
    for cand in range(1, n + 1):
        if n % cand == 0 and cand * per_image_bytes <= budget_bytes:
            best = cand
    return best


def fused_factorized_conv(x_nchw, conv1_weight, conv2_weight,
                          padding, stride, dilation, mxu_dtype=None):
    """Pallas implementation of FusedConvKernel.forward.

    x_nchw       : (N, Cin, H, W)      -- PyTorch NCHW input
    conv1_weight : (rank, Cin, K, K)   -- OIHW
    conv2_weight : (Cout, rank, 1, 1)  -- OIHW
    mxu_dtype    : optional matmul operand dtype (e.g. jnp.bfloat16 on
                   v6e/v7x); accumulation is always f32.
    returns      : (N, Cout, Ho, Wo)   -- NCHW, matching F.conv2d -> F.conv2d
    """
    N, Cin, H, W = x_nchw.shape
    rank, _, K, _ = conv1_weight.shape
    Cout = conv2_weight.shape[0]
    s, d, pad = int(stride), int(dilation), int(padding)

    Ho = (H + 2 * pad - d * (K - 1) - 1) // s + 1
    Wo = (W + 2 * pad - d * (K - 1) - 1) // s + 1
    S = Ho * Wo
    Hq = pl.cdiv(H + 2 * pad, s)
    Wq = pl.cdiv(W + 2 * pad, s)
    KKC = K * K * Cin

    if mxu_dtype is None:
        mxu_dtype = x_nchw.dtype
    mxu_dtype = jnp.dtype(mxu_dtype)

    # --- single wrapper relayout pass: NCHW->NHWC + zero pad + phase split ---
    # x_ph[n, (phi*s+pwi)*Hq + hq, wq, c] = x_padded[n, hq*s+phi, wq*s+pwi, c]
    # so every (kh, kw, stride, dilation) tap in the kernel is a static,
    # contiguous slice (no strided loads / gathers needed).
    x_nhwc = jnp.transpose(x_nchw, (0, 2, 3, 1)).astype(mxu_dtype)
    x_padded = jnp.pad(
        x_nhwc,
        ((0, 0), (pad, Hq * s - H - pad), (pad, Wq * s - W - pad), (0, 0)))
    if s == 1:
        x_ph = x_padded                                      # (N, Hq, Wq, Cin)
    else:
        x_ph = x_padded.reshape(N, Hq, s, Wq, s, Cin)
        x_ph = jnp.transpose(x_ph, (0, 2, 4, 1, 3, 5))
        x_ph = x_ph.reshape(N, s * s * Hq, Wq, Cin)

    # Weights: conv1 in im2col order (rank, K*K*Cin); conv2 as (Cout, rank).
    w1_r = jnp.transpose(conv1_weight, (0, 2, 3, 1)).reshape(rank, KKC)
    w1_r = w1_r.astype(mxu_dtype)
    w2_r = conv2_weight[:, :, 0, 0].astype(mxu_dtype)

    # --- VMEM-budgeted batch blocking (accounts for double buffering) -------
    block_budget, vmem_limit = _vmem_budget()
    item_x = mxu_dtype.itemsize
    item_o = jnp.dtype(x_nchw.dtype).itemsize
    per_image_bytes = (
        2 * s * s * Hq * Wq * Cin * item_x      # input block, double-buffered
        + 2 * Cout * S * item_o                 # output block, double-buffered
        + S * KKC * item_x                      # im2col scratch
        + (rank + Cout + Cin) * S * 4)          # f32 matmul / patch temporaries
    bt = _pick_batch_block(N, per_image_bytes, block_budget)

    kernel = functools.partial(
        _fused_conv_kernel,
        K=K, Hq=Hq, Ho=Ho, Wo=Wo, stride=s, dilation=d, bt=bt,
    )

    flops = 2 * N * S * (KKC * rank + rank * Cout)
    bytes_accessed = (N * s * s * Hq * Wq * Cin * item_x
                      + (rank * KKC + Cout * rank) * item_x
                      + N * Cout * S * item_o)

    out_flat = pl.pallas_call(
        kernel,
        out_shape=jax.ShapeDtypeStruct((N, Cout, S), x_nchw.dtype),
        grid_spec=pltpu.PrefetchScalarGridSpec(
            num_scalar_prefetch=0,
            grid=(N // bt,),
            in_specs=[
                pl.BlockSpec((bt, s * s * Hq, Wq, Cin),
                             lambda n: (n, 0, 0, 0)),
                pl.BlockSpec((rank, KKC), lambda n: (0, 0)),
                pl.BlockSpec((Cout, rank), lambda n: (0, 0)),
            ],
            out_specs=pl.BlockSpec((bt, Cout, S), lambda n: (n, 0, 0)),
            scratch_shapes=[pltpu.VMEM((bt * S, KKC), mxu_dtype)],
        ),
        compiler_params=pltpu.CompilerParams(
            dimension_semantics=("parallel",),
            vmem_limit_bytes=vmem_limit,
        ),
        cost_estimate=pl.CostEstimate(
            flops=int(flops), transcendentals=0,
            bytes_accessed=int(bytes_accessed)),
    )(x_ph, w1_r, w2_r)

    # Channel-major (N, Cout, Ho*Wo) -> NCHW is a free reshape.
    return out_flat.reshape(N, Cout, Ho, Wo)


def _reference_forward(x, w1, w2, padding, stride, dilation):
    """Plain-JAX reference matching F.conv2d -> F.conv2d."""
    dn1 = lax.conv_dimension_numbers(x.shape, w1.shape, ("NCHW", "OIHW", "NCHW"))
    y = lax.conv_general_dilated(
        x, w1,
        window_strides=(stride, stride),
        padding=[(padding, padding), (padding, padding)],
        rhs_dilation=(dilation, dilation),
        dimension_numbers=dn1,
    )
    dn2 = lax.conv_dimension_numbers(y.shape, w2.shape, ("NCHW", "OIHW", "NCHW"))
    return lax.conv_general_dilated(
        y, w2, window_strides=(1, 1), padding=[(0, 0), (0, 0)],
        dimension_numbers=dn2,
    )


if __name__ == "__main__":
    # Module config (constructor args of FusedConvKernel).
    in_dim, out_dim = 32, 64
    kernel_size = 3
    factorization_ratio = 0.125
    rank = int(factorization_ratio * min(in_dim, out_dim))  # = 4

    key = jax.random.PRNGKey(0)
    kx, k1, k2 = jax.random.split(key, 3)
    x = jax.random.normal(kx, (2, in_dim, 16, 16), dtype=jnp.float32)        # NCHW
    conv1_weight = jax.random.normal(
        k1, (rank, in_dim, kernel_size, kernel_size), dtype=jnp.float32)
    conv2_weight = jax.random.normal(k2, (out_dim, rank, 1, 1), dtype=jnp.float32)

    # Exercise padding / stride / dilation paths (review correctness concern).
    configs = [
        dict(padding=1, stride=1, dilation=1),
        dict(padding=2, stride=1, dilation=2),
        dict(padding=1, stride=2, dilation=1),
    ]
    for cfg in configs:
        out = jax.block_until_ready(
            fused_factorized_conv(x, conv1_weight, conv2_weight, **cfg))
        ref = jax.block_until_ready(
            _reference_forward(x, conv1_weight, conv2_weight, **cfg))
        assert out.shape == ref.shape, (cfg, out.shape, ref.shape)
        assert jnp.allclose(out, ref, rtol=1e-2, atol=1e-2), (
            cfg, float(jnp.max(jnp.abs(out - ref))))

    # bf16 MXU operands (f32 accumulate): the cheap v6e/v7x throughput path.
    # Intentional precision change -> scale-aware tolerance (output std ~34).
    cfg = configs[0]
    out_bf16 = jax.block_until_ready(
        fused_factorized_conv(x, conv1_weight, conv2_weight,
                              mxu_dtype=jnp.bfloat16, **cfg))
    ref = _reference_forward(x, conv1_weight, conv2_weight, **cfg)
    tol = 4e-2 * float(jnp.std(ref)) + 1e-2
    assert float(jnp.max(jnp.abs(out_bf16 - ref))) <= tol, (
        float(jnp.max(jnp.abs(out_bf16 - ref))), tol)

    print("KERNEL_OK")
</pallas_src>

<mosaic_0001>
module attributes {stable_mosaic.version = 11 : i64} {
  func.func @_fused_conv_kernel(%arg0: i32, %arg1: memref<2x18x18x32xf32, #tpu.memory_space<vmem>>, %arg2: memref<4x288xf32, #tpu.memory_space<vmem>>, %arg3: memref<64x4xf32, #tpu.memory_space<vmem>>, %arg4: memref<2x64x256xf32, #tpu.memory_space<vmem>>, %arg5: memref<512x288xf32, #tpu.memory_space<vmem>>) attributes {dimension_semantics = [#tpu.dimension_semantics<parallel>], iteration_bounds = array<i64: 1>, scalar_prefetch = 0 : i64, scratch_operands = 1 : i64, tpu.core_type = #tpu.core_type<tc>, window_params = [{transform_indices = @transform_0, window_bounds = array<i64: 2, 18, 18, 32>}, {pipeline_mode = #tpu.pipeline_mode<synchronous>, transform_indices = @transform_1, window_bounds = array<i64: 4, 288>}, {pipeline_mode = #tpu.pipeline_mode<synchronous>, transform_indices = @transform_2, window_bounds = array<i64: 64, 4>}, {transform_indices = @transform_3, window_bounds = array<i64: 2, 64, 256>}]} {
    %c0 = arith.constant 0 : index
    %c0_0 = arith.constant 0 : index
    %c0_1 = arith.constant 0 : index
    %c0_2 = arith.constant 0 : index
    %0 = vector.load %arg1[%c0, %c0_0, %c0_1, %c0_2] : memref<2x18x18x32xf32, #tpu.memory_space<vmem>>, vector<2x16x16x32xf32>
    %1 = vector.shape_cast %0 : vector<2x16x16x32xf32> to vector<512x32xf32>
    %c0_3 = arith.constant 0 : index
    %c0_4 = arith.constant 0 : index
    %2 = vector.load %arg5[%c0_3, %c0_4] : memref<512x288xf32, #tpu.memory_space<vmem>>, vector<512x32xf32>
    tpu.vector_store %arg5[%c0_3, %c0_4], %1 {strides = array<i32>} : memref<512x288xf32, #tpu.memory_space<vmem>>, vector<512x32xf32>,
    %c0_5 = arith.constant 0 : index
    %c0_6 = arith.constant 0 : index
    %c1 = arith.constant 1 : index
    %c0_7 = arith.constant 0 : index
    %3 = vector.load %arg1[%c0_5, %c0_6, %c1, %c0_7] : memref<2x18x18x32xf32, #tpu.memory_space<vmem>>, vector<2x16x16x32xf32>
    %4 = vector.shape_cast %3 : vector<2x16x16x32xf32> to vector<512x32xf32>
    %c0_8 = arith.constant 0 : index
    %c32 = arith.constant 32 : index
    %5 = vector.load %arg5[%c0_8, %c32] : memref<512x288xf32, #tpu.memory_space<vmem>>, vector<512x32xf32>
    tpu.vector_store %arg5[%c0_8, %c32], %4 {strides = array<i32>} : memref<512x288xf32, #tpu.memory_space<vmem>>, vector<512x32xf32>,
    %c0_9 = arith.constant 0 : index
    %c0_10 = arith.constant 0 : index
    %c2 = arith.constant 2 : index
    %c0_11 = arith.constant 0 : index
    %6 = vector.load %arg1[%c0_9, %c0_10, %c2, %c0_11] : memref<2x18x18x32xf32, #tpu.memory_space<vmem>>, vector<2x16x16x32xf32>
    %7 = vector.shape_cast %6 : vector<2x16x16x32xf32> to vector<512x32xf32>
    %c0_12 = arith.constant 0 : index
    %c64 = arith.constant 64 : index
    %8 = vector.load %arg5[%c0_12, %c64] : memref<512x288xf32, #tpu.memory_space<vmem>>, vector<512x32xf32>
    tpu.vector_store %arg5[%c0_12, %c64], %7 {strides = array<i32>} : memref<512x288xf32, #tpu.memory_space<vmem>>, vector<512x32xf32>,
    %c0_13 = arith.constant 0 : index
    %c1_14 = arith.constant 1 : index
    %c0_15 = arith.constant 0 : index
    %c0_16 = arith.constant 0 : index
    %9 = vector.load %arg1[%c0_13, %c1_14, %c0_15, %c0_16] : memref<2x18x18x32xf32, #tpu.memory_space<vmem>>, vector<2x16x16x32xf32>
    %10 = vector.shape_cast %9 : vector<2x16x16x32xf32> to vector<512x32xf32>
    %c0_17 = arith.constant 0 : index
    %c96 = arith.constant 96 : index
    %11 = vector.load %arg5[%c0_17, %c96] : memref<512x288xf32, #tpu.memory_space<vmem>>, vector<512x32xf32>
    tpu.vector_store %arg5[%c0_17, %c96], %10 {strides = array<i32>} : memref<512x288xf32, #tpu.memory_space<vmem>>, vector<512x32xf32>,
    %c0_18 = arith.constant 0 : index
    %c1_19 = arith.constant 1 : index
    %c1_20 = arith.constant 1 : index
    %c0_21 = arith.constant 0 : index
    %12 = vector.load %arg1[%c0_18, %c1_19, %c1_20, %c0_21] : memref<2x18x18x32xf32, #tpu.memory_space<vmem>>, vector<2x16x16x32xf32>
    %13 = vector.shape_cast %12 : vector<2x16x16x32xf32> to vector<512x32xf32>
    %c0_22 = arith.constant 0 : index
    %c128 = arith.constant 128 : index
    %14 = vector.load %arg5[%c0_22, %c128] : memref<512x288xf32, #tpu.memory_space<vmem>>, vector<512x32xf32>
    tpu.vector_store %arg5[%c0_22, %c128], %13 {strides = array<i32>} : memref<512x288xf32, #tpu.memory_space<vmem>>, vector<512x32xf32>,
    %c0_23 = arith.constant 0 : index
    %c1_24 = arith.constant 1 : index
    %c2_25 = arith.constant 2 : index
    %c0_26 = arith.constant 0 : index
    %15 = vector.load %arg1[%c0_23, %c1_24, %c2_25, %c0_26] : memref<2x18x18x32xf32, #tpu.memory_space<vmem>>, vector<2x16x16x32xf32>
    %16 = vector.shape_cast %15 : vector<2x16x16x32xf32> to vector<512x32xf32>
    %c0_27 = arith.constant 0 : index
    %c160 = arith.constant 160 : index
    %17 = vector.load %arg5[%c0_27, %c160] : memref<512x288xf32, #tpu.memory_space<vmem>>, vector<512x32xf32>
    tpu.vector_store %arg5[%c0_27, %c160], %16 {strides = array<i32>} : memref<512x288xf32, #tpu.memory_space<vmem>>, vector<512x32xf32>,
    %c0_28 = arith.constant 0 : index
    %c2_29 = arith.constant 2 : index
    %c0_30 = arith.constant 0 : index
    %c0_31 = arith.constant 0 : index
    %18 = vector.load %arg1[%c0_28, %c2_29, %c0_30, %c0_31] : memref<2x18x18x32xf32, #tpu.memory_space<vmem>>, vector<2x16x16x32xf32>
    %19 = vector.shape_cast %18 : vector<2x16x16x32xf32> to vector<512x32xf32>
    %c0_32 = arith.constant 0 : index
    %c192 = arith.constant 192 : index
    %20 = vector.load %arg5[%c0_32, %c192] : memref<512x288xf32, #tpu.memory_space<vmem>>, vector<512x32xf32>
    tpu.vector_store %arg5[%c0_32, %c192], %19 {strides = array<i32>} : memref<512x288xf32, #tpu.memory_space<vmem>>, vector<512x32xf32>,
    %c0_33 = arith.constant 0 : index
    %c2_34 = arith.constant 2 : index
    %c1_35 = arith.constant 1 : index
    %c0_36 = arith.constant 0 : index
    %21 = vector.load %arg1[%c0_33, %c2_34, %c1_35, %c0_36] : memref<2x18x18x32xf32, #tpu.memory_space<vmem>>, vector<2x16x16x32xf32>
    %22 = vector.shape_cast %21 : vector<2x16x16x32xf32> to vector<512x32xf32>
    %c0_37 = arith.constant 0 : index
    %c224 = arith.constant 224 : index
    %23 = vector.load %arg5[%c0_37, %c224] : memref<512x288xf32, #tpu.memory_space<vmem>>, vector<512x32xf32>
    tpu.vector_store %arg5[%c0_37, %c224], %22 {strides = array<i32>} : memref<512x288xf32, #tpu.memory_space<vmem>>, vector<512x32xf32>,
    %c0_38 = arith.constant 0 : index
    %c2_39 = arith.constant 2 : index
    %c2_40 = arith.constant 2 : index
    %c0_41 = arith.constant 0 : index
    %24 = vector.load %arg1[%c0_38, %c2_39, %c2_40, %c0_41] : memref<2x18x18x32xf32, #tpu.memory_space<vmem>>, vector<2x16x16x32xf32>
    %25 = vector.shape_cast %24 : vector<2x16x16x32xf32> to vector<512x32xf32>
    %c0_42 = arith.constant 0 : index
    %c256 = arith.constant 256 : index
    %26 = vector.load %arg5[%c0_42, %c256] : memref<512x288xf32, #tpu.memory_space<vmem>>, vector<512x32xf32>
    tpu.vector_store %arg5[%c0_42, %c256], %25 {strides = array<i32>} : memref<512x288xf32, #tpu.memory_space<vmem>>, vector<512x32xf32>,
    %c0_43 = arith.constant 0 : index
    %c0_44 = arith.constant 0 : index
    %27 = vector.load %arg5[%c0_43, %c0_44] : memref<512x288xf32, #tpu.memory_space<vmem>>, vector<512x288xf32>
    %c0_45 = arith.constant 0 : index
    %c0_46 = arith.constant 0 : index
    %28 = vector.load %arg2[%c0_45, %c0_46] : memref<4x288xf32, #tpu.memory_space<vmem>>, vector<4x288xf32>
    %cst = arith.constant dense<0.000000e+00> : vector<4x512xf32>
    %29 = tpu.matmul %28, %27, %cst {dimension_numbers = #tpu.dot_dimension_numbers<[1], [1], [0], [0], [0, 0, 1, 0], [], []>} : vector<4x288xf32>, vector<512x288xf32>, vector<4x512xf32> -> vector<4x512xf32>
    %c0_47 = arith.constant 0 : index
    %c0_48 = arith.constant 0 : index
    %30 = vector.load %arg3[%c0_47, %c0_48] : memref<64x4xf32, #tpu.memory_space<vmem>>, vector<64x4xf32>
    %cst_49 = arith.constant dense<0.000000e+00> : vector<64x512xf32>
    %31 = tpu.matmul %30, %29, %cst_49 {dimension_numbers = #tpu.dot_dimension_numbers<[1], [0], [0], [1], [0, 0, 1, 1], [], []>} : vector<64x4xf32>, vector<4x512xf32>, vector<64x512xf32> -> vector<64x512xf32>
    %32 = vector.extract_strided_slice %31 {offsets = [0, 0], sizes = [64, 256], strides = [1, 1]} : vector<64x512xf32> to vector<64x256xf32>
    %c0_50 = arith.constant 0 : index
    %c0_51 = arith.constant 0 : index
    %c0_52 = arith.constant 0 : index
    %33 = vector.load %arg4[%c0_50, %c0_51, %c0_52] : memref<2x64x256xf32, #tpu.memory_space<vmem>>, vector<1x64x256xf32>
    %34 = vector.shape_cast %33 : vector<1x64x256xf32> to vector<64x256xf32>
    %35 = vector.shape_cast %32 : vector<64x256xf32> to vector<1x64x256xf32>
    tpu.vector_store %arg4[%c0_50, %c0_51, %c0_52], %35 {strides = array<i32>} : memref<2x64x256xf32, #tpu.memory_space<vmem>>, vector<1x64x256xf32>,
    %36 = vector.extract_strided_slice %31 {offsets = [0, 256], sizes = [64, 256], strides = [1, 1]} : vector<64x512xf32> to vector<64x256xf32>
    %c1_53 = arith.constant 1 : index
    %c0_54 = arith.constant 0 : index
    %c0_55 = arith.constant 0 : index
    %37 = vector.load %arg4[%c1_53, %c0_54, %c0_55] : memref<2x64x256xf32, #tpu.memory_space<vmem>>, vector<1x64x256xf32>
    %38 = vector.shape_cast %37 : vector<1x64x256xf32> to vector<64x256xf32>
    %39 = vector.shape_cast %36 : vector<64x256xf32> to vector<1x64x256xf32>
    tpu.vector_store %arg4[%c1_53, %c0_54, %c0_55], %39 {strides = array<i32>} : memref<2x64x256xf32, #tpu.memory_space<vmem>>, vector<1x64x256xf32>,
    return
  }
  func.func @transform_0(%arg0: i32) -> (i32, i32, i32, i32) {
    %c0_i32 = arith.constant 0 : i32
    %c0_i32_0 = arith.constant 0 : i32
    %c0_i32_1 = arith.constant 0 : i32
    %c0_i32_2 = arith.constant 0 : i32
    return %arg0, %c0_i32, %c0_i32_0, %c0_i32_1 : i32, i32, i32, i32
  }
  func.func @transform_1(%arg0: i32) -> (i32, i32) {
    %c0_i32 = arith.constant 0 : i32
    %c0_i32_0 = arith.constant 0 : i32
    %c0_i32_1 = arith.constant 0 : i32
    return %c0_i32, %c0_i32_0 : i32, i32
  }
  func.func @transform_2(%arg0: i32) -> (i32, i32) {
    %c0_i32 = arith.constant 0 : i32
    %c0_i32_0 = arith.constant 0 : i32
    %c0_i32_1 = arith.constant 0 : i32
    return %c0_i32, %c0_i32_0 : i32, i32
  }
  func.func @transform_3(%arg0: i32) -> (i32, i32, i32) {
    %c0_i32 = arith.constant 0 : i32
    %c0_i32_0 = arith.constant 0 : i32
    %c0_i32_1 = arith.constant 0 : i32
    return %arg0, %c0_i32, %c0_i32_0 : i32, i32, i32
  }
}

</mosaic_0001>

<llo_original>
// kernel: tpu_custom_call.1
$region0: #{tpu_custom_call.1}
  #allocation0 [shape = 'u32[]', space=smem, size = 0x4, offset = 0x4, fixed_abs, tag = 'smem constant byte address 0x4 - core index']
  #allocation1 [shape = 'u32[72,128]{1,0:T(1,128)}', space=vmem, size = 0x9000, scoped, tag = 'internal scratch']
  #allocation2 [shape = 'f32[512,288]{1,0:T(8,128)}', space=vmem, size = 0xc0000, scoped, tag = 'scratch operand']
  %s0 = inlined_call_operand.vmem [shape: f32[2,18,18,32], index: 0, kind: input, shape index: {}]
  %s1 = inlined_call_operand.vmem [shape: f32[4,288], index: 1, kind: input, shape index: {}]
  %s2 = inlined_call_operand.vmem [shape: f32[64,4], index: 2, kind: input, shape index: {}]
  %s3 = inlined_call_operand.hbm [shape: f32[2,64,256], index: 3, kind: output, shape index: {}]
  %s4 = sld [smem:[#allocation0]]
  $region22: #{tpu_custom_call.1} parent=0
    _
  %s6 = ssub.s32 1, %s4
  %s7 = scalar_select 0, %s6, %s4
  $region1: #{tpu_custom_call.1} parent=0
    #allocation3 [shape = 'u8[131072]{0}', space=vmem, size = 0x20000, scoped, tag = 'output window, operand 0, single buffered']
    #allocation4 [shape = 's32[1]{0}', space=sflag, size = 0x4, scoped, tag = 'scoped memory for tpu_custom_call.1']
    %8 = vsyncpa [#allocation4], 0
    // Predicated region
    $region2: #{tpu_custom_call.1} parent=1 // pred_check
      _
    $region3: #{tpu_custom_call.1} parent=1 // pred_check_branch
      %10 = sbr.rel (0) target = $region5
    $region4: #{tpu_custom_call.1} parent=1 // pred_region
      _
    $region5: #{tpu_custom_call.1} parent=1 // pred_fallthru
      _
    // Predicated region
    $region6: #{tpu_custom_call.1} parent=1 // pred_check
      _
    $region7: #{tpu_custom_call.1} parent=1 // pred_check_branch
      %12 = sbr.rel (0) target = $region9
    $region8: #{tpu_custom_call.1} parent=1 // pred_region
      _
    $region9: #{tpu_custom_call.1} parent=1 // pred_fallthru
      _
    // Predicated region
    $region10: #{tpu_custom_call.1} parent=1 // pred_check
      _
    $region11: #{tpu_custom_call.1} parent=1 // pred_check_branch
      %14 = sbr.rel (0) target = $region13
    $region12: #{tpu_custom_call.1} parent=1 // pred_region
      _
    $region13: #{tpu_custom_call.1} parent=1 // pred_fallthru
      _
    %v15 = vld [vmem:[%s0] sm:$0xff]
    %v16 = vld [vmem:[%s0 + $0x8] sm:$0xff]
    %v17 = vld [vmem:[%s0 + $0x18] sm:$0xff]
    %v18 = vld [vmem:[%s0 + $0x20] sm:$0xff]
    %v19 = vld [vmem:[%s0 + $0x30] sm:$0xff]
    %v20 = vld [vmem:[%s0 + $0x38] sm:$0xff]
    %v21 = vld [vmem:[%s0 + $0x48] sm:$0xff]
    %v22 = vld [vmem:[%s0 + $0x50] sm:$0xff]
    %v23 = vld [vmem:[%s0 + $0x60] sm:$0xff]
    %v24 = vld [vmem:[%s0 + $0x68] sm:$0xff]
    %v25 = vld [vmem:[%s0 + $0x78] sm:$0xff]
    %v26 = vld [vmem:[%s0 + $0x80] sm:$0xff]
    %v27 = vld [vmem:[%s0 + $0x90] sm:$0xff]
    %v28 = vld [vmem:[%s0 + $0x98] sm:$0xff]
    %v29 = vld [vmem:[%s0 + $0xa8] sm:$0xff]
    %v30 = vld [vmem:[%s0 + $0xb0] sm:$0xff]
    %v31 = vld [vmem:[%s0 + $0xc0] sm:$0xff]
    %v32 = vld [vmem:[%s0 + $0xc8] sm:$0xff]
    %v33 = vld [vmem:[%s0 + $0xd8] sm:$0xff]
    %v34 = vld [vmem:[%s0 + $0xe0] sm:$0xff]
    %v35 = vld [vmem:[%s0 + $0xf0] sm:$0xff]
    %v36 = vld [vmem:[%s0 + $0xf8] sm:$0xff]
    %v37 = vld [vmem:[%s0 + $0x108] sm:$0xff]
    %v38 = vld [vmem:[%s0 + $0x110] sm:$0xff]
    %v39 = vld [vmem:[%s0 + $0x120] sm:$0xff]
    %v40 = vld [vmem:[%s0 + $0x128] sm:$0xff]
    %v41 = vld [vmem:[%s0 + $0x138] sm:$0xff]
    %v42 = vld [vmem:[%s0 + $0x140] sm:$0xff]
    %v43 = vld [vmem:[%s0 + $0x150] sm:$0xff]
    %v44 = vld [vmem:[%s0 + $0x158] sm:$0xff]
    %v45 = vld [vmem:[%s0 + $0x168] sm:$0xff]
    %v46 = vld [vmem:[%s0 + $0x170] sm:$0xff]
    %v47 = vld [vmem:[%s0 + $0x1b0] sm:$0xff]
    %v48 = vld [vmem:[%s0 + $0x1b8] sm:$0xff]
    %v49 = vld [vmem:[%s0 + $0x1c8] sm:$0xff]
    %v50 = vld [vmem:[%s0 + $0x1d0] sm:$0xff]
    %v51 = vld [vmem:[%s0 + $0x1e0] sm:$0xff]
    %v52 = vld [vmem:[%s0 + $0x1e8] sm:$0xff]
    %v53 = vld [vmem:[%s0 + $0x1f8] sm:$0xff]
    %v54 = vld [vmem:[%s0 + $0x200] sm:$0xff]
    %v55 = vld [vmem:[%s0 + $0x210] sm:$0xff]
    %v56 = vld [vmem:[%s0 + $0x218] sm:$0xff]
    %v57 = vld [vmem:[%s0 + $0x228] sm:$0xff]
    %v58 = vld [vmem:[%s0 + $0x230] sm:$0xff]
    %v59 = vld [vmem:[%s0 + $0x240] sm:$0xff]
    %v60 = vld [vmem:[%s0 + $0x248] sm:$0xff]
    %v61 = vld [vmem:[%s0 + $0x258] sm:$0xff]
    %v62 = vld [vmem:[%s0 + $0x260] sm:$0xff]
    %v63 = vld [vmem:[%s0 + $0x270] sm:$0xff]
    %v64 = vld [vmem:[%s0 + $0x278] sm:$0xff]
    %v65 = vld [vmem:[%s0 + $0x288] sm:$0xff]
    %v66 = vld [vmem:[%s0 + $0x290] sm:$0xff]
    %v67 = vld [vmem:[%s0 + $0x2a0] sm:$0xff]
    %v68 = vld [vmem:[%s0 + $0x2a8] sm:$0xff]
    %v69 = vld [vmem:[%s0 + $0x2b8] sm:$0xff]
    %v70 = vld [vmem:[%s0 + $0x2c0] sm:$0xff]
    %v71 = vld [vmem:[%s0 + $0x2d0] sm:$0xff]
    %v72 = vld [vmem:[%s0 + $0x2d8] sm:$0xff]
    %v73 = vld [vmem:[%s0 + $0x2e8] sm:$0xff]
    %v74 = vld [vmem:[%s0 + $0x2f0] sm:$0xff]
    %v75 = vld [vmem:[%s0 + $0x300] sm:$0xff]
    %v76 = vld [vmem:[%s0 + $0x308] sm:$0xff]
    %v77 = vld [vmem:[%s0 + $0x318] sm:$0xff]
    %v78 = vld [vmem:[%s0 + $0x320] sm:$0xff]
    %vm79 = vcmask 261120
    %80 = vst.msk [vmem:[#allocation2] sm:$0xff] %vm79, %v15
    %81 = vst.msk [vmem:[#allocation2 + $0x18] sm:$0xff] %vm79, %v16
    %82 = vst.msk [vmem:[#allocation2 + $0x30] sm:$0xff] %vm79, %v17
    %83 = vst.msk [vmem:[#allocation2 + $0x48] sm:$0xff] %vm79, %v18
    %84 = vst.msk [vmem:[#allocation2 + $0x60] sm:$0xff] %vm79, %v19
    %85 = vst.msk [vmem:[#allocation2 + $0x78] sm:$0xff] %vm79, %v20
    %86 = vst.msk [vmem:[#allocation2 + $0x90] sm:$0xff] %vm79, %v21
    %87 = vst.msk [vmem:[#allocation2 + $0xa8] sm:$0xff] %vm79, %v22
    %88 = vst.msk [vmem:[#allocation2 + $0xc0] sm:$0xff] %vm79, %v23
    %89 = vst.msk [vmem:[#allocation2 + $0xd8] sm:$0xff] %vm79, %v24
    %90 = vst.msk [vmem:[#allocation2 + $0xf0] sm:$0xff] %vm79, %v25
    %91 = vst.msk [vmem:[#allocation2 + $0x108] sm:$0xff] %vm79, %v26
    %92 = vst.msk [vmem:[#allocation2 + $0x120] sm:$0xff] %vm79, %v27
    %93 = vst.msk [vmem:[#allocation2 + $0x138] sm:$0xff] %vm79, %v28
    %94 = vst.msk [vmem:[#allocation2 + $0x150] sm:$0xff] %vm79, %v29
    %95 = vst.msk [vmem:[#allocation2 + $0x168] sm:$0xff] %vm79, %v30
    %96 = vst.msk [vmem:[#allocation2 + $0x180] sm:$0xff] %vm79, %v31
    %97 = vst.msk [vmem:[#allocation2 + $0x198] sm:$0xff] %vm79, %v32
    %98 = vst.msk [vmem:[#allocation2 + $0x1b0] sm:$0xff] %vm79, %v33
    %99 = vst.msk [vmem:[#allocation2 + $0x1c8] sm:$0xff] %vm79, %v34
    %100 = vst.msk [vmem:[#allocation2 + $0x1e0] sm:$0xff] %vm79, %v35
    %101 = vst.msk [vmem:[#allocation2 + $0x1f8] sm:$0xff] %vm79, %v36
    %102 = vst.msk [vmem:[#allocation2 + $0x210] sm:$0xff] %vm79, %v37
    %103 = vst.msk [vmem:[#allocation2 + $0x228] sm:$0xff] %vm79, %v38
    %104 = vst.msk [vmem:[#allocation2 + $0x240] sm:$0xff] %vm79, %v39
    %105 = vst.msk [vmem:[#allocation2 + $0x258] sm:$0xff] %vm79, %v40
    %106 = vst.msk [vmem:[#allocation2 + $0x270] sm:$0xff] %vm79, %v41
    %107 = vst.msk [vmem:[#allocation2 + $0x288] sm:$0xff] %vm79, %v42
    %108 = vst.msk [vmem:[#allocation2 + $0x2a0] sm:$0xff] %vm79, %v43
    %109 = vst.msk [vmem:[#allocation2 + $0x2b8] sm:$0xff] %vm79, %v44
    %110 = vst.msk [vmem:[#allocation2 + $0x2d0] sm:$0xff] %vm79, %v45
    %111 = vst.msk [vmem:[#allocation2 + $0x2e8] sm:$0xff] %vm79, %v46
    %112 = vst.msk [vmem:[#allocation2 + $0x300] sm:$0xff] %vm79, %v47
    %113 = vst.msk [vmem:[#allocation2 + $0x318] sm:$0xff] %vm79, %v48
    %114 = vst.msk [vmem:[#allocation2 + $0x330] sm:$0xff] %vm79, %v49
    %115 = vst.msk [vmem:[#allocation2 + $0x348] sm:$0xff] %vm79, %v50
    %116 = vst.msk [vmem:[#allocation2 + $0x360] sm:$0xff] %vm79, %v51
    %117 = vst.msk [vmem:[#allocation2 + $0x378] sm:$0xff] %vm79, %v52
    %118 = vst.msk [vmem:[#allocation2 + $0x390] sm:$0xff] %vm79, %v53
    %119 = vst.msk [vmem:[#allocation2 + $0x3a8] sm:$0xff] %vm79, %v54
    %120 = vst.msk [vmem:[#allocation2 + $0x3c0] sm:$0xff] %vm79, %v55
    %121 = vst.msk [vmem:[#allocation2 + $0x3d8] sm:$0xff] %vm79, %v56
    %122 = vst.msk [vmem:[#allocation2 + $0x3f0] sm:$0xff] %vm79, %v57
    %123 = vst.msk [vmem:[#allocation2 + $0x408] sm:$0xff] %vm79, %v58
    %124 = vst.msk [vmem:[#allocation2 + $0x420] sm:$0xff] %vm79, %v59
    %125 = vst.msk [vmem:[#allocation2 + $0x438] sm:$0xff] %vm79, %v60
    %126 = vst.msk [vmem:[#allocation2 + $0x450] sm:$0xff] %vm79, %v61
    %127 = vst.msk [vmem:[#allocation2 + $0x468] sm:$0xff] %vm79, %v62
    %128 = vst.msk [vmem:[#allocation2 + $0x480] sm:$0xff] %vm79, %v63
    %129 = vst.msk [vmem:[#allocation2 + $0x498] sm:$0xff] %vm79, %v64
    %130 = vst.msk [vmem:[#allocation2 + $0x4b0] sm:$0xff] %vm79, %v65
    %131 = vst.msk [vmem:[#allocation2 + $0x4c8] sm:$0xff] %vm79, %v66
    %132 = vst.msk [vmem:[#allocation2 + $0x4e0] sm:$0xff] %vm79, %v67
    %133 = vst.msk [vmem:[#allocation2 + $0x4f8] sm:$0xff] %vm79, %v68
    %134 = vst.msk [vmem:[#allocation2 + $0x510] sm:$0xff] %vm79, %v69
    %135 = vst.msk [vmem:[#allocation2 + $0x528] sm:$0xff] %vm79, %v70
    %136 = vst.msk [vmem:[#allocation2 + $0x540] sm:$0xff] %vm79, %v71
    %137 = vst.msk [vmem:[#allocation2 + $0x558] sm:$0xff] %vm79, %v72
    %138 = vst.msk [vmem:[#allocation2 + $0x570] sm:$0xff] %vm79, %v73
    %139 = vst.msk [vmem:[#allocation2 + $0x588] sm:$0xff] %vm79, %v74
    %140 = vst.msk [vmem:[#allocation2 + $0x5a0] sm:$0xff] %vm79, %v75
    %141 = vst.msk [vmem:[#allocation2 + $0x5b8] sm:$0xff] %vm79, %v76
    %142 = vst.msk [vmem:[#allocation2 + $0x5d0] sm:$0xff] %vm79, %v77
    %143 = vst.msk [vmem:[#allocation2 + $0x5e8] sm:$0xff] %vm79, %v78
    %v144 = vld [vmem:[%s0 + $0x1] sm:$0xff]
    %v145 = vld [vmem:[%s0 + $0x9] sm:$0xff]
    %v146 = vld [vmem:[%s0 + $0x19] sm:$0xff]
    %v147 = vld [vmem:[%s0 + $0x21] sm:$0xff]
    %v148 = vld [vmem:[%s0 + $0x31] sm:$0xff]
    %v149 = vld [vmem:[%s0 + $0x39] sm:$0xff]
    %v150 = vld [vmem:[%s0 + $0x49] sm:$0xff]
    %v151 = vld [vmem:[%s0 + $0x51] sm:$0xff]
    %v152 = vld [vmem:[%s0 + $0x61] sm:$0xff]
    %v153 = vld [vmem:[%s0 + $0x69] sm:$0xff]
    %v154 = vld [vmem:[%s0 + $0x79] sm:$0xff]
    %v155 = vld [vmem:[%s0 + $0x81] sm:$0xff]
    %v156 = vld [vmem:[%s0 + $0x91] sm:$0xff]
    %v157 = vld [vmem:[%s0 + $0x99] sm:$0xff]
    %v158 = vld [vmem:[%s0 + $0xa9] sm:$0xff]
    %v159 = vld [vmem:[%s0 + $0xb1] sm:$0xff]
    %v160 = vld [vmem:[%s0 + $0xc1] sm:$0xff]
    %v161 = vld [vmem:[%s0 + $0xc9] sm:$0xff]
    %v162 = vld [vmem:[%s0 + $0xd9] sm:$0xff]
    %v163 = vld [vmem:[%s0 + $0xe1] sm:$0xff]
    %v164 = vld [vmem:[%s0 + $0xf1] sm:$0xff]
    %v165 = vld [vmem:[%s0 + $0xf9] sm:$0xff]
    %v166 = vld [vmem:[%s0 + $0x109] sm:$0xff]
    %v167 = vld [vmem:[%s0 + $0x111] sm:$0xff]
    %v168 = vld [vmem:[%s0 + $0x121] sm:$0xff]
    %v169 = vld [vmem:[%s0 + $0x129] sm:$0xff]
    %v170 = vld [vmem:[%s0 + $0x139] sm:$0xff]
    %v171 = vld [vmem:[%s0 + $0x141] sm:$0xff]
    %v172 = vld [vmem:[%s0 + $0x151] sm:$0xff]
    %v173 = vld [vmem:[%s0 + $0x159] sm:$0xff]
    %v174 = vld [vmem:[%s0 + $0x169] sm:$0xff]
    %v175 = vld [vmem:[%s0 + $0x171] sm:$0xff]
    %v176 = vld [vmem:[%s0 + $0x1b1] sm:$0xff]
    %v177 = vld [vmem:[%s0 + $0x1b9] sm:$0xff]
    %v178 = vld [vmem:[%s0 + $0x1c9] sm:$0xff]
    %v179 = vld [vmem:[%s0 + $0x1d1] sm:$0xff]
    %v180 = vld [vmem:[%s0 + $0x1e1] sm:$0xff]
    %v181 = vld [vmem:[%s0 + $0x1e9] sm:$0xff]
    %v182 = vld [vmem:[%s0 + $0x1f9] sm:$0xff]
    %v183 = vld [vmem:[%s0 + $0x201] sm:$0xff]
    %v184 = vld [vmem:[%s0 + $0x211] sm:$0xff]
    %v185 = vld [vmem:[%s0 + $0x219] sm:$0xff]
    %v186 = vld [vmem:[%s0 + $0x229] sm:$0xff]
    %v187 = vld [vmem:[%s0 + $0x231] sm:$0xff]
    %v188 = vld [vmem:[%s0 + $0x241] sm:$0xff]
    %v189 = vld [vmem:[%s0 + $0x249] sm:$0xff]
    %v190 = vld [vmem:[%s0 + $0x259] sm:$0xff]
    %v191 = vld [vmem:[%s0 + $0x261] sm:$0xff]
    %v192 = vld [vmem:[%s0 + $0x271] sm:$0xff]
    %v193 = vld [vmem:[%s0 + $0x279] sm:$0xff]
    %v194 = vld [vmem:[%s0 + $0x289] sm:$0xff]
    %v195 = vld [vmem:[%s0 + $0x291] sm:$0xff]
    %v196 = vld [vmem:[%s0 + $0x2a1] sm:$0xff]
    %v197 = vld [vmem:[%s0 + $0x2a9] sm:$0xff]
    %v198 = vld [vmem:[%s0 + $0x2b9] sm:$0xff]
    %v199 = vld [vmem:[%s0 + $0x2c1] sm:$0xff]
    %v200 = vld [vmem:[%s0 + $0x2d1] sm:$0xff]
    %v201 = vld [vmem:[%s0 + $0x2d9] sm:$0xff]
    %v202 = vld [vmem:[%s0 + $0x2e9] sm:$0xff]
    %v203 = vld [vmem:[%s0 + $0x2f1] sm:$0xff]
    %v204 = vld [vmem:[%s0 + $0x301] sm:$0xff]
    %v205 = vld [vmem:[%s0 + $0x309] sm:$0xff]
    %v206 = vld [vmem:[%s0 + $0x319] sm:$0xff]
    %v207 = vld [vmem:[%s0 + $0x321] sm:$0xff]
    %272 = vrot.lane.b32.xlu0 %v144, 32
    %v273 = vpop.permute.xlu0 %272
    %274 = vrot.lane.b32.xlu0 %v145, 32
    %v275 = vpop.permute.xlu0 %274
    %276 = vrot.lane.b32.xlu0 %v146, 32
    %v277 = vpop.permute.xlu0 %276
    %278 = vrot.lane.b32.xlu0 %v147, 32
    %v279 = vpop.permute.xlu0 %278
    %280 = vrot.lane.b32.xlu0 %v148, 32
    %v281 = vpop.permute.xlu0 %280
    %282 = vrot.lane.b32.xlu0 %v149, 32
    %v283 = vpop.permute.xlu0 %282
    %284 = vrot.lane.b32.xlu0 %v150, 32
    %v285 = vpop.permute.xlu0 %284
    %286 = vrot.lane.b32.xlu0 %v151, 32
    %v287 = vpop.permute.xlu0 %286
    %288 = vrot.lane.b32.xlu0 %v152, 32
    %v289 = vpop.permute.xlu0 %288
    %290 = vrot.lane.b32.xlu0 %v153, 32
    %v291 = vpop.permute.xlu0 %290
    %292 = vrot.lane.b32.xlu0 %v154, 32
    %v293 = vpop.permute.xlu0 %292
    %294 = vrot.lane.b32.xlu0 %v155, 32
    %v295 = vpop.permute.xlu0 %294
    %296 = vrot.lane.b32.xlu0 %v156, 32
    %v297 = vpop.permute.xlu0 %296
    %298 = vrot.lane.b32.xlu0 %v157, 32
    %v299 = vpop.permute.xlu0 %298
    %300 = vrot.lane.b32.xlu0 %v158, 32
    %v301 = vpop.permute.xlu0 %300
    %302 = vrot.lane.b32.xlu0 %v159, 32
    %v303 = vpop.permute.xlu0 %302
    %304 = vrot.lane.b32.xlu0 %v160, 32
    %v305 = vpop.permute.xlu0 %304
    %306 = vrot.lane.b32.xlu0 %v161, 32
    %v307 = vpop.permute.xlu0 %306
    %308 = vrot.lane.b32.xlu0 %v162, 32
    %v309 = vpop.permute.xlu0 %308
    %310 = vrot.lane.b32.xlu0 %v163, 32
    %v311 = vpop.permute.xlu0 %310
    %312 = vrot.lane.b32.xlu0 %v164, 32
    %v313 = vpop.permute.xlu0 %312
    %314 = vrot.lane.b32.xlu0 %v165, 32
    %v315 = vpop.permute.xlu0 %314
    %316 = vrot.lane.b32.xlu0 %v166, 32
    %v317 = vpop.permute.xlu0 %316
    %318 = vrot.lane.b32.xlu0 %v167, 32
    %v319 = vpop.permute.xlu0 %318
    %320 = vrot.lane.b32.xlu0 %v168, 32
    %v321 = vpop.permute.xlu0 %320
    %322 = vrot.lane.b32.xlu0 %v169, 32
    %v323 = vpop.permute.xlu0 %322
    %324 = vrot.lane.b32.xlu0 %v170, 32
    %v325 = vpop.permute.xlu0 %324
    %326 = vrot.lane.b32.xlu0 %v171, 32
    %v327 = vpop.permute.xlu0 %326
    %328 = vrot.lane.b32.xlu0 %v172, 32
    %v329 = vpop.permute.xlu0 %328
    %330 = vrot.lane.b32.xlu0 %v173, 32
    %v331 = vpop.permute.xlu0 %330
    %332 = vrot.lane.b32.xlu0 %v174, 32
    %v333 = vpop.permute.xlu0 %332
    %334 = vrot.lane.b32.xlu0 %v175, 32
    %v335 = vpop.permute.xlu0 %334
    %336 = vrot.lane.b32.xlu0 %v176, 32
    %v337 = vpop.permute.xlu0 %336
    %338 = vrot.lane.b32.xlu0 %v177, 32
    %v339 = vpop.permute.xlu0 %338
    %340 = vrot.lane.b32.xlu0 %v178, 32
    %v341 = vpop.permute.xlu0 %340
    %342 = vrot.lane.b32.xlu0 %v179, 32
    %v343 = vpop.permute.xlu0 %342
    %344 = vrot.lane.b32.xlu0 %v180, 32
    %v345 = vpop.permute.xlu0 %344
    %346 = vrot.lane.b32.xlu0 %v181, 32
    %v347 = vpop.permute.xlu0 %346
    %348 = vrot.lane.b32.xlu0 %v182, 32
    %v349 = vpop.permute.xlu0 %348
    %350 = vrot.lane.b32.xlu0 %v183, 32
    %v351 = vpop.permute.xlu0 %350
    %352 = vrot.lane.b32.xlu0 %v184, 32
    %v353 = vpop.permute.xlu0 %352
    %354 = vrot.lane.b32.xlu0 %v185, 32
    %v355 = vpop.permute.xlu0 %354
    %356 = vrot.lane.b32.xlu0 %v186, 32
    %v357 = vpop.permute.xlu0 %356
    %358 = vrot.lane.b32.xlu0 %v187, 32
    %v359 = vpop.permute.xlu0 %358
    %360 = vrot.lane.b32.xlu0 %v188, 32
    %v361 = vpop.permute.xlu0 %360
    %362 = vrot.lane.b32.xlu0 %v189, 32
    %v363 = vpop.permute.xlu0 %362
    %364 = vrot.lane.b32.xlu0 %v190, 32
    %v365 = vpop.permute.xlu0 %364
    %366 = vrot.lane.b32.xlu0 %v191, 32
    %v367 = vpop.permute.xlu0 %366
    %368 = vrot.lane.b32.xlu0 %v192, 32
    %v369 = vpop.permute.xlu0 %368
    %370 = vrot.lane.b32.xlu0 %v193, 32
    %v371 = vpop.permute.xlu0 %370
    %372 = vrot.lane.b32.xlu0 %v194, 32
    %v373 = vpop.permute.xlu0 %372
    %374 = vrot.lane.b32.xlu0 %v195, 32
    %v375 = vpop.permute.xlu0 %374
    %376 = vrot.lane.b32.xlu0 %v196, 32
    %v377 = vpop.permute.xlu0 %376
    %378 = vrot.lane.b32.xlu0 %v197, 32
    %v379 = vpop.permute.xlu0 %378
    %380 = vrot.lane.b32.xlu0 %v198, 32
    %v381 = vpop.permute.xlu0 %380
    %382 = vrot.lane.b32.xlu0 %v199, 32
    %v383 = vpop.permute.xlu0 %382
    %384 = vrot.lane.b32.xlu0 %v200, 32
    %v385 = vpop.permute.xlu0 %384
    %386 = vrot.lane.b32.xlu0 %v201, 32
    %v387 = vpop.permute.xlu0 %386
    %388 = vrot.lane.b32.xlu0 %v202, 32
    %v389 = vpop.permute.xlu0 %388
    %390 = vrot.lane.b32.xlu0 %v203, 32
    %v391 = vpop.permute.xlu0 %390
    %392 = vrot.lane.b32.xlu0 %v204, 32
    %v393 = vpop.permute.xlu0 %392
    %394 = vrot.lane.b32.xlu0 %v205, 32
    %v395 = vpop.permute.xlu0 %394
    %396 = vrot.lane.b32.xlu0 %v206, 32
    %v397 = vpop.permute.xlu0 %396
    %398 = vrot.lane.b32.xlu0 %v207, 32
    %v399 = vpop.permute.xlu0 %398
    %vm464 = vcmask 523520
    %465 = vst.msk [vmem:[#allocation2] sm:$0xff] %vm464, %v273
    %466 = vst.msk [vmem:[#allocation2 + $0x18] sm:$0xff] %vm464, %v275
    %467 = vst.msk [vmem:[#allocation2 + $0x30] sm:$0xff] %vm464, %v277
    %468 = vst.msk [vmem:[#allocation2 + $0x48] sm:$0xff] %vm464, %v279
    %469 = vst.msk [vmem:[#allocation2 + $0x60] sm:$0xff] %vm464, %v281
    %470 = vst.msk [vmem:[#allocation2 + $0x78] sm:$0xff] %vm464, %v283
    %471 = vst.msk [vmem:[#allocation2 + $0x90] sm:$0xff] %vm464, %v285
    %472 = vst.msk [vmem:[#allocation2 + $0xa8] sm:$0xff] %vm464, %v287
    %473 = vst.msk [vmem:[#allocation2 + $0xc0] sm:$0xff] %vm464, %v289
    %474 = vst.msk [vmem:[#allocation2 + $0xd8] sm:$0xff] %vm464, %v291
    %475 = vst.msk [vmem:[#allocation2 + $0xf0] sm:$0xff] %vm464, %v293
    %476 = vst.msk [vmem:[#allocation2 + $0x108] sm:$0xff] %vm464, %v295
    %477 = vst.msk [vmem:[#allocation2 + $0x120] sm:$0xff] %vm464, %v297
    %478 = vst.msk [vmem:[#allocation2 + $0x138] sm:$0xff] %vm464, %v299
    %479 = vst.msk [vmem:[#allocation2 + $0x150] sm:$0xff] %vm464, %v301
    %480 = vst.msk [vmem:[#allocation2 + $0x168] sm:$0xff] %vm464, %v303
    %481 = vst.msk [vmem:[#allocation2 + $0x180] sm:$0xff] %vm464, %v305
    %482 = vst.msk [vmem:[#allocation2 + $0x198] sm:$0xff] %vm464, %v307
    %483 = vst.msk [vmem:[#allocation2 + $0x1b0] sm:$0xff] %vm464, %v309
    %484 = vst.msk [vmem:[#allocation2 + $0x1c8] sm:$0xff] %vm464, %v311
    %485 = vst.msk [vmem:[#allocation2 + $0x1e0] sm:$0xff] %vm464, %v313
    %486 = vst.msk [vmem:[#allocation2 + $0x1f8] sm:$0xff] %vm464, %v315
    %487 = vst.msk [vmem:[#allocation2 + $0x210] sm:$0xff] %vm464, %v317
    %488 = vst.msk [vmem:[#allocation2 + $0x228] sm:$0xff] %vm464, %v319
    %489 = vst.msk [vmem:[#allocation2 + $0x240] sm:$0xff] %vm464, %v321
    %490 = vst.msk [vmem:[#allocation2 + $0x258] sm:$0xff] %vm464, %v323
    %491 = vst.msk [vmem:[#allocation2 + $0x270] sm:$0xff] %vm464, %v325
    %492 = vst.msk [vmem:[#allocation2 + $0x288] sm:$0xff] %vm464, %v327
    %493 = vst.msk [vmem:[#allocation2 + $0x2a0] sm:$0xff] %vm464, %v329
    %494 = vst.msk [vmem:[#allocation2 + $0x2b8] sm:$0xff] %vm464, %v331
    %495 = vst.msk [vmem:[#allocation2 + $0x2d0] sm:$0xff] %vm464, %v333
    %496 = vst.msk [vmem:[#allocation2 + $0x2e8] sm:$0xff] %vm464, %v335
    %497 = vst.msk [vmem:[#allocation2 + $0x300] sm:$0xff] %vm464, %v337
    %498 = vst.msk [vmem:[#allocation2 + $0x318] sm:$0xff] %vm464, %v339
    %499 = vst.msk [vmem:[#allocation2 + $0x330] sm:$0xff] %vm464, %v341
    %500 = vst.msk [vmem:[#allocation2 + $0x348] sm:$0xff] %vm464, %v343
    %501 = vst.msk [vmem:[#allocation2 + $0x360] sm:$0xff] %vm464, %v345
    %502 = vst.msk [vmem:[#allocation2 + $0x378] sm:$0xff] %vm464, %v347
    %503 = vst.msk [vmem:[#allocation2 + $0x390] sm:$0xff] %vm464, %v349
    %504 = vst.msk [vmem:[#allocation2 + $0x3a8] sm:$0xff] %vm464, %v351
    %505 = vst.msk [vmem:[#allocation2 + $0x3c0] sm:$0xff] %vm464, %v353
    %506 = vst.msk [vmem:[#allocation2 + $0x3d8] sm:$0xff] %vm464, %v355
    %507 = vst.msk [vmem:[#allocation2 + $0x3f0] sm:$0xff] %vm464, %v357
    %508 = vst.msk [vmem:[#allocation2 + $0x408] sm:$0xff] %vm464, %v359
    %509 = vst.msk [vmem:[#allocation2 + $0x420] sm:$0xff] %vm464, %v361
    %510 = vst.msk [vmem:[#allocation2 + $0x438] sm:$0xff] %vm464, %v363
    %511 = vst.msk [vmem:[#allocation2 + $0x450] sm:$0xff] %vm464, %v365
    %512 = vst.msk [vmem:[#allocation2 + $0x468] sm:$0xff] %vm464, %v367
    %513 = vst.msk [vmem:[#allocation2 + $0x480] sm:$0xff] %vm464, %v369
    %514 = vst.msk [vmem:[#allocation2 + $0x498] sm:$0xff] %vm464, %v371
    %515 = vst.msk [vmem:[#allocation2 + $0x4b0] sm:$0xff] %vm464, %v373
    %516 = vst.msk [vmem:[#allocation2 + $0x4c8] sm:$0xff] %vm464, %v375
    %517 = vst.msk [vmem:[#allocation2 + $0x4e0] sm:$0xff] %vm464, %v377
    %518 = vst.msk [vmem:[#allocation2 + $0x4f8] sm:$0xff] %vm464, %v379
    %519 = vst.msk [vmem:[#allocation2 + $0x510] sm:$0xff] %vm464, %v381
    %520 = vst.msk [vmem:[#allocation2 + $0x528] sm:$0xff] %vm464, %v383
    %521 = vst.msk [vmem:[#allocation2 + $0x540] sm:$0xff] %vm464, %v385
    %522 = vst.msk [vmem:[#allocation2 + $0x558] sm:$0xff] %vm464, %v387
    %523 = vst.msk [vmem:[#allocation2 + $0x570] sm:$0xff] %vm464, %v389
    %524 = vst.msk [vmem:[#allocation2 + $0x588] sm:$0xff] %vm464, %v391
    %525 = vst.msk [vmem:[#allocation2 + $0x5a0] sm:$0xff] %vm464, %v393
    %526 = vst.msk [vmem:[#allocation2 + $0x5b8] sm:$0xff] %vm464, %v395
    %527 = vst.msk [vmem:[#allocation2 + $0x5d0] sm:$0xff] %vm464, %v397
    %528 = vst.msk [vmem:[#allocation2 + $0x5e8] sm:$0xff] %vm464, %v399
    %v529 = vld [vmem:[%s0 + $0x2] sm:$0xff]
    %v530 = vld [vmem:[%s0 + $0xa] sm:$0xff]
    %v531 = vld [vmem:[%s0 + $0x1a] sm:$0xff]
    %v532 = vld [vmem:[%s0 + $0x22] sm:$0xff]
    %v533 = vld [vmem:[%s0 + $0x32] sm:$0xff]
    %v534 = vld [vmem:[%s0 + $0x3a] sm:$0xff]
    %v535 = vld [vmem:[%s0 + $0x4a] sm:$0xff]
    %v536 = vld [vmem:[%s0 + $0x52] sm:$0xff]
    %v537 = vld [vmem:[%s0 + $0x62] sm:$0xff]
    %v538 = vld [vmem:[%s0 + $0x6a] sm:$0xff]
    %v539 = vld [vmem:[%s0 + $0x7a] sm:$0xff]
    %v540 = vld [vmem:[%s0 + $0x82] sm:$0xff]
    %v541 = vld [vmem:[%s0 + $0x92] sm:$0xff]
    %v542 = vld [vmem:[%s0 + $0x9a] sm:$0xff]
    %v543 = vld [vmem:[%s0 + $0xaa] sm:$0xff]
    %v544 = vld [vmem:[%s0 + $0xb2] sm:$0xff]
    %v545 = vld [vmem:[%s0 + $0xc2] sm:$0xff]
    %v546 = vld [vmem:[%s0 + $0xca] sm:$0xff]
    %v547 = vld [vmem:[%s0 + $0xda] sm:$0xff]
    %v548 = vld [vmem:[%s0 + $0xe2] sm:$0xff]
    %v549 = vld [vmem:[%s0 + $0xf2] sm:$0xff]
    %v550 = vld [vmem:[%s0 + $0xfa] sm:$0xff]
    %v551 = vld [vmem:[%s0 + $0x10a] sm:$0xff]
    %v552 = vld [vmem:[%s0 + $0x112] sm:$0xff]
    %v553 = vld [vmem:[%s0 + $0x122] sm:$0xff]
    %v554 = vld [vmem:[%s0 + $0x12a] sm:$0xff]
    %v555 = vld [vmem:[%s0 + $0x13a] sm:$0xff]
    %v556 = vld [vmem:[%s0 + $0x142] sm:$0xff]
    %v557 = vld [vmem:[%s0 + $0x152] sm:$0xff]
    %v558 = vld [vmem:[%s0 + $0x15a] sm:$0xff]
    %v559 = vld [vmem:[%s0 + $0x16a] sm:$0xff]
    %v560 = vld [vmem:[%s0 + $0x172] sm:$0xff]
    %v561 = vld [vmem:[%s0 + $0x1b2] sm:$0xff]
    %v562 = vld [vmem:[%s0 + $0x1ba] sm:$0xff]
    %v563 = vld [vmem:[%s0 + $0x1ca] sm:$0xff]
    %v564 = vld [vmem:[%s0 + $0x1d2] sm:$0xff]
    %v565 = vld [vmem:[%s0 + $0x1e2] sm:$0xff]
    %v566 = vld [vmem:[%s0 + $0x1ea] sm:$0xff]
    %v567 = vld [vmem:[%s0 + $0x1fa] sm:$0xff]
    %v568 = vld [vmem:[%s0 + $0x202] sm:$0xff]
    %v569 = vld [vmem:[%s0 + $0x212] sm:$0xff]
    %v570 = vld [vmem:[%s0 + $0x21a] sm:$0xff]
    %v571 = vld [vmem:[%s0 + $0x22a] sm:$0xff]
    %v572 = vld [vmem:[%s0 + $0x232] sm:$0xff]
    %v573 = vld [vmem:[%s0 + $0x242] sm:$0xff]
    %v574 = vld [vmem:[%s0 + $0x24a] sm:$0xff]
    %v575 = vld [vmem:[%s0 + $0x25a] sm:$0xff]
    %v576 = vld [vmem:[%s0 + $0x262] sm:$0xff]
    %v577 = vld [vmem:[%s0 + $0x272] sm:$0xff]
    %v578 = vld [vmem:[%s0 + $0x27a] sm:$0xff]
    %v579 = vld [vmem:[%s0 + $0x28a] sm:$0xff]
    %v580 = vld [vmem:[%s0 + $0x292] sm:$0xff]
    %v581 = vld [vmem:[%s0 + $0x2a2] sm:$0xff]
    %v582 = vld [vmem:[%s0 + $0x2aa] sm:$0xff]
    %v583 = vld [vmem:[%s0 + $0x2ba] sm:$0xff]
    %v584 = vld [vmem:[%s0 + $0x2c2] sm:$0xff]
    %v585 = vld [vmem:[%s0 + $0x2d2] sm:$0xff]
    %v586 = vld [vmem:[%s0 + $0x2da] sm:$0xff]
    %v587 = vld [vmem:[%s0 + $0x2ea] sm:$0xff]
    %v588 = vld [vmem:[%s0 + $0x2f2] sm:$0xff]
    %v589 = vld [vmem:[%s0 + $0x302] sm:$0xff]
    %v590 = vld [vmem:[%s0 + $0x30a] sm:$0xff]
    %v591 = vld [vmem:[%s0 + $0x31a] sm:$0xff]
    %v592 = vld [vmem:[%s0 + $0x322] sm:$0xff]
    %657 = vrot.lane.b32.xlu0 %v529, 64
    %v658 = vpop.permute.xlu0 %657
    %659 = vrot.lane.b32.xlu0 %v530, 64
    %v660 = vpop.permute.xlu0 %659
    %661 = vrot.lane.b32.xlu0 %v531, 64
    %v662 = vpop.permute.xlu0 %661
    %663 = vrot.lane.b32.xlu0 %v532, 64
    %v664 = vpop.permute.xlu0 %663
    %665 = vrot.lane.b32.xlu0 %v533, 64
    %v666 = vpop.permute.xlu0 %665
    %667 = vrot.lane.b32.xlu0 %v534, 64
    %v668 = vpop.permute.xlu0 %667
    %669 = vrot.lane.b32.xlu0 %v535, 64
    %v670 = vpop.permute.xlu0 %669
    %671 = vrot.lane.b32.xlu0 %v536, 64
    %v672 = vpop.permute.xlu0 %671
    %673 = vrot.lane.b32.xlu0 %v537, 64
    %v674 = vpop.permute.xlu0 %673
    %675 = vrot.lane.b32.xlu0 %v538, 64
    %v676 = vpop.permute.xlu0 %675
    %677 = vrot.lane.b32.xlu0 %v539, 64
    %v678 = vpop.permute.xlu0 %677
    %679 = vrot.lane.b32.xlu0 %v540, 64
    %v680 = vpop.permute.xlu0 %679
    %681 = vrot.lane.b32.xlu0 %v541, 64
    %v682 = vpop.permute.xlu0 %681
    %683 = vrot.lane.b32.xlu0 %v542, 64
    %v684 = vpop.permute.xlu0 %683
    %685 = vrot.lane.b32.xlu0 %v543, 64
    %v686 = vpop.permute.xlu0 %685
    %687 = vrot.lane.b32.xlu0 %v544, 64
    %v688 = vpop.permute.xlu0 %687
    %689 = vrot.lane.b32.xlu0 %v545, 64
    %v690 = vpop.permute.xlu0 %689
    %691 = vrot.lane.b32.xlu0 %v546, 64
    %v692 = vpop.permute.xlu0 %691
    %693 = vrot.lane.b32.xlu0 %v547, 64
    %v694 = vpop.permute.xlu0 %693
    %695 = vrot.lane.b32.xlu0 %v548, 64
    %v696 = vpop.permute.xlu0 %695
    %697 = vrot.lane.b32.xlu0 %v549, 64
    %v698 = vpop.permute.xlu0 %697
    %699 = vrot.lane.b32.xlu0 %v550, 64
    %v700 = vpop.permute.xlu0 %699
    %701 = vrot.lane.b32.xlu0 %v551, 64
    %v702 = vpop.permute.xlu0 %701
    %703 = vrot.lane.b32.xlu0 %v552, 64
    %v704 = vpop.permute.xlu0 %703
    %705 = vrot.lane.b32.xlu0 %v553, 64
    %v706 = vpop.permute.xlu0 %705
    %707 = vrot.lane.b32.xlu0 %v554, 64
    %v708 = vpop.permute.xlu0 %707
    %709 = vrot.lane.b32.xlu0 %v555, 64
    %v710 = vpop.permute.xlu0 %709
    %711 = vrot.lane.b32.xlu0 %v556, 64
    %v712 = vpop.permute.xlu0 %711
    %713 = vrot.lane.b32.xlu0 %v557, 64
    %v714 = vpop.permute.xlu0 %713
    %715 = vrot.lane.b32.xlu0 %v558, 64
    %v716 = vpop.permute.xlu0 %715
    %717 = vrot.lane.b32.xlu0 %v559, 64
    %v718 = vpop.permute.xlu0 %717
    %719 = vrot.lane.b32.xlu0 %v560, 64
    %v720 = vpop.permute.xlu0 %719
    %721 = vrot.lane.b32.xlu0 %v561, 64
    %v722 = vpop.permute.xlu0 %721
    %723 = vrot.lane.b32.xlu0 %v562, 64
    %v724 = vpop.permute.xlu0 %723
    %725 = vrot.lane.b32.xlu0 %v563, 64
    %v726 = vpop.permute.xlu0 %725
    %727 = vrot.lane.b32.xlu0 %v564, 64
    %v728 = vpop.permute.xlu0 %727
    %729 = vrot.lane.b32.xlu0 %v565, 64
    %v730 = vpop.permute.xlu0 %729
    %731 = vrot.lane.b32.xlu0 %v566, 64
    %v732 = vpop.permute.xlu0 %731
    %733 = vrot.lane.b32.xlu0 %v567, 64
    %v734 = vpop.permute.xlu0 %733
    %735 = vrot.lane.b32.xlu0 %v568, 64
    %v736 = vpop.permute.xlu0 %735
    %737 = vrot.lane.b32.xlu0 %v569, 64
    %v738 = vpop.permute.xlu0 %737
    %739 = vrot.lane.b32.xlu0 %v570, 64
    %v740 = vpop.permute.xlu0 %739
    %741 = vrot.lane.b32.xlu0 %v571, 64
    %v742 = vpop.permute.xlu0 %741
    %743 = vrot.lane.b32.xlu0 %v572, 64
    %v744 = vpop.permute.xlu0 %743
    %745 = vrot.lane.b32.xlu0 %v573, 64
    %v746 = vpop.permute.xlu0 %745
    %747 = vrot.lane.b32.xlu0 %v574, 64
    %v748 = vpop.permute.xlu0 %747
    %749 = vrot.lane.b32.xlu0 %v575, 64
    %v750 = vpop.permute.xlu0 %749
    %751 = vrot.lane.b32.xlu0 %v576, 64
    %v752 = vpop.permute.xlu0 %751
    %753 = vrot.lane.b32.xlu0 %v577, 64
    %v754 = vpop.permute.xlu0 %753
    %755 = vrot.lane.b32.xlu0 %v578, 64
    %v756 = vpop.permute.xlu0 %755
    %757 = vrot.lane.b32.xlu0 %v579, 64
    %v758 = vpop.permute.xlu0 %757
    %759 = vrot.lane.b32.xlu0 %v580, 64
    %v760 = vpop.permute.xlu0 %759
    %761 = vrot.lane.b32.xlu0 %v581, 64
    %v762 = vpop.permute.xlu0 %761
    %763 = vrot.lane.b32.xlu0 %v582, 64
    %v764 = vpop.permute.xlu0 %763
    %765 = vrot.lane.b32.xlu0 %v583, 64
    %v766 = vpop.permute.xlu0 %765
    %767 = vrot.lane.b32.xlu0 %v584, 64
    %v768 = vpop.permute.xlu0 %767
    %769 = vrot.lane.b32.xlu0 %v585, 64
    %v770 = vpop.permute.xlu0 %769
    %771 = vrot.lane.b32.xlu0 %v586, 64
    %v772 = vpop.permute.xlu0 %771
    %773 = vrot.lane.b32.xlu0 %v587, 64
    %v774 = vpop.permute.xlu0 %773
    %775 = vrot.lane.b32.xlu0 %v588, 64
    %v776 = vpop.permute.xlu0 %775
    %777 = vrot.lane.b32.xlu0 %v589, 64
    %v778 = vpop.permute.xlu0 %777
    %779 = vrot.lane.b32.xlu0 %v590, 64
    %v780 = vpop.permute.xlu0 %779
    %781 = vrot.lane.b32.xlu0 %v591, 64
    %v782 = vpop.permute.xlu0 %781
    %783 = vrot.lane.b32.xlu0 %v592, 64
    %v784 = vpop.permute.xlu0 %783
    %vm849 = vcmask 785920
    %850 = vst.msk [vmem:[#allocation2] sm:$0xff] %vm849, %v658
    %851 = vst.msk [vmem:[#allocation2 + $0x18] sm:$0xff] %vm849, %v660
    %852 = vst.msk [vmem:[#allocation2 + $0x30] sm:$0xff] %vm849, %v662
    %853 = vst.msk [vmem:[#allocation2 + $0x48] sm:$0xff] %vm849, %v664
    %854 = vst.msk [vmem:[#allocation2 + $0x60] sm:$0xff] %vm849, %v666
    %855 = vst.msk [vmem:[#allocation2 + $0x78] sm:$0xff] %vm849, %v668
    %856 = vst.msk [vmem:[#allocation2 + $0x90] sm:$0xff] %vm849, %v670
    %857 = vst.msk [vmem:[#allocation2 + $0xa8] sm:$0xff] %vm849, %v672
    %858 = vst.msk [vmem:[#allocation2 + $0xc0] sm:$0xff] %vm849, %v674
    %859 = vst.msk [vmem:[#allocation2 + $0xd8] sm:$0xff] %vm849, %v676
    %860 = vst.msk [vmem:[#allocation2 + $0xf0] sm:$0xff] %vm849, %v678
    %861 = vst.msk [vmem:[#allocation2 + $0x108] sm:$0xff] %vm849, %v680
    %862 = vst.msk [vmem:[#allocation2 + $0x120] sm:$0xff] %vm849, %v682
    %863 = vst.msk [vmem:[#allocation2 + $0x138] sm:$0xff] %vm849, %v684
    %864 = vst.msk [vmem:[#allocation2 + $0x150] sm:$0xff] %vm849, %v686
    %865 = vst.msk [vmem:[#allocation2 + $0x168] sm:$0xff] %vm849, %v688
    %866 = vst.msk [vmem:[#allocation2 + $0x180] sm:$0xff] %vm849, %v690
    %867 = vst.msk [vmem:[#allocation2 + $0x198] sm:$0xff] %vm849, %v692
    %868 = vst.msk [vmem:[#allocation2 + $0x1b0] sm:$0xff] %vm849, %v694
    %869 = vst.msk [vmem:[#allocation2 + $0x1c8] sm:$0xff] %vm849, %v696
    %870 = vst.msk [vmem:[#allocation2 + $0x1e0] sm:$0xff] %vm849, %v698
    %871 = vst.msk [vmem:[#allocation2 + $0x1f8] sm:$0xff] %vm849, %v700
    %872 = vst.msk [vmem:[#allocation2 + $0x210] sm:$0xff] %vm849, %v702
    %873 = vst.msk [vmem:[#allocation2 + $0x228] sm:$0xff] %vm849, %v704
    %874 = vst.msk [vmem:[#allocation2 + $0x240] sm:$0xff] %vm849, %v706
    %875 = vst.msk [vmem:[#allocation2 + $0x258] sm:$0xff] %vm849, %v708
    %876 = vst.msk [vmem:[#allocation2 + $0x270] sm:$0xff] %vm849, %v710
    %877 = vst.msk [vmem:[#allocation2 + $0x288] sm:$0xff] %vm849, %v712
    %878 = vst.msk [vmem:[#allocation2 + $0x2a0] sm:$0xff] %vm849, %v714
    %879 = vst.msk [vmem:[#allocation2 + $0x2b8] sm:$0xff] %vm849, %v716
    %880 = vst.msk [vmem:[#allocation2 + $0x2d0] sm:$0xff] %vm849, %v718
    %881 = vst.msk [vmem:[#allocation2 + $0x2e8] sm:$0xff] %vm849, %v720
    %882 = vst.msk [vmem:[#allocation2 + $0x300] sm:$0xff] %vm849, %v722
    %883 = vst.msk [vmem:[#allocation2 + $0x318] sm:$0xff] %vm849, %v724
    %884 = vst.msk [vmem:[#allocation2 + $0x330] sm:$0xff] %vm849, %v726
    %885 = vst.msk [vmem:[#allocation2 + $0x348] sm:$0xff] %vm849, %v728
    %886 = vst.msk [vmem:[#allocation2 + $0x360] sm:$0xff] %vm849, %v730
    %887 = vst.msk [vmem:[#allocation2 + $0x378] sm:$0xff] %vm849, %v732
    %888 = vst.msk [vmem:[#allocation2 + $0x390] sm:$0xff] %vm849, %v734
    %889 = vst.msk [vmem:[#allocation2 + $0x3a8] sm:$0xff] %vm849, %v736
    %890 = vst.msk [vmem:[#allocation2 + $0x3c0] sm:$0xff] %vm849, %v738
    %891 = vst.msk [vmem:[#allocation2 + $0x3d8] sm:$0xff] %vm849, %v740
    %892 = vst.msk [vmem:[#allocation2 + $0x3f0] sm:$0xff] %vm849, %v742
    %893 = vst.msk [vmem:[#allocation2 + $0x408] sm:$0xff] %vm849, %v744
    %894 = vst.msk [vmem:[#allocation2 + $0x420] sm:$0xff] %vm849, %v746
    %895 = vst.msk [vmem:[#allocation2 + $0x438] sm:$0xff] %vm849, %v748
    %896 = vst.msk [vmem:[#allocation2 + $0x450] sm:$0xff] %vm849, %v750
    %897 = vst.msk [vmem:[#allocation2 + $0x468] sm:$0xff] %vm849, %v752
    %898 = vst.msk [vmem:[#allocation2 + $0x480] sm:$0xff] %vm849, %v754
    %899 = vst.msk [vmem:[#allocation2 + $0x498] sm:$0xff] %vm849, %v756
    %900 = vst.msk [vmem:[#allocation2 + $0x4b0] sm:$0xff] %vm849, %v758
    %901 = vst.msk [vmem:[#allocation2 + $0x4c8] sm:$0xff] %vm849, %v760
    %902 = vst.msk [vmem:[#allocation2 + $0x4e0] sm:$0xff] %vm849, %v762
    %903 = vst.msk [vmem:[#allocation2 + $0x4f8] sm:$0xff] %vm849, %v764
    %904 = vst.msk [vmem:[#allocation2 + $0x510] sm:$0xff] %vm849, %v766
    %905 = vst.msk [vmem:[#allocation2 + $0x528] sm:$0xff] %vm849, %v768
    %906 = vst.msk [vmem:[#allocation2 + $0x540] sm:$0xff] %vm849, %v770
    %907 = vst.msk [vmem:[#allocation2 + $0x558] sm:$0xff] %vm849, %v772
    %908 = vst.msk [vmem:[#allocation2 + $0x570] sm:$0xff] %vm849, %v774
    %909 = vst.msk [vmem:[#allocation2 + $0x588] sm:$0xff] %vm849, %v776
    %910 = vst.msk [vmem:[#allocation2 + $0x5a0] sm:$0xff] %vm849, %v778
    %911 = vst.msk [vmem:[#allocation2 + $0x5b8] sm:$0xff] %vm849, %v780
    %912 = vst.msk [vmem:[#allocation2 + $0x5d0] sm:$0xff] %vm849, %v782
    %913 = vst.msk [vmem:[#allocation2 + $0x5e8] sm:$0xff] %vm849, %v784
    %s914 = scalar_lea.vmem %s0, 24
    %v915 = vld [vmem:[%s914] sm:$0xff]
    %v916 = vld [vmem:[%s914 + $0x8] sm:$0xff]
    %v917 = vld [vmem:[%s914 + $0x18] sm:$0xff]
    %v918 = vld [vmem:[%s914 + $0x20] sm:$0xff]
    %v919 = vld [vmem:[%s914 + $0x30] sm:$0xff]
    %v920 = vld [vmem:[%s914 + $0x38] sm:$0xff]
    %v921 = vld [vmem:[%s914 + $0x48] sm:$0xff]
    %v922 = vld [vmem:[%s914 + $0x50] sm:$0xff]
    %v923 = vld [vmem:[%s914 + $0x60] sm:$0xff]
    %v924 = vld [vmem:[%s914 + $0x68] sm:$0xff]
    %v925 = vld [vmem:[%s914 + $0x78] sm:$0xff]
    %v926 = vld [vmem:[%s914 + $0x80] sm:$0xff]
    %v927 = vld [vmem:[%s914 + $0x90] sm:$0xff]
    %v928 = vld [vmem:[%s914 + $0x98] sm:$0xff]
    %v929 = vld [vmem:[%s914 + $0xa8] sm:$0xff]
    %v930 = vld [vmem:[%s914 + $0xb0] sm:$0xff]
    %v931 = vld [vmem:[%s914 + $0xc0] sm:$0xff]
    %v932 = vld [vmem:[%s914 + $0xc8] sm:$0xff]
    %v933 = vld [vmem:[%s914 + $0xd8] sm:$0xff]
    %v934 = vld [vmem:[%s914 + $0xe0] sm:$0xff]
    %v935 = vld [vmem:[%s914 + $0xf0] sm:$0xff]
    %v936 = vld [vmem:[%s914 + $0xf8] sm:$0xff]
    %v937 = vld [vmem:[%s914 + $0x108] sm:$0xff]
    %v938 = vld [vmem:[%s914 + $0x110] sm:$0xff]
    %v939 = vld [vmem:[%s914 + $0x120] sm:$0xff]
    %v940 = vld [vmem:[%s914 + $0x128] sm:$0xff]
    %v941 = vld [vmem:[%s914 + $0x138] sm:$0xff]
    %v942 = vld [vmem:[%s914 + $0x140] sm:$0xff]
    %v943 = vld [vmem:[%s914 + $0x150] sm:$0xff]
    %v944 = vld [vmem:[%s914 + $0x158] sm:$0xff]
    %v945 = vld [vmem:[%s914 + $0x168] sm:$0xff]
    %v946 = vld [vmem:[%s914 + $0x170] sm:$0xff]
    %v947 = vld [vmem:[%s914 + $0x1b0] sm:$0xff]
    %v948 = vld [vmem:[%s914 + $0x1b8] sm:$0xff]
    %v949 = vld [vmem:[%s914 + $0x1c8] sm:$0xff]
    %v950 = vld [vmem:[%s914 + $0x1d0] sm:$0xff]
    %v951 = vld [vmem:[%s914 + $0x1e0] sm:$0xff]
    %v952 = vld [vmem:[%s914 + $0x1e8] sm:$0xff]
    %v953 = vld [vmem:[%s914 + $0x1f8] sm:$0xff]
    %v954 = vld [vmem:[%s914 + $0x200] sm:$0xff]
    %v955 = vld [vmem:[%s914 + $0x210] sm:$0xff]
    %v956 = vld [vmem:[%s914 + $0x218] sm:$0xff]
    %v957 = vld [vmem:[%s914 + $0x228] sm:$0xff]
    %v958 = vld [vmem:[%s914 + $0x230] sm:$0xff]
    %v959 = vld [vmem:[%s914 + $0x240] sm:$0xff]
    %v960 = vld [vmem:[%s914 + $0x248] sm:$0xff]
    %v961 = vld [vmem:[%s914 + $0x258] sm:$0xff]
    %v962 = vld [vmem:[%s914 + $0x260] sm:$0xff]
    %v963 = vld [vmem:[%s914 + $0x270] sm:$0xff]
    %v964 = vld [vmem:[%s914 + $0x278] sm:$0xff]
    %v965 = vld [vmem:[%s914 + $0x288] sm:$0xff]
    %v966 = vld [vmem:[%s914 + $0x290] sm:$0xff]
    %v967 = vld [vmem:[%s914 + $0x2a0] sm:$0xff]
    %v968 = vld [vmem:[%s914 + $0x2a8] sm:$0xff]
    %v969 = vld [vmem:[%s914 + $0x2b8] sm:$0xff]
    %v970 = vld [vmem:[%s914 + $0x2c0] sm:$0xff]
    %v971 = vld [vmem:[%s914 + $0x2d0] sm:$0xff]
    %v972 = vld [vmem:[%s914 + $0x2d8] sm:$0xff]
    %v973 = vld [vmem:[%s914 + $0x2e8] sm:$0xff]
    %v974 = vld [vmem:[%s914 + $0x2f0] sm:$0xff]
    %v975 = vld [vmem:[%s914 + $0x300] sm:$0xff]
    %v976 = vld [vmem:[%s914 + $0x308] sm:$0xff]
    %v977 = vld [vmem:[%s914 + $0x318] sm:$0xff]
    %v978 = vld [vmem:[%s914 + $0x320] sm:$0xff]
    %1043 = vrot.lane.b32.xlu0 %v915, 96
    %v1044 = vpop.permute.xlu0 %1043
    %1045 = vrot.lane.b32.xlu0 %v916, 96
    %v1046 = vpop.permute.xlu0 %1045
    %1047 = vrot.lane.b32.xlu0 %v917, 96
    %v1048 = vpop.permute.xlu0 %1047
    %1049 = vrot.lane.b32.xlu0 %v918, 96
    %v1050 = vpop.permute.xlu0 %1049
    %1051 = vrot.lane.b32.xlu0 %v919, 96
    %v1052 = vpop.permute.xlu0 %1051
    %1053 = vrot.lane.b32.xlu0 %v920, 96
    %v1054 = vpop.permute.xlu0 %1053
    %1055 = vrot.lane.b32.xlu0 %v921, 96
    %v1056 = vpop.permute.xlu0 %1055
    %1057 = vrot.lane.b32.xlu0 %v922, 96
    %v1058 = vpop.permute.xlu0 %1057
    %1059 = vrot.lane.b32.xlu0 %v923, 96
    %v1060 = vpop.permute.xlu0 %1059
    %1061 = vrot.lane.b32.xlu0 %v924, 96
    %v1062 = vpop.permute.xlu0 %1061
    %1063 = vrot.lane.b32.xlu0 %v925, 96
    %v1064 = vpop.permute.xlu0 %1063
    %1065 = vrot.lane.b32.xlu0 %v926, 96
    %v1066 = vpop.permute.xlu0 %1065
    %1067 = vrot.lane.b32.xlu0 %v927, 96
    %v1068 = vpop.permute.xlu0 %1067
    %1069 = vrot.lane.b32.xlu0 %v928, 96
    %v1070 = vpop.permute.xlu0 %1069
    %1071 = vrot.lane.b32.xlu0 %v929, 96
    %v1072 = vpop.permute.xlu0 %1071
    %1073 = vrot.lane.b32.xlu0 %v930, 96
    %v1074 = vpop.permute.xlu0 %1073
    %1075 = vrot.lane.b32.xlu0 %v931, 96
    %v1076 = vpop.permute.xlu0 %1075
    %1077 = vrot.lane.b32.xlu0 %v932, 96
    %v1078 = vpop.permute.xlu0 %1077
    %1079 = vrot.lane.b32.xlu0 %v933, 96
    %v1080 = vpop.permute.xlu0 %1079
    %1081 = vrot.lane.b32.xlu0 %v934, 96
    %v1082 = vpop.permute.xlu0 %1081
    %1083 = vrot.lane.b32.xlu0 %v935, 96
    %v1084 = vpop.permute.xlu0 %1083
    %1085 = vrot.lane.b32.xlu0 %v936, 96
    %v1086 = vpop.permute.xlu0 %1085
    %1087 = vrot.lane.b32.xlu0 %v937, 96
    %v1088 = vpop.permute.xlu0 %1087
    %1089 = vrot.lane.b32.xlu0 %v938, 96
    %v1090 = vpop.permute.xlu0 %1089
    %1091 = vrot.lane.b32.xlu0 %v939, 96
    %v1092 = vpop.permute.xlu0 %1091
    %1093 = vrot.lane.b32.xlu0 %v940, 96
    %v1094 = vpop.permute.xlu0 %1093
    %1095 = vrot.lane.b32.xlu0 %v941, 96
    %v1096 = vpop.permute.xlu0 %1095
    %1097 = vrot.lane.b32.xlu0 %v942, 96
    %v1098 = vpop.permute.xlu0 %1097
    %1099 = vrot.lane.b32.xlu0 %v943, 96
    %v1100 = vpop.permute.xlu0 %1099
    %1101 = vrot.lane.b32.xlu0 %v944, 96
    %v1102 = vpop.permute.xlu0 %1101
    %1103 = vrot.lane.b32.xlu0 %v945, 96
    %v1104 = vpop.permute.xlu0 %1103
    %1105 = vrot.lane.b32.xlu0 %v946, 96
    %v1106 = vpop.permute.xlu0 %1105
    %1107 = vrot.lane.b32.xlu0 %v947, 96
    %v1108 = vpop.permute.xlu0 %1107
    %1109 = vrot.lane.b32.xlu0 %v948, 96
    %v1110 = vpop.permute.xlu0 %1109
    %1111 = vrot.lane.b32.xlu0 %v949, 96
    %v1112 = vpop.permute.xlu0 %1111
    %1113 = vrot.lane.b32.xlu0 %v950, 96
    %v1114 = vpop.permute.xlu0 %1113
    %1115 = vrot.lane.b32.xlu0 %v951, 96
    %v1116 = vpop.permute.xlu0 %1115
    %1117 = vrot.lane.b32.xlu0 %v952, 96
    %v1118 = vpop.permute.xlu0 %1117
    %1119 = vrot.lane.b32.xlu0 %v953, 96
    %v1120 = vpop.permute.xlu0 %1119
    %1121 = vrot.lane.b32.xlu0 %v954, 96
    %v1122 = vpop.permute.xlu0 %1121
    %1123 = vrot.lane.b32.xlu0 %v955, 96
    %v1124 = vpop.permute.xlu0 %1123
    %1125 = vrot.lane.b32.xlu0 %v956, 96
    %v1126 = vpop.permute.xlu0 %1125
    %1127 = vrot.lane.b32.xlu0 %v957, 96
    %v1128 = vpop.permute.xlu0 %1127
    %1129 = vrot.lane.b32.xlu0 %v958, 96
    %v1130 = vpop.permute.xlu0 %1129
    %1131 = vrot.lane.b32.xlu0 %v959, 96
    %v1132 = vpop.permute.xlu0 %1131
    %1133 = vrot.lane.b32.xlu0 %v960, 96
    %v1134 = vpop.permute.xlu0 %1133
    %1135 = vrot.lane.b32.xlu0 %v961, 96
    %v1136 = vpop.permute.xlu0 %1135
    %1137 = vrot.lane.b32.xlu0 %v962, 96
    %v1138 = vpop.permute.xlu0 %1137
    %1139 = vrot.lane.b32.xlu0 %v963, 96
    %v1140 = vpop.permute.xlu0 %1139
    %1141 = vrot.lane.b32.xlu0 %v964, 96
    %v1142 = vpop.permute.xlu0 %1141
    %1143 = vrot.lane.b32.xlu0 %v965, 96
    %v1144 = vpop.permute.xlu0 %1143
    %1145 = vrot.lane.b32.xlu0 %v966, 96
    %v1146 = vpop.permute.xlu0 %1145
    %1147 = vrot.lane.b32.xlu0 %v967, 96
    %v1148 = vpop.permute.xlu0 %1147
    %1149 = vrot.lane.b32.xlu0 %v968, 96
    %v1150 = vpop.permute.xlu0 %1149
    %1151 = vrot.lane.b32.xlu0 %v969, 96
    %v1152 = vpop.permute.xlu0 %1151
    %1153 = vrot.lane.b32.xlu0 %v970, 96
    %v1154 = vpop.permute.xlu0 %1153
    %1155 = vrot.lane.b32.xlu0 %v971, 96
    %v1156 = vpop.permute.xlu0 %1155
    %1157 = vrot.lane.b32.xlu0 %v972, 96
    %v1158 = vpop.permute.xlu0 %1157
    %1159 = vrot.lane.b32.xlu0 %v973, 96
    %v1160 = vpop.permute.xlu0 %1159
    %1161 = vrot.lane.b32.xlu0 %v974, 96
    %v1162 = vpop.permute.xlu0 %1161
    %1163 = vrot.lane.b32.xlu0 %v975, 96
    %v1164 = vpop.permute.xlu0 %1163
    %1165 = vrot.lane.b32.xlu0 %v976, 96
    %v1166 = vpop.permute.xlu0 %1165
    %1167 = vrot.lane.b32.xlu0 %v977, 96
    %v1168 = vpop.permute.xlu0 %1167
    %1169 = vrot.lane.b32.xlu0 %v978, 96
    %v1170 = vpop.permute.xlu0 %1169
    %vm1235 = vcmask 1048320
    %1236 = vst.msk [vmem:[#allocation2] sm:$0xff] %vm1235, %v1044
    %1237 = vst.msk [vmem:[#allocation2 + $0x18] sm:$0xff] %vm1235, %v1046
    %1238 = vst.msk [vmem:[#allocation2 + $0x30] sm:$0xff] %vm1235, %v1048
    %1239 = vst.msk [vmem:[#allocation2 + $0x48] sm:$0xff] %vm1235, %v1050
    %1240 = vst.msk [vmem:[#allocation2 + $0x60] sm:$0xff] %vm1235, %v1052
    %1241 = vst.msk [vmem:[#allocation2 + $0x78] sm:$0xff] %vm1235, %v1054
    %1242 = vst.msk [vmem:[#allocation2 + $0x90] sm:$0xff] %vm1235, %v1056
    %1243 = vst.msk [vmem:[#allocation2 + $0xa8] sm:$0xff] %vm1235, %v1058
    %1244 = vst.msk [vmem:[#allocation2 + $0xc0] sm:$0xff] %vm1235, %v1060
    %1245 = vst.msk [vmem:[#allocation2 + $0xd8] sm:$0xff] %vm1235, %v1062
    %1246 = vst.msk [vmem:[#allocation2 + $0xf0] sm:$0xff] %vm1235, %v1064
    %1247 = vst.msk [vmem:[#allocation2 + $0x108] sm:$0xff] %vm1235, %v1066
    %1248 = vst.msk [vmem:[#allocation2 + $0x120] sm:$0xff] %vm1235, %v1068
    %1249 = vst.msk [vmem:[#allocation2 + $0x138] sm:$0xff] %vm1235, %v1070
    %1250 = vst.msk [vmem:[#allocation2 + $0x150] sm:$0xff] %vm1235, %v1072
    %1251 = vst.msk [vmem:[#allocation2 + $0x168] sm:$0xff] %vm1235, %v1074
    %1252 = vst.msk [vmem:[#allocation2 + $0x180] sm:$0xff] %vm1235, %v1076
    %1253 = vst.msk [vmem:[#allocation2 + $0x198] sm:$0xff] %vm1235, %v1078
    %1254 = vst.msk [vmem:[#allocation2 + $0x1b0] sm:$0xff] %vm1235, %v1080
    %1255 = vst.msk [vmem:[#allocation2 + $0x1c8] sm:$0xff] %vm1235, %v1082
    %1256 = vst.msk [vmem:[#allocation2 + $0x1e0] sm:$0xff] %vm1235, %v1084
    %1257 = vst.msk [vmem:[#allocation2 + $0x1f8] sm:$0xff] %vm1235, %v1086
    %1258 = vst.msk [vmem:[#allocation2 + $0x210] sm:$0xff] %vm1235, %v1088
    %1259 = vst.msk [vmem:[#allocation2 + $0x228] sm:$0xff] %vm1235, %v1090
    %1260 = vst.msk [vmem:[#allocation2 + $0x240] sm:$0xff] %vm1235, %v1092
    %1261 = vst.msk [vmem:[#allocation2 + $0x258] sm:$0xff] %vm1235, %v1094
    %1262 = vst.msk [vmem:[#allocation2 + $0x270] sm:$0xff] %vm1235, %v1096
    %1263 = vst.msk [vmem:[#allocation2 + $0x288] sm:$0xff] %vm1235, %v1098
    %1264 = vst.msk [vmem:[#allocation2 + $0x2a0] sm:$0xff] %vm1235, %v1100
    %1265 = vst.msk [vmem:[#allocation2 + $0x2b8] sm:$0xff] %vm1235, %v1102
    %1266 = vst.msk [vmem:[#allocation2 + $0x2d0] sm:$0xff] %vm1235, %v1104
    %1267 = vst.msk [vmem:[#allocation2 + $0x2e8] sm:$0xff] %vm1235, %v1106
    %1268 = vst.msk [vmem:[#allocation2 + $0x300] sm:$0xff] %vm1235, %v1108
    %1269 = vst.msk [vmem:[#allocation2 + $0x318] sm:$0xff] %vm1235, %v1110
    %1270 = vst.msk [vmem:[#allocation2 + $0x330] sm:$0xff] %vm1235, %v1112
    %1271 = vst.msk [vmem:[#allocation2 + $0x348] sm:$0xff] %vm1235, %v1114
    %1272 = vst.msk [vmem:[#allocation2 + $0x360] sm:$0xff] %vm1235, %v1116
    %1273 = vst.msk [vmem:[#allocation2 + $0x378] sm:$0xff] %vm1235, %v1118
    %1274 = vst.msk [vmem:[#allocation2 + $0x390] sm:$0xff] %vm1235, %v1120
    %1275 = vst.msk [vmem:[#allocation2 + $0x3a8] sm:$0xff] %vm1235, %v1122
    %1276 = vst.msk [vmem:[#allocation2 + $0x3c0] sm:$0xff] %vm1235, %v1124
    %1277 = vst.msk [vmem:[#allocation2 + $0x3d8] sm:$0xff] %vm1235, %v1126
    %1278 = vst.msk [vmem:[#allocation2 + $0x3f0] sm:$0xff] %vm1235, %v1128
    %1279 = vst.msk [vmem:[#allocation2 + $0x408] sm:$0xff] %vm1235, %v1130
    %1280 = vst.msk [vmem:[#allocation2 + $0x420] sm:$0xff] %vm1235, %v1132
    %1281 = vst.msk [vmem:[#allocation2 + $0x438] sm:$0xff] %vm1235, %v1134
    %1282 = vst.msk [vmem:[#allocation2 + $0x450] sm:$0xff] %vm1235, %v1136
    %1283 = vst.msk [vmem:[#allocation2 + $0x468] sm:$0xff] %vm1235, %v1138
    %1284 = vst.msk [vmem:[#allocation2 + $0x480] sm:$0xff] %vm1235, %v1140
    %1285 = vst.msk [vmem:[#allocation2 + $0x498] sm:$0xff] %vm1235, %v1142
    %1286 = vst.msk [vmem:[#allocation2 + $0x4b0] sm:$0xff] %vm1235, %v1144
    %1287 = vst.msk [vmem:[#allocation2 + $0x4c8] sm:$0xff] %vm1235, %v1146
    %1288 = vst.msk [vmem:[#allocation2 + $0x4e0] sm:$0xff] %vm1235, %v1148
    %1289 = vst.msk [vmem:[#allocation2 + $0x4f8] sm:$0xff] %vm1235, %v1150
    %1290 = vst.msk [vmem:[#allocation2 + $0x510] sm:$0xff] %vm1235, %v1152
    %1291 = vst.msk [vmem:[#allocation2 + $0x528] sm:$0xff] %vm1235, %v1154
    %1292 = vst.msk [vmem:[#allocation2 + $0x540] sm:$0xff] %vm1235, %v1156
    %1293 = vst.msk [vmem:[#allocation2 + $0x558] sm:$0xff] %vm1235, %v1158
    %1294 = vst.msk [vmem:[#allocation2 + $0x570] sm:$0xff] %vm1235, %v1160
    %1295 = vst.msk [vmem:[#allocation2 + $0x588] sm:$0xff] %vm1235, %v1162
    %1296 = vst.msk [vmem:[#allocation2 + $0x5a0] sm:$0xff] %vm1235, %v1164
    %1297 = vst.msk [vmem:[#allocation2 + $0x5b8] sm:$0xff] %vm1235, %v1166
    %1298 = vst.msk [vmem:[#allocation2 + $0x5d0] sm:$0xff] %vm1235, %v1168
    %1299 = vst.msk [vmem:[#allocation2 + $0x5e8] sm:$0xff] %vm1235, %v1170
    %v1300 = vld [vmem:[%s914 + $0x1] sm:$0xff]
    %v1301 = vld [vmem:[%s914 + $0x9] sm:$0xff]
    %v1302 = vld [vmem:[%s914 + $0x19] sm:$0xff]
    %v1303 = vld [vmem:[%s914 + $0x21] sm:$0xff]
    %v1304 = vld [vmem:[%s914 + $0x31] sm:$0xff]
    %v1305 = vld [vmem:[%s914 + $0x39] sm:$0xff]
    %v1306 = vld [vmem:[%s914 + $0x49] sm:$0xff]
    %v1307 = vld [vmem:[%s914 + $0x51] sm:$0xff]
    %v1308 = vld [vmem:[%s914 + $0x61] sm:$0xff]
    %v1309 = vld [vmem:[%s914 + $0x69] sm:$0xff]
    %v1310 = vld [vmem:[%s914 + $0x79] sm:$0xff]
    %v1311 = vld [vmem:[%s914 + $0x81] sm:$0xff]
    %v1312 = vld [vmem:[%s914 + $0x91] sm:$0xff]
    %v1313 = vld [vmem:[%s914 + $0x99] sm:$0xff]
    %v1314 = vld [vmem:[%s914 + $0xa9] sm:$0xff]
    %v1315 = vld [vmem:[%s914 + $0xb1] sm:$0xff]
    %v1316 = vld [vmem:[%s914 + $0xc1] sm:$0xff]
    %v1317 = vld [vmem:[%s914 + $0xc9] sm:$0xff]
    %v1318 = vld [vmem:[%s914 + $0xd9] sm:$0xff]
    %v1319 = vld [vmem:[%s914 + $0xe1] sm:$0xff]
    %v1320 = vld [vmem:[%s914 + $0xf1] sm:$0xff]
    %v1321 = vld [vmem:[%s914 + $0xf9] sm:$0xff]
    %v1322 = vld [vmem:[%s914 + $0x109] sm:$0xff]
    %v1323 = vld [vmem:[%s914 + $0x111] sm:$0xff]
    %v1324 = vld [vmem:[%s914 + $0x121] sm:$0xff]
    %v1325 = vld [vmem:[%s914 + $0x129] sm:$0xff]
    %v1326 = vld [vmem:[%s914 + $0x139] sm:$0xff]
    %v1327 = vld [vmem:[%s914 + $0x141] sm:$0xff]
    %v1328 = vld [vmem:[%s914 + $0x151] sm:$0xff]
    %v1329 = vld [vmem:[%s914 + $0x159] sm:$0xff]
    %v1330 = vld [vmem:[%s914 + $0x169] sm:$0xff]
    %v1331 = vld [vmem:[%s914 + $0x171] sm:$0xff]
    %v1332 = vld [vmem:[%s914 + $0x1b1] sm:$0xff]
    %v1333 = vld [vmem:[%s914 + $0x1b9] sm:$0xff]
    %v1334 = vld [vmem:[%s914 + $0x1c9] sm:$0xff]
    %v1335 = vld [vmem:[%s914 + $0x1d1] sm:$0xff]
    %v1336 = vld [vmem:[%s914 + $0x1e1] sm:$0xff]
    %v1337 = vld [vmem:[%s914 + $0x1e9] sm:$0xff]
    %v1338 = vld [vmem:[%s914 + $0x1f9] sm:$0xff]
    %v1339 = vld [vmem:[%s914 + $0x201] sm:$0xff]
    %v1340 = vld [vmem:[%s914 + $0x211] sm:$0xff]
    %v1341 = vld [vmem:[%s914 + $0x219] sm:$0xff]
    %v1342 = vld [vmem:[%s914 + $0x229] sm:$0xff]
    %v1343 = vld [vmem:[%s914 + $0x231] sm:$0xff]
    %v1344 = vld [vmem:[%s914 + $0x241] sm:$0xff]
    %v1345 = vld [vmem:[%s914 + $0x249] sm:$0xff]
    %v1346 = vld [vmem:[%s914 + $0x259] sm:$0xff]
    %v1347 = vld [vmem:[%s914 + $0x261] sm:$0xff]
    %v1348 = vld [vmem:[%s914 + $0x271] sm:$0xff]
    %v1349 = vld [vmem:[%s914 + $0x279] sm:$0xff]
    %v1350 = vld [vmem:[%s914 + $0x289] sm:$0xff]
    %v1351 = vld [vmem:[%s914 + $0x291] sm:$0xff]
    %v1352 = vld [vmem:[%s914 + $0x2a1] sm:$0xff]
    %v1353 = vld [vmem:[%s914 + $0x2a9] sm:$0xff]
    %v1354 = vld [vmem:[%s914 + $0x2b9] sm:$0xff]
    %v1355 = vld [vmem:[%s914 + $0x2c1] sm:$0xff]
    %v1356 = vld [vmem:[%s914 + $0x2d1] sm:$0xff]
    %v1357 = vld [vmem:[%s914 + $0x2d9] sm:$0xff]
    %v1358 = vld [vmem:[%s914 + $0x2e9] sm:$0xff]
    %v1359 = vld [vmem:[%s914 + $0x2f1] sm:$0xff]
    %v1360 = vld [vmem:[%s914 + $0x301] sm:$0xff]
    %v1361 = vld [vmem:[%s914 + $0x309] sm:$0xff]
    %v1362 = vld [vmem:[%s914 + $0x319] sm:$0xff]
    %v1363 = vld [vmem:[%s914 + $0x321] sm:$0xff]
    %1364 = vst.msk [vmem:[#allocation2 + $0x8] sm:$0xff] %vm79, %v1300
    %1365 = vst.msk [vmem:[#allocation2 + $0x20] sm:$0xff] %vm79, %v1301
    %1366 = vst.msk [vmem:[#allocation2 + $0x38] sm:$0xff] %vm79, %v1302
    %1367 = vst.msk [vmem:[#allocation2 + $0x50] sm:$0xff] %vm79, %v1303
    %1368 = vst.msk [vmem:[#allocation2 + $0x68] sm:$0xff] %vm79, %v1304
    %1369 = vst.msk [vmem:[#allocation2 + $0x80] sm:$0xff] %vm79, %v1305
    %1370 = vst.msk [vmem:[#allocation2 + $0x98] sm:$0xff] %vm79, %v1306
    %1371 = vst.msk [vmem:[#allocation2 + $0xb0] sm:$0xff] %vm79, %v1307
    %1372 = vst.msk [vmem:[#allocation2 + $0xc8] sm:$0xff] %vm79, %v1308
    %1373 = vst.msk [vmem:[#allocation2 + $0xe0] sm:$0xff] %vm79, %v1309
    %1374 = vst.msk [vmem:[#allocation2 + $0xf8] sm:$0xff] %vm79, %v1310
    %1375 = vst.msk [vmem:[#allocation2 + $0x110] sm:$0xff] %vm79, %v1311
    %1376 = vst.msk [vmem:[#allocation2 + $0x128] sm:$0xff] %vm79, %v1312
    %1377 = vst.msk [vmem:[#allocation2 + $0x140] sm:$0xff] %vm79, %v1313
    %1378 = vst.msk [vmem:[#allocation2 + $0x158] sm:$0xff] %vm79, %v1314
    %1379 = vst.msk [vmem:[#allocation2 + $0x170] sm:$0xff] %vm79, %v1315
    %1380 = vst.msk [vmem:[#allocation2 + $0x188] sm:$0xff] %vm79, %v1316
    %1381 = vst.msk [vmem:[#allocation2 + $0x1a0] sm:$0xff] %vm79, %v1317
    %1382 = vst.msk [vmem:[#allocation2 + $0x1b8] sm:$0xff] %vm79, %v1318
    %1383 = vst.msk [vmem:[#allocation2 + $0x1d0] sm:$0xff] %vm79, %v1319
    %1384 = vst.msk [vmem:[#allocation2 + $0x1e8] sm:$0xff] %vm79, %v1320
    %1385 = vst.msk [vmem:[#allocation2 + $0x200] sm:$0xff] %vm79, %v1321
    %1386 = vst.msk [vmem:[#allocation2 + $0x218] sm:$0xff] %vm79, %v1322
    %1387 = vst.msk [vmem:[#allocation2 + $0x230] sm:$0xff] %vm79, %v1323
    %1388 = vst.msk [vmem:[#allocation2 + $0x248] sm:$0xff] %vm79, %v1324
    %1389 = vst.msk [vmem:[#allocation2 + $0x260] sm:$0xff] %vm79, %v1325
    %1390 = vst.msk [vmem:[#allocation2 + $0x278] sm:$0xff] %vm79, %v1326
    %1391 = vst.msk [vmem:[#allocation2 + $0x290] sm:$0xff] %vm79, %v1327
    %1392 = vst.msk [vmem:[#allocation2 + $0x2a8] sm:$0xff] %vm79, %v1328
    %1393 = vst.msk [vmem:[#allocation2 + $0x2c0] sm:$0xff] %vm79, %v1329
    %1394 = vst.msk [vmem:[#allocation2 + $0x2d8] sm:$0xff] %vm79, %v1330
    %1395 = vst.msk [vmem:[#allocation2 + $0x2f0] sm:$0xff] %vm79, %v1331
    %1396 = vst.msk [vmem:[#allocation2 + $0x308] sm:$0xff] %vm79, %v1332
    %1397 = vst.msk [vmem:[#allocation2 + $0x320] sm:$0xff] %vm79, %v1333
    %1398 = vst.msk [vmem:[#allocation2 + $0x338] sm:$0xff] %vm79, %v1334
    %1399 = vst.msk [vmem:[#allocation2 + $0x350] sm:$0xff] %vm79, %v1335
    %1400 = vst.msk [vmem:[#allocation2 + $0x368] sm:$0xff] %vm79, %v1336
    %1401 = vst.msk [vmem:[#allocation2 + $0x380] sm:$0xff] %vm79, %v1337
    %1402 = vst.msk [vmem:[#allocation2 + $0x398] sm:$0xff] %vm79, %v1338
    %1403 = vst.msk [vmem:[#allocation2 + $0x3b0] sm:$0xff] %vm79, %v1339
    %1404 = vst.msk [vmem:[#allocation2 + $0x3c8] sm:$0xff] %vm79, %v1340
    %1405 = vst.msk [vmem:[#allocation2 + $0x3e0] sm:$0xff] %vm79, %v1341
    %1406 = vst.msk [vmem:[#allocation2 + $0x3f8] sm:$0xff] %vm79, %v1342
    %1407 = vst.msk [vmem:[#allocation2 + $0x410] sm:$0xff] %vm79, %v1343
    %1408 = vst.msk [vmem:[#allocation2 + $0x428] sm:$0xff] %vm79, %v1344
    %1409 = vst.msk [vmem:[#allocation2 + $0x440] sm:$0xff] %vm79, %v1345
    %1410 = vst.msk [vmem:[#allocation2 + $0x458] sm:$0xff] %vm79, %v1346
    %1411 = vst.msk [vmem:[#allocation2 + $0x470] sm:$0xff] %vm79, %v1347
    %1412 = vst.msk [vmem:[#allocation2 + $0x488] sm:$0xff] %vm79, %v1348
    %1413 = vst.msk [vmem:[#allocation2 + $0x4a0] sm:$0xff] %vm79, %v1349
    %1414 = vst.msk [vmem:[#allocation2 + $0x4b8] sm:$0xff] %vm79, %v1350
    %1415 = vst.msk [vmem:[#allocation2 + $0x4d0] sm:$0xff] %vm79, %v1351
    %1416 = vst.msk [vmem:[#allocation2 + $0x4e8] sm:$0xff] %vm79, %v1352
    %1417 = vst.msk [vmem:[#allocation2 + $0x500] sm:$0xff] %vm79, %v1353
    %1418 = vst.msk [vmem:[#allocation2 + $0x518] sm:$0xff] %vm79, %v1354
    %1419 = vst.msk [vmem:[#allocation2 + $0x530] sm:$0xff] %vm79, %v1355
    %1420 = vst.msk [vmem:[#allocation2 + $0x548] sm:$0xff] %vm79, %v1356
    %1421 = vst.msk [vmem:[#allocation2 + $0x560] sm:$0xff] %vm79, %v1357
    %1422 = vst.msk [vmem:[#allocation2 + $0x578] sm:$0xff] %vm79, %v1358
    %1423 = vst.msk [vmem:[#allocation2 + $0x590] sm:$0xff] %vm79, %v1359
    %1424 = vst.msk [vmem:[#allocation2 + $0x5a8] sm:$0xff] %vm79, %v1360
    %1425 = vst.msk [vmem:[#allocation2 + $0x5c0] sm:$0xff] %vm79, %v1361
    %1426 = vst.msk [vmem:[#allocation2 + $0x5d8] sm:$0xff] %vm79, %v1362
    %1427 = vst.msk [vmem:[#allocation2 + $0x5f0] sm:$0xff] %vm79, %v1363
    %v1428 = vld [vmem:[%s914 + $0x2] sm:$0xff]
    %v1429 = vld [vmem:[%s914 + $0xa] sm:$0xff]
    %v1430 = vld [vmem:[%s914 + $0x1a] sm:$0xff]
    %v1431 = vld [vmem:[%s914 + $0x22] sm:$0xff]
    %v1432 = vld [vmem:[%s914 + $0x32] sm:$0xff]
    %v1433 = vld [vmem:[%s914 + $0x3a] sm:$0xff]
    %v1434 = vld [vmem:[%s914 + $0x4a] sm:$0xff]
    %v1435 = vld [vmem:[%s914 + $0x52] sm:$0xff]
    %v1436 = vld [vmem:[%s914 + $0x62] sm:$0xff]
    %v1437 = vld [vmem:[%s914 + $0x6a] sm:$0xff]
    %v1438 = vld [vmem:[%s914 + $0x7a] sm:$0xff]
    %v1439 = vld [vmem:[%s914 + $0x82] sm:$0xff]
    %v1440 = vld [vmem:[%s914 + $0x92] sm:$0xff]
    %v1441 = vld [vmem:[%s914 + $0x9a] sm:$0xff]
    %v1442 = vld [vmem:[%s914 + $0xaa] sm:$0xff]
    %v1443 = vld [vmem:[%s914 + $0xb2] sm:$0xff]
    %v1444 = vld [vmem:[%s914 + $0xc2] sm:$0xff]
    %v1445 = vld [vmem:[%s914 + $0xca] sm:$0xff]
    %v1446 = vld [vmem:[%s914 + $0xda] sm:$0xff]
    %v1447 = vld [vmem:[%s914 + $0xe2] sm:$0xff]
    %v1448 = vld [vmem:[%s914 + $0xf2] sm:$0xff]
    %v1449 = vld [vmem:[%s914 + $0xfa] sm:$0xff]
    %v1450 = vld [vmem:[%s914 + $0x10a] sm:$0xff]
    %v1451 = vld [vmem:[%s914 + $0x112] sm:$0xff]
    %v1452 = vld [vmem:[%s914 + $0x122] sm:$0xff]
    %v1453 = vld [vmem:[%s914 + $0x12a] sm:$0xff]
    %v1454 = vld [vmem:[%s914 + $0x13a] sm:$0xff]
    %v1455 = vld [vmem:[%s914 + $0x142] sm:$0xff]
    %v1456 = vld [vmem:[%s914 + $0x152] sm:$0xff]
    %v1457 = vld [vmem:[%s914 + $0x15a] sm:$0xff]
    %v1458 = vld [vmem:[%s914 + $0x16a] sm:$0xff]
    %v1459 = vld [vmem:[%s914 + $0x172] sm:$0xff]
    %v1460 = vld [vmem:[%s914 + $0x1b2] sm:$0xff]
    %v1461 = vld [vmem:[%s914 + $0x1ba] sm:$0xff]
    %v1462 = vld [vmem:[%s914 + $0x1ca] sm:$0xff]
    %v1463 = vld [vmem:[%s914 + $0x1d2] sm:$0xff]
    %v1464 = vld [vmem:[%s914 + $0x1e2] sm:$0xff]
    %v1465 = vld [vmem:[%s914 + $0x1ea] sm:$0xff]
    %v1466 = vld [vmem:[%s914 + $0x1fa] sm:$0xff]
    %v1467 = vld [vmem:[%s914 + $0x202] sm:$0xff]
    %v1468 = vld [vmem:[%s914 + $0x212] sm:$0xff]
    %v1469 = vld [vmem:[%s914 + $0x21a] sm:$0xff]
    %v1470 = vld [vmem:[%s914 + $0x22a] sm:$0xff]
    %v1471 = vld [vmem:[%s914 + $0x232] sm:$0xff]
    %v1472 = vld [vmem:[%s914 + $0x242] sm:$0xff]
    %v1473 = vld [vmem:[%s914 + $0x24a] sm:$0xff]
    %v1474 = vld [vmem:[%s914 + $0x25a] sm:$0xff]
    %v1475 = vld [vmem:[%s914 + $0x262] sm:$0xff]
    %v1476 = vld [vmem:[%s914 + $0x272] sm:$0xff]
    %v1477 = vld [vmem:[%s914 + $0x27a] sm:$0xff]
    %v1478 = vld [vmem:[%s914 + $0x28a] sm:$0xff]
    %v1479 = vld [vmem:[%s914 + $0x292] sm:$0xff]
    %v1480 = vld [vmem:[%s914 + $0x2a2] sm:$0xff]
    %v1481 = vld [vmem:[%s914 + $0x2aa] sm:$0xff]
    %v1482 = vld [vmem:[%s914 + $0x2ba] sm:$0xff]
    %v1483 = vld [vmem:[%s914 + $0x2c2] sm:$0xff]
    %v1484 = vld [vmem:[%s914 + $0x2d2] sm:$0xff]
    %v1485 = vld [vmem:[%s914 + $0x2da] sm:$0xff]
    %v1486 = vld [vmem:[%s914 + $0x2ea] sm:$0xff]
    %v1487 = vld [vmem:[%s914 + $0x2f2] sm:$0xff]
    %v1488 = vld [vmem:[%s914 + $0x302] sm:$0xff]
    %v1489 = vld [vmem:[%s914 + $0x30a] sm:$0xff]
    %v1490 = vld [vmem:[%s914 + $0x31a] sm:$0xff]
    %v1491 = vld [vmem:[%s914 + $0x322] sm:$0xff]
    %1556 = vrot.lane.b32.xlu0 %v1428, 32
    %v1557 = vpop.permute.xlu0 %1556
    %1558 = vrot.lane.b32.xlu0 %v1429, 32
    %v1559 = vpop.permute.xlu0 %1558
    %1560 = vrot.lane.b32.xlu0 %v1430, 32
    %v1561 = vpop.permute.xlu0 %1560
    %1562 = vrot.lane.b32.xlu0 %v1431, 32
    %v1563 = vpop.permute.xlu0 %1562
    %1564 = vrot.lane.b32.xlu0 %v1432, 32
    %v1565 = vpop.permute.xlu0 %1564
    %1566 = vrot.lane.b32.xlu0 %v1433, 32
    %v1567 = vpop.permute.xlu0 %1566
    %1568 = vrot.lane.b32.xlu0 %v1434, 32
    %v1569 = vpop.permute.xlu0 %1568
    %1570 = vrot.lane.b32.xlu0 %v1435, 32
    %v1571 = vpop.permute.xlu0 %1570
    %1572 = vrot.lane.b32.xlu0 %v1436, 32
    %v1573 = vpop.permute.xlu0 %1572
    %1574 = vrot.lane.b32.xlu0 %v1437, 32
    %v1575 = vpop.permute.xlu0 %1574
    %1576 = vrot.lane.b32.xlu0 %v1438, 32
    %v1577 = vpop.permute.xlu0 %1576
    %1578 = vrot.lane.b32.xlu0 %v1439, 32
    %v1579 = vpop.permute.xlu0 %1578
    %1580 = vrot.lane.b32.xlu0 %v1440, 32
    %v1581 = vpop.permute.xlu0 %1580
    %1582 = vrot.lane.b32.xlu0 %v1441, 32
    %v1583 = vpop.permute.xlu0 %1582
    %1584 = vrot.lane.b32.xlu0 %v1442, 32
    %v1585 = vpop.permute.xlu0 %1584
    %1586 = vrot.lane.b32.xlu0 %v1443, 32
    %v1587 = vpop.permute.xlu0 %1586
    %1588 = vrot.lane.b32.xlu0 %v1444, 32
    %v1589 = vpop.permute.xlu0 %1588
    %1590 = vrot.lane.b32.xlu0 %v1445, 32
    %v1591 = vpop.permute.xlu0 %1590
    %1592 = vrot.lane.b32.xlu0 %v1446, 32
    %v1593 = vpop.permute.xlu0 %1592
    %1594 = vrot.lane.b32.xlu0 %v1447, 32
    %v1595 = vpop.permute.xlu0 %1594
    %1596 = vrot.lane.b32.xlu0 %v1448, 32
    %v1597 = vpop.permute.xlu0 %1596
    %1598 = vrot.lane.b32.xlu0 %v1449, 32
    %v1599 = vpop.permute.xlu0 %1598
    %1600 = vrot.lane.b32.xlu0 %v1450, 32
    %v1601 = vpop.permute.xlu0 %1600
    %1602 = vrot.lane.b32.xlu0 %v1451, 32
    %v1603 = vpop.permute.xlu0 %1602
    %1604 = vrot.lane.b32.xlu0 %v1452, 32
    %v1605 = vpop.permute.xlu0 %1604
    %1606 = vrot.lane.b32.xlu0 %v1453, 32
    %v1607 = vpop.permute.xlu0 %1606
    %1608 = vrot.lane.b32.xlu0 %v1454, 32
    %v1609 = vpop.permute.xlu0 %1608
    %1610 = vrot.lane.b32.xlu0 %v1455, 32
    %v1611 = vpop.permute.xlu0 %1610
    %1612 = vrot.lane.b32.xlu0 %v1456, 32
    %v1613 = vpop.permute.xlu0 %1612
    %1614 = vrot.lane.b32.xlu0 %v1457, 32
    %v1615 = vpop.permute.xlu0 %1614
    %1616 = vrot.lane.b32.xlu0 %v1458, 32
    %v1617 = vpop.permute.xlu0 %1616
    %1618 = vrot.lane.b32.xlu0 %v1459, 32
    %v1619 = vpop.permute.xlu0 %1618
    %1620 = vrot.lane.b32.xlu0 %v1460, 32
    %v1621 = vpop.permute.xlu0 %1620
    %1622 = vrot.lane.b32.xlu0 %v1461, 32
    %v1623 = vpop.permute.xlu0 %1622
    %1624 = vrot.lane.b32.xlu0 %v1462, 32
    %v1625 = vpop.permute.xlu0 %1624
    %1626 = vrot.lane.b32.xlu0 %v1463, 32
    %v1627 = vpop.permute.xlu0 %1626
    %1628 = vrot.lane.b32.xlu0 %v1464, 32
    %v1629 = vpop.permute.xlu0 %1628
    %1630 = vrot.lane.b32.xlu0 %v1465, 32
    %v1631 = vpop.permute.xlu0 %1630
    %1632 = vrot.lane.b32.xlu0 %v1466, 32
    %v1633 = vpop.permute.xlu0 %1632
    %1634 = vrot.lane.b32.xlu0 %v1467, 32
    %v1635 = vpop.permute.xlu0 %1634
    %1636 = vrot.lane.b32.xlu0 %v1468, 32
    %v1637 = vpop.permute.xlu0 %1636
    %1638 = vrot.lane.b32.xlu0 %v1469, 32
    %v1639 = vpop.permute.xlu0 %1638
    %1640 = vrot.lane.b32.xlu0 %v1470, 32
    %v1641 = vpop.permute.xlu0 %1640
    %1642 = vrot.lane.b32.xlu0 %v1471, 32
    %v1643 = vpop.permute.xlu0 %1642
    %1644 = vrot.lane.b32.xlu0 %v1472, 32
    %v1645 = vpop.permute.xlu0 %1644
    %1646 = vrot.lane.b32.xlu0 %v1473, 32
    %v1647 = vpop.permute.xlu0 %1646
    %1648 = vrot.lane.b32.xlu0 %v1474, 32
    %v1649 = vpop.permute.xlu0 %1648
    %1650 = vrot.lane.b32.xlu0 %v1475, 32
    %v1651 = vpop.permute.xlu0 %1650
    %1652 = vrot.lane.b32.xlu0 %v1476, 32
    %v1653 = vpop.permute.xlu0 %1652
    %1654 = vrot.lane.b32.xlu0 %v1477, 32
    %v1655 = vpop.permute.xlu0 %1654
    %1656 = vrot.lane.b32.xlu0 %v1478, 32
    %v1657 = vpop.permute.xlu0 %1656
    %1658 = vrot.lane.b32.xlu0 %v1479, 32
    %v1659 = vpop.permute.xlu0 %1658
    %1660 = vrot.lane.b32.xlu0 %v1480, 32
    %v1661 = vpop.permute.xlu0 %1660
    %1662 = vrot.lane.b32.xlu0 %v1481, 32
    %v1663 = vpop.permute.xlu0 %1662
    %1664 = vrot.lane.b32.xlu0 %v1482, 32
    %v1665 = vpop.permute.xlu0 %1664
    %1666 = vrot.lane.b32.xlu0 %v1483, 32
    %v1667 = vpop.permute.xlu0 %1666
    %1668 = vrot.lane.b32.xlu0 %v1484, 32
    %v1669 = vpop.permute.xlu0 %1668
    %1670 = vrot.lane.b32.xlu0 %v1485, 32
    %v1671 = vpop.permute.xlu0 %1670
    %1672 = vrot.lane.b32.xlu0 %v1486, 32
    %v1673 = vpop.permute.xlu0 %1672
    %1674 = vrot.lane.b32.xlu0 %v1487, 32
    %v1675 = vpop.permute.xlu0 %1674
    %1676 = vrot.lane.b32.xlu0 %v1488, 32
    %v1677 = vpop.permute.xlu0 %1676
    %1678 = vrot.lane.b32.xlu0 %v1489, 32
    %v1679 = vpop.permute.xlu0 %1678
    %1680 = vrot.lane.b32.xlu0 %v1490, 32
    %v1681 = vpop.permute.xlu0 %1680
    %1682 = vrot.lane.b32.xlu0 %v1491, 32
    %v1683 = vpop.permute.xlu0 %1682
    %1748 = vst.msk [vmem:[#allocation2 + $0x8] sm:$0xff] %vm464, %v1557
    %1749 = vst.msk [vmem:[#allocation2 + $0x20] sm:$0xff] %vm464, %v1559
    %1750 = vst.msk [vmem:[#allocation2 + $0x38] sm:$0xff] %vm464, %v1561
    %1751 = vst.msk [vmem:[#allocation2 + $0x50] sm:$0xff] %vm464, %v1563
    %1752 = vst.msk [vmem:[#allocation2 + $0x68] sm:$0xff] %vm464, %v1565
    %1753 = vst.msk [vmem:[#allocation2 + $0x80] sm:$0xff] %vm464, %v1567
    %1754 = vst.msk [vmem:[#allocation2 + $0x98] sm:$0xff] %vm464, %v1569
    %1755 = vst.msk [vmem:[#allocation2 + $0xb0] sm:$0xff] %vm464, %v1571
    %1756 = vst.msk [vmem:[#allocation2 + $0xc8] sm:$0xff] %vm464, %v1573
    %1757 = vst.msk [vmem:[#allocation2 + $0xe0] sm:$0xff] %vm464, %v1575
    %1758 = vst.msk [vmem:[#allocation2 + $0xf8] sm:$0xff] %vm464, %v1577
    %1759 = vst.msk [vmem:[#allocation2 + $0x110] sm:$0xff] %vm464, %v1579
    %1760 = vst.msk [vmem:[#allocation2 + $0x128] sm:$0xff] %vm464, %v1581
    %1761 = vst.msk [vmem:[#allocation2 + $0x140] sm:$0xff] %vm464, %v1583
    %1762 = vst.msk [vmem:[#allocation2 + $0x158] sm:$0xff] %vm464, %v1585
    %1763 = vst.msk [vmem:[#allocation2 + $0x170] sm:$0xff] %vm464, %v1587
    %1764 = vst.msk [vmem:[#allocation2 + $0x188] sm:$0xff] %vm464, %v1589
    %1765 = vst.msk [vmem:[#allocation2 + $0x1a0] sm:$0xff] %vm464, %v1591
    %1766 = vst.msk [vmem:[#allocation2 + $0x1b8] sm:$0xff] %vm464, %v1593
    %1767 = vst.msk [vmem:[#allocation2 + $0x1d0] sm:$0xff] %vm464, %v1595
    %1768 = vst.msk [vmem:[#allocation2 + $0x1e8] sm:$0xff] %vm464, %v1597
    %1769 = vst.msk [vmem:[#allocation2 + $0x200] sm:$0xff] %vm464, %v1599
    %1770 = vst.msk [vmem:[#allocation2 + $0x218] sm:$0xff] %vm464, %v1601
    %1771 = vst.msk [vmem:[#allocation2 + $0x230] sm:$0xff] %vm464, %v1603
    %1772 = vst.msk [vmem:[#allocation2 + $0x248] sm:$0xff] %vm464, %v1605
    %1773 = vst.msk [vmem:[#allocation2 + $0x260] sm:$0xff] %vm464, %v1607
    %1774 = vst.msk [vmem:[#allocation2 + $0x278] sm:$0xff] %vm464, %v1609
    %1775 = vst.msk [vmem:[#allocation2 + $0x290] sm:$0xff] %vm464, %v1611
    %1776 = vst.msk [vmem:[#allocation2 + $0x2a8] sm:$0xff] %vm464, %v1613
    %1777 = vst.msk [vmem:[#allocation2 + $0x2c0] sm:$0xff] %vm464, %v1615
    %1778 = vst.msk [vmem:[#allocation2 + $0x2d8] sm:$0xff] %vm464, %v1617
    %1779 = vst.msk [vmem:[#allocation2 + $0x2f0] sm:$0xff] %vm464, %v1619
    %1780 = vst.msk [vmem:[#allocation2 + $0x308] sm:$0xff] %vm464, %v1621
    %1781 = vst.msk [vmem:[#allocation2 + $0x320] sm:$0xff] %vm464, %v1623
    %1782 = vst.msk [vmem:[#allocation2 + $0x338] sm:$0xff] %vm464, %v1625
    %1783 = vst.msk [vmem:[#allocation2 + $0x350] sm:$0xff] %vm464, %v1627
    %1784 = vst.msk [vmem:[#allocation2 + $0x368] sm:$0xff] %vm464, %v1629
    %1785 = vst.msk [vmem:[#allocation2 + $0x380] sm:$0xff] %vm464, %v1631
    %1786 = vst.msk [vmem:[#allocation2 + $0x398] sm:$0xff] %vm464, %v1633
    %1787 = vst.msk [vmem:[#allocation2 + $0x3b0] sm:$0xff] %vm464, %v1635
    %1788 = vst.msk [vmem:[#allocation2 + $0x3c8] sm:$0xff] %vm464, %v1637
    %1789 = vst.msk [vmem:[#allocation2 + $0x3e0] sm:$0xff] %vm464, %v1639
    %1790 = vst.msk [vmem:[#allocation2 + $0x3f8] sm:$0xff] %vm464, %v1641
    %1791 = vst.msk [vmem:[#allocation2 + $0x410] sm:$0xff] %vm464, %v1643
    %1792 = vst.msk [vmem:[#allocation2 + $0x428] sm:$0xff] %vm464, %v1645
    %1793 = vst.msk [vmem:[#allocation2 + $0x440] sm:$0xff] %vm464, %v1647
    %1794 = vst.msk [vmem:[#allocation2 + $0x458] sm:$0xff] %vm464, %v1649
    %1795 = vst.msk [vmem:[#allocation2 + $0x470] sm:$0xff] %vm464, %v1651
    %1796 = vst.msk [vmem:[#allocation2 + $0x488] sm:$0xff] %vm464, %v1653
    %1797 = vst.msk [vmem:[#allocation2 + $0x4a0] sm:$0xff] %vm464, %v1655
    %1798 = vst.msk [vmem:[#allocation2 + $0x4b8] sm:$0xff] %vm464, %v1657
    %1799 = vst.msk [vmem:[#allocation2 + $0x4d0] sm:$0xff] %vm464, %v1659
    %1800 = vst.msk [vmem:[#allocation2 + $0x4e8] sm:$0xff] %vm464, %v1661
    %1801 = vst.msk [vmem:[#allocation2 + $0x500] sm:$0xff] %vm464, %v1663
    %1802 = vst.msk [vmem:[#allocation2 + $0x518] sm:$0xff] %vm464, %v1665
    %1803 = vst.msk [vmem:[#allocation2 + $0x530] sm:$0xff] %vm464, %v1667
    %1804 = vst.msk [vmem:[#allocation2 + $0x548] sm:$0xff] %vm464, %v1669
    %1805 = vst.msk [vmem:[#allocation2 + $0x560] sm:$0xff] %vm464, %v1671
    %1806 = vst.msk [vmem:[#allocation2 + $0x578] sm:$0xff] %vm464, %v1673
    %1807 = vst.msk [vmem:[#allocation2 + $0x590] sm:$0xff] %vm464, %v1675
    %1808 = vst.msk [vmem:[#allocation2 + $0x5a8] sm:$0xff] %vm464, %v1677
    %1809 = vst.msk [vmem:[#allocation2 + $0x5c0] sm:$0xff] %vm464, %v1679
    %1810 = vst.msk [vmem:[#allocation2 + $0x5d8] sm:$0xff] %vm464, %v1681
    %1811 = vst.msk [vmem:[#allocation2 + $0x5f0] sm:$0xff] %vm464, %v1683
    %s1812 = scalar_lea.vmem %s0, 48
    %v1813 = vld [vmem:[%s1812] sm:$0xff]
    %v1814 = vld [vmem:[%s1812 + $0x8] sm:$0xff]
    %v1815 = vld [vmem:[%s1812 + $0x18] sm:$0xff]
    %v1816 = vld [vmem:[%s1812 + $0x20] sm:$0xff]
    %v1817 = vld [vmem:[%s1812 + $0x30] sm:$0xff]
    %v1818 = vld [vmem:[%s1812 + $0x38] sm:$0xff]
    %v1819 = vld [vmem:[%s1812 + $0x48] sm:$0xff]
    %v1820 = vld [vmem:[%s1812 + $0x50] sm:$0xff]
    %v1821 = vld [vmem:[%s1812 + $0x60] sm:$0xff]
    %v1822 = vld [vmem:[%s1812 + $0x68] sm:$0xff]
    %v1823 = vld [vmem:[%s1812 + $0x78] sm:$0xff]
    %v1824 = vld [vmem:[%s1812 + $0x80] sm:$0xff]
    %v1825 = vld [vmem:[%s1812 + $0x90] sm:$0xff]
    %v1826 = vld [vmem:[%s1812 + $0x98] sm:$0xff]
    %v1827 = vld [vmem:[%s1812 + $0xa8] sm:$0xff]
    %v1828 = vld [vmem:[%s1812 + $0xb0] sm:$0xff]
    %v1829 = vld [vmem:[%s1812 + $0xc0] sm:$0xff]
    %v1830 = vld [vmem:[%s1812 + $0xc8] sm:$0xff]
    %v1831 = vld [vmem:[%s1812 + $0xd8] sm:$0xff]
    %v1832 = vld [vmem:[%s1812 + $0xe0] sm:$0xff]
    %v1833 = vld [vmem:[%s1812 + $0xf0] sm:$0xff]
    %v1834 = vld [vmem:[%s1812 + $0xf8] sm:$0xff]
    %v1835 = vld [vmem:[%s1812 + $0x108] sm:$0xff]
    %v1836 = vld [vmem:[%s1812 + $0x110] sm:$0xff]
    %v1837 = vld [vmem:[%s1812 + $0x120] sm:$0xff]
    %v1838 = vld [vmem:[%s1812 + $0x128] sm:$0xff]
    %v1839 = vld [vmem:[%s1812 + $0x138] sm:$0xff]
    %v1840 = vld [vmem:[%s1812 + $0x140] sm:$0xff]
    %v1841 = vld [vmem:[%s1812 + $0x150] sm:$0xff]
    %v1842 = vld [vmem:[%s1812 + $0x158] sm:$0xff]
    %v1843 = vld [vmem:[%s1812 + $0x168] sm:$0xff]
    %v1844 = vld [vmem:[%s1812 + $0x170] sm:$0xff]
    %v1845 = vld [vmem:[%s1812 + $0x1b0] sm:$0xff]
    %v1846 = vld [vmem:[%s1812 + $0x1b8] sm:$0xff]
    %v1847 = vld [vmem:[%s1812 + $0x1c8] sm:$0xff]
    %v1848 = vld [vmem:[%s1812 + $0x1d0] sm:$0xff]
    %v1849 = vld [vmem:[%s1812 + $0x1e0] sm:$0xff]
    %v1850 = vld [vmem:[%s1812 + $0x1e8] sm:$0xff]
    %v1851 = vld [vmem:[%s1812 + $0x1f8] sm:$0xff]
    %v1852 = vld [vmem:[%s1812 + $0x200] sm:$0xff]
    %v1853 = vld [vmem:[%s1812 + $0x210] sm:$0xff]
    %v1854 = vld [vmem:[%s1812 + $0x218] sm:$0xff]
    %v1855 = vld [vmem:[%s1812 + $0x228] sm:$0xff]
    %v1856 = vld [vmem:[%s1812 + $0x230] sm:$0xff]
    %v1857 = vld [vmem:[%s1812 + $0x240] sm:$0xff]
    %v1858 = vld [vmem:[%s1812 + $0x248] sm:$0xff]
    %v1859 = vld [vmem:[%s1812 + $0x258] sm:$0xff]
    %v1860 = vld [vmem:[%s1812 + $0x260] sm:$0xff]
    %v1861 = vld [vmem:[%s1812 + $0x270] sm:$0xff]
    %v1862 = vld [vmem:[%s1812 + $0x278] sm:$0xff]
    %v1863 = vld [vmem:[%s1812 + $0x288] sm:$0xff]
    %v1864 = vld [vmem:[%s1812 + $0x290] sm:$0xff]
    %v1865 = vld [vmem:[%s1812 + $0x2a0] sm:$0xff]
    %v1866 = vld [vmem:[%s1812 + $0x2a8] sm:$0xff]
    %v1867 = vld [vmem:[%s1812 + $0x2b8] sm:$0xff]
    %v1868 = vld [vmem:[%s1812 + $0x2c0] sm:$0xff]
    %v1869 = vld [vmem:[%s1812 + $0x2d0] sm:$0xff]
    %v1870 = vld [vmem:[%s1812 + $0x2d8] sm:$0xff]
    %v1871 = vld [vmem:[%s1812 + $0x2e8] sm:$0xff]
    %v1872 = vld [vmem:[%s1812 + $0x2f0] sm:$0xff]
    %v1873 = vld [vmem:[%s1812 + $0x300] sm:$0xff]
    %v1874 = vld [vmem:[%s1812 + $0x308] sm:$0xff]
    %v1875 = vld [vmem:[%s1812 + $0x318] sm:$0xff]
    %v1876 = vld [vmem:[%s1812 + $0x320] sm:$0xff]
    %1941 = vrot.lane.b32.xlu0 %v1813, 64
    %v1942 = vpop.permute.xlu0 %1941
    %1943 = vrot.lane.b32.xlu0 %v1814, 64
    %v1944 = vpop.permute.xlu0 %1943
    %1945 = vrot.lane.b32.xlu0 %v1815, 64
    %v1946 = vpop.permute.xlu0 %1945
    %1947 = vrot.lane.b32.xlu0 %v1816, 64
    %v1948 = vpop.permute.xlu0 %1947
    %1949 = vrot.lane.b32.xlu0 %v1817, 64
    %v1950 = vpop.permute.xlu0 %1949
    %1951 = vrot.lane.b32.xlu0 %v1818, 64
    %v1952 = vpop.permute.xlu0 %1951
    %1953 = vrot.lane.b32.xlu0 %v1819, 64
    %v1954 = vpop.permute.xlu0 %1953
    %1955 = vrot.lane.b32.xlu0 %v1820, 64
    %v1956 = vpop.permute.xlu0 %1955
    %1957 = vrot.lane.b32.xlu0 %v1821, 64
    %v1958 = vpop.permute.xlu0 %1957
    %1959 = vrot.lane.b32.xlu0 %v1822, 64
    %v1960 = vpop.permute.xlu0 %1959
    %1961 = vrot.lane.b32.xlu0 %v1823, 64
    %v1962 = vpop.permute.xlu0 %1961
    %1963 = vrot.lane.b32.xlu0 %v1824, 64
    %v1964 = vpop.permute.xlu0 %1963
    %1965 = vrot.lane.b32.xlu0 %v1825, 64
    %v1966 = vpop.permute.xlu0 %1965
    %1967 = vrot.lane.b32.xlu0 %v1826, 64
    %v1968 = vpop.permute.xlu0 %1967
    %1969 = vrot.lane.b32.xlu0 %v1827, 64
    %v1970 = vpop.permute.xlu0 %1969
    %1971 = vrot.lane.b32.xlu0 %v1828, 64
    %v1972 = vpop.permute.xlu0 %1971
    %1973 = vrot.lane.b32.xlu0 %v1829, 64
    %v1974 = vpop.permute.xlu0 %1973
    %1975 = vrot.lane.b32.xlu0 %v1830, 64
    %v1976 = vpop.permute.xlu0 %1975
    %1977 = vrot.lane.b32.xlu0 %v1831, 64
    %v1978 = vpop.permute.xlu0 %1977
    %1979 = vrot.lane.b32.xlu0 %v1832, 64
    %v1980 = vpop.permute.xlu0 %1979
    %1981 = vrot.lane.b32.xlu0 %v1833, 64
    %v1982 = vpop.permute.xlu0 %1981
    %1983 = vrot.lane.b32.xlu0 %v1834, 64
    %v1984 = vpop.permute.xlu0 %1983
    %1985 = vrot.lane.b32.xlu0 %v1835, 64
    %v1986 = vpop.permute.xlu0 %1985
    %1987 = vrot.lane.b32.xlu0 %v1836, 64
    %v1988 = vpop.permute.xlu0 %1987
    %1989 = vrot.lane.b32.xlu0 %v1837, 64
    %v1990 = vpop.permute.xlu0 %1989
    %1991 = vrot.lane.b32.xlu0 %v1838, 64
    %v1992 = vpop.permute.xlu0 %1991
    %1993 = vrot.lane.b32.xlu0 %v1839, 64
    %v1994 = vpop.permute.xlu0 %1993
    %1995 = vrot.lane.b32.xlu0 %v1840, 64
    %v1996 = vpop.permute.xlu0 %1995
    %1997 = vrot.lane.b32.xlu0 %v1841, 64
    %v1998 = vpop.permute.xlu0 %1997
    %1999 = vrot.lane.b32.xlu0 %v1842, 64
    %v2000 = vpop.permute.xlu0 %1999
    %2001 = vrot.lane.b32.xlu0 %v1843, 64
    %v2002 = vpop.permute.xlu0 %2001
    %2003 = vrot.lane.b32.xlu0 %v1844, 64
    %v2004 = vpop.permute.xlu0 %2003
    %2005 = vrot.lane.b32.xlu0 %v1845, 64
    %v2006 = vpop.permute.xlu0 %2005
    %2007 = vrot.lane.b32.xlu0 %v1846, 64
    %v2008 = vpop.permute.xlu0 %2007
    %2009 = vrot.lane.b32.xlu0 %v1847, 64
    %v2010 = vpop.permute.xlu0 %2009
    %2011 = vrot.lane.b32.xlu0 %v1848, 64
    %v2012 = vpop.permute.xlu0 %2011
    %2013 = vrot.lane.b32.xlu0 %v1849, 64
    %v2014 = vpop.permute.xlu0 %2013
    %2015 = vrot.lane.b32.xlu0 %v1850, 64
    %v2016 = vpop.permute.xlu0 %2015
    %2017 = vrot.lane.b32.xlu0 %v1851, 64
    %v2018 = vpop.permute.xlu0 %2017
    %2019 = vrot.lane.b32.xlu0 %v1852, 64
    %v2020 = vpop.permute.xlu0 %2019
    %2021 = vrot.lane.b32.xlu0 %v1853, 64
    %v2022 = vpop.permute.xlu0 %2021
    %2023 = vrot.lane.b32.xlu0 %v1854, 64
    %v2024 = vpop.permute.xlu0 %2023
    %2025 = vrot.lane.b32.xlu0 %v1855, 64
    %v2026 = vpop.permute.xlu0 %2025
    %2027 = vrot.lane.b32.xlu0 %v1856, 64
    %v2028 = vpop.permute.xlu0 %2027
    %2029 = vrot.lane.b32.xlu0 %v1857, 64
    %v2030 = vpop.permute.xlu0 %2029
    %2031 = vrot.lane.b32.xlu0 %v1858, 64
    %v2032 = vpop.permute.xlu0 %2031
    %2033 = vrot.lane.b32.xlu0 %v1859, 64
    %v2034 = vpop.permute.xlu0 %2033
    %2035 = vrot.lane.b32.xlu0 %v1860, 64
    %v2036 = vpop.permute.xlu0 %2035
    %2037 = vrot.lane.b32.xlu0 %v1861, 64
    %v2038 = vpop.permute.xlu0 %2037
    %2039 = vrot.lane.b32.xlu0 %v1862, 64
    %v2040 = vpop.permute.xlu0 %2039
    %2041 = vrot.lane.b32.xlu0 %v1863, 64
    %v2042 = vpop.permute.xlu0 %2041
    %2043 = vrot.lane.b32.xlu0 %v1864, 64
    %v2044 = vpop.permute.xlu0 %2043
    %2045 = vrot.lane.b32.xlu0 %v1865, 64
    %v2046 = vpop.permute.xlu0 %2045
    %2047 = vrot.lane.b32.xlu0 %v1866, 64
    %v2048 = vpop.permute.xlu0 %2047
    %2049 = vrot.lane.b32.xlu0 %v1867, 64
    %v2050 = vpop.permute.xlu0 %2049
    %2051 = vrot.lane.b32.xlu0 %v1868, 64
    %v2052 = vpop.permute.xlu0 %2051
    %2053 = vrot.lane.b32.xlu0 %v1869, 64
    %v2054 = vpop.permute.xlu0 %2053
    %2055 = vrot.lane.b32.xlu0 %v1870, 64
    %v2056 = vpop.permute.xlu0 %2055
    %2057 = vrot.lane.b32.xlu0 %v1871, 64
    %v2058 = vpop.permute.xlu0 %2057
    %2059 = vrot.lane.b32.xlu0 %v1872, 64
    %v2060 = vpop.permute.xlu0 %2059
    %2061 = vrot.lane.b32.xlu0 %v1873, 64
    %v2062 = vpop.permute.xlu0 %2061
    %2063 = vrot.lane.b32.xlu0 %v1874, 64
    %v2064 = vpop.permute.xlu0 %2063
    %2065 = vrot.lane.b32.xlu0 %v1875, 64
    %v2066 = vpop.permute.xlu0 %2065
    %2067 = vrot.lane.b32.xlu0 %v1876, 64
    %v2068 = vpop.permute.xlu0 %2067
    %2133 = vst.msk [vmem:[#allocation2 + $0x8] sm:$0xff] %vm849, %v1942
    %2134 = vst.msk [vmem:[#allocation2 + $0x20] sm:$0xff] %vm849, %v1944
    %2135 = vst.msk [vmem:[#allocation2 + $0x38] sm:$0xff] %vm849, %v1946
    %2136 = vst.msk [vmem:[#allocation2 + $0x50] sm:$0xff] %vm849, %v1948
    %2137 = vst.msk [vmem:[#allocation2 + $0x68] sm:$0xff] %vm849, %v1950
    %2138 = vst.msk [vmem:[#allocation2 + $0x80] sm:$0xff] %vm849, %v1952
    %2139 = vst.msk [vmem:[#allocation2 + $0x98] sm:$0xff] %vm849, %v1954
    %2140 = vst.msk [vmem:[#allocation2 + $0xb0] sm:$0xff] %vm849, %v1956
    %2141 = vst.msk [vmem:[#allocation2 + $0xc8] sm:$0xff] %vm849, %v1958
    %2142 = vst.msk [vmem:[#allocation2 + $0xe0] sm:$0xff] %vm849, %v1960
    %2143 = vst.msk [vmem:[#allocation2 + $0xf8] sm:$0xff] %vm849, %v1962
    %2144 = vst.msk [vmem:[#allocation2 + $0x110] sm:$0xff] %vm849, %v1964
    %2145 = vst.msk [vmem:[#allocation2 + $0x128] sm:$0xff] %vm849, %v1966
    %2146 = vst.msk [vmem:[#allocation2 + $0x140] sm:$0xff] %vm849, %v1968
    %2147 = vst.msk [vmem:[#allocation2 + $0x158] sm:$0xff] %vm849, %v1970
    %2148 = vst.msk [vmem:[#allocation2 + $0x170] sm:$0xff] %vm849, %v1972
    %2149 = vst.msk [vmem:[#allocation2 + $0x188] sm:$0xff] %vm849, %v1974
    %2150 = vst.msk [vmem:[#allocation2 + $0x1a0] sm:$0xff] %vm849, %v1976
    %2151 = vst.msk [vmem:[#allocation2 + $0x1b8] sm:$0xff] %vm849, %v1978
    %2152 = vst.msk [vmem:[#allocation2 + $0x1d0] sm:$0xff] %vm849, %v1980
    %2153 = vst.msk [vmem:[#allocation2 + $0x1e8] sm:$0xff] %vm849, %v1982
    %2154 = vst.msk [vmem:[#allocation2 + $0x200] sm:$0xff] %vm849, %v1984
    %2155 = vst.msk [vmem:[#allocation2 + $0x218] sm:$0xff] %vm849, %v1986
    %2156 = vst.msk [vmem:[#allocation2 + $0x230] sm:$0xff] %vm849, %v1988
    %2157 = vst.msk [vmem:[#allocation2 + $0x248] sm:$0xff] %vm849, %v1990
    %2158 = vst.msk [vmem:[#allocation2 + $0x260] sm:$0xff] %vm849, %v1992
    %2159 = vst.msk [vmem:[#allocation2 + $0x278] sm:$0xff] %vm849, %v1994
    %2160 = vst.msk [vmem:[#allocation2 + $0x290] sm:$0xff] %vm849, %v1996
    %2161 = vst.msk [vmem:[#allocation2 + $0x2a8] sm:$0xff] %vm849, %v1998
    %2162 = vst.msk [vmem:[#allocation2 + $0x2c0] sm:$0xff] %vm849, %v2000
    %2163 = vst.msk [vmem:[#allocation2 + $0x2d8] sm:$0xff] %vm849, %v2002
    %2164 = vst.msk [vmem:[#allocation2 + $0x2f0] sm:$0xff] %vm849, %v2004
    %2165 = vst.msk [vmem:[#allocation2 + $0x308] sm:$0xff] %vm849, %v2006
    %2166 = vst.msk [vmem:[#allocation2 + $0x320] sm:$0xff] %vm849, %v2008
    %2167 = vst.msk [vmem:[#allocation2 + $0x338] sm:$0xff] %vm849, %v2010
    %2168 = vst.msk [vmem:[#allocation2 + $0x350] sm:$0xff] %vm849, %v2012
    %2169 = vst.msk [vmem:[#allocation2 + $0x368] sm:$0xff] %vm849, %v2014
    %2170 = vst.msk [vmem:[#allocation2 + $0x380] sm:$0xff] %vm849, %v2016
    %2171 = vst.msk [vmem:[#allocation2 + $0x398] sm:$0xff] %vm849, %v2018
    %2172 = vst.msk [vmem:[#allocation2 + $0x3b0] sm:$0xff] %vm849, %v2020
    %2173 = vst.msk [vmem:[#allocation2 + $0x3c8] sm:$0xff] %vm849, %v2022
    %2174 = vst.msk [vmem:[#allocation2 + $0x3e0] sm:$0xff] %vm849, %v2024
    %2175 = vst.msk [vmem:[#allocation2 + $0x3f8] sm:$0xff] %vm849, %v2026
    %2176 = vst.msk [vmem:[#allocation2 + $0x410] sm:$0xff] %vm849, %v2028
    %2177 = vst.msk [vmem:[#allocation2 + $0x428] sm:$0xff] %vm849, %v2030
    %2178 = vst.msk [vmem:[#allocation2 + $0x440] sm:$0xff] %vm849, %v2032
    %2179 = vst.msk [vmem:[#allocation2 + $0x458] sm:$0xff] %vm849, %v2034
    %2180 = vst.msk [vmem:[#allocation2 + $0x470] sm:$0xff] %vm849, %v2036
    %2181 = vst.msk [vmem:[#allocation2 + $0x488] sm:$0xff] %vm849, %v2038
    %2182 = vst.msk [vmem:[#allocation2 + $0x4a0] sm:$0xff] %vm849, %v2040
    %2183 = vst.msk [vmem:[#allocation2 + $0x4b8] sm:$0xff] %vm849, %v2042
    %2184 = vst.msk [vmem:[#allocation2 + $0x4d0] sm:$0xff] %vm849, %v2044
    %2185 = vst.msk [vmem:[#allocation2 + $0x4e8] sm:$0xff] %vm849, %v2046
    %2186 = vst.msk [vmem:[#allocation2 + $0x500] sm:$0xff] %vm849, %v2048
    %2187 = vst.msk [vmem:[#allocation2 + $0x518] sm:$0xff] %vm849, %v2050
    %2188 = vst.msk [vmem:[#allocation2 + $0x530] sm:$0xff] %vm849, %v2052
    %2189 = vst.msk [vmem:[#allocation2 + $0x548] sm:$0xff] %vm849, %v2054
    %2190 = vst.msk [vmem:[#allocation2 + $0x560] sm:$0xff] %vm849, %v2056
    %2191 = vst.msk [vmem:[#allocation2 + $0x578] sm:$0xff] %vm849, %v2058
    %2192 = vst.msk [vmem:[#allocation2 + $0x590] sm:$0xff] %vm849, %v2060
    %2193 = vst.msk [vmem:[#allocation2 + $0x5a8] sm:$0xff] %vm849, %v2062
    %2194 = vst.msk [vmem:[#allocation2 + $0x5c0] sm:$0xff] %vm849, %v2064
    %2195 = vst.msk [vmem:[#allocation2 + $0x5d8] sm:$0xff] %vm849, %v2066
    %2196 = vst.msk [vmem:[#allocation2 + $0x5f0] sm:$0xff] %vm849, %v2068
    %v2197 = vld [vmem:[%s1812 + $0x1] sm:$0xff]
    %v2198 = vld [vmem:[%s1812 + $0x9] sm:$0xff]
    %v2199 = vld [vmem:[%s1812 + $0x19] sm:$0xff]
    %v2200 = vld [vmem:[%s1812 + $0x21] sm:$0xff]
    %v2201 = vld [vmem:[%s1812 + $0x31] sm:$0xff]
    %v2202 = vld [vmem:[%s1812 + $0x39] sm:$0xff]
    %v2203 = vld [vmem:[%s1812 + $0x49] sm:$0xff]
    %v2204 = vld [vmem:[%s1812 + $0x51] sm:$0xff]
    %v2205 = vld [vmem:[%s1812 + $0x61] sm:$0xff]
    %v2206 = vld [vmem:[%s1812 + $0x69] sm:$0xff]
    %v2207 = vld [vmem:[%s1812 + $0x79] sm:$0xff]
    %v2208 = vld [vmem:[%s1812 + $0x81] sm:$0xff]
    %v2209 = vld [vmem:[%s1812 + $0x91] sm:$0xff]
    %v2210 = vld [vmem:[%s1812 + $0x99] sm:$0xff]
    %v2211 = vld [vmem:[%s1812 + $0xa9] sm:$0xff]
    %v2212 = vld [vmem:[%s1812 + $0xb1] sm:$0xff]
    %v2213 = vld [vmem:[%s1812 + $0xc1] sm:$0xff]
    %v2214 = vld [vmem:[%s1812 + $0xc9] sm:$0xff]
    %v2215 = vld [vmem:[%s1812 + $0xd9] sm:$0xff]
    %v2216 = vld [vmem:[%s1812 + $0xe1] sm:$0xff]
    %v2217 = vld [vmem:[%s1812 + $0xf1] sm:$0xff]
    %v2218 = vld [vmem:[%s1812 + $0xf9] sm:$0xff]
    %v2219 = vld [vmem:[%s1812 + $0x109] sm:$0xff]
    %v2220 = vld [vmem:[%s1812 + $0x111] sm:$0xff]
    %v2221 = vld [vmem:[%s1812 + $0x121] sm:$0xff]
    %v2222 = vld [vmem:[%s1812 + $0x129] sm:$0xff]
    %v2223 = vld [vmem:[%s1812 + $0x139] sm:$0xff]
    %v2224 = vld [vmem:[%s1812 + $0x141] sm:$0xff]
    %v2225 = vld [vmem:[%s1812 + $0x151] sm:$0xff]
    %v2226 = vld [vmem:[%s1812 + $0x159] sm:$0xff]
    %v2227 = vld [vmem:[%s1812 + $0x169] sm:$0xff]
    %v2228 = vld [vmem:[%s1812 + $0x171] sm:$0xff]
    %v2229 = vld [vmem:[%s1812 + $0x1b1] sm:$0xff]
    %v2230 = vld [vmem:[%s1812 + $0x1b9] sm:$0xff]
    %v2231 = vld [vmem:[%s1812 + $0x1c9] sm:$0xff]
    %v2232 = vld [vmem:[%s1812 + $0x1d1] sm:$0xff]
    %v2233 = vld [vmem:[%s1812 + $0x1e1] sm:$0xff]
    %v2234 = vld [vmem:[%s1812 + $0x1e9] sm:$0xff]
    %v2235 = vld [vmem:[%s1812 + $0x1f9] sm:$0xff]
    %v2236 = vld [vmem:[%s1812 + $0x201] sm:$0xff]
    %v2237 = vld [vmem:[%s1812 + $0x211] sm:$0xff]
    %v2238 = vld [vmem:[%s1812 + $0x219] sm:$0xff]
    %v2239 = vld [vmem:[%s1812 + $0x229] sm:$0xff]
    %v2240 = vld [vmem:[%s1812 + $0x231] sm:$0xff]
    %v2241 = vld [vmem:[%s1812 + $0x241] sm:$0xff]
    %v2242 = vld [vmem:[%s1812 + $0x249] sm:$0xff]
    %v2243 = vld [vmem:[%s1812 + $0x259] sm:$0xff]
    %v2244 = vld [vmem:[%s1812 + $0x261] sm:$0xff]
    %v2245 = vld [vmem:[%s1812 + $0x271] sm:$0xff]
    %v2246 = vld [vmem:[%s1812 + $0x279] sm:$0xff]
    %v2247 = vld [vmem:[%s1812 + $0x289] sm:$0xff]
    %v2248 = vld [vmem:[%s1812 + $0x291] sm:$0xff]
    %v2249 = vld [vmem:[%s1812 + $0x2a1] sm:$0xff]
    %v2250 = vld [vmem:[%s1812 + $0x2a9] sm:$0xff]
    %v2251 = vld [vmem:[%s1812 + $0x2b9] sm:$0xff]
    %v2252 = vld [vmem:[%s1812 + $0x2c1] sm:$0xff]
    %v2253 = vld [vmem:[%s1812 + $0x2d1] sm:$0xff]
    %v2254 = vld [vmem:[%s1812 + $0x2d9] sm:$0xff]
    %v2255 = vld [vmem:[%s1812 + $0x2e9] sm:$0xff]
    %v2256 = vld [vmem:[%s1812 + $0x2f1] sm:$0xff]
    %v2257 = vld [vmem:[%s1812 + $0x301] sm:$0xff]
    %v2258 = vld [vmem:[%s1812 + $0x309] sm:$0xff]
    %v2259 = vld [vmem:[%s1812 + $0x319] sm:$0xff]
    %v2260 = vld [vmem:[%s1812 + $0x321] sm:$0xff]
    %2325 = vrot.lane.b32.xlu0 %v2197, 96
    %v2326 = vpop.permute.xlu0 %2325
    %2327 = vrot.lane.b32.xlu0 %v2198, 96
    %v2328 = vpop.permute.xlu0 %2327
    %2329 = vrot.lane.b32.xlu0 %v2199, 96
    %v2330 = vpop.permute.xlu0 %2329
    %2331 = vrot.lane.b32.xlu0 %v2200, 96
    %v2332 = vpop.permute.xlu0 %2331
    %2333 = vrot.lane.b32.xlu0 %v2201, 96
    %v2334 = vpop.permute.xlu0 %2333
    %2335 = vrot.lane.b32.xlu0 %v2202, 96
    %v2336 = vpop.permute.xlu0 %2335
    %2337 = vrot.lane.b32.xlu0 %v2203, 96
    %v2338 = vpop.permute.xlu0 %2337
    %2339 = vrot.lane.b32.xlu0 %v2204, 96
    %v2340 = vpop.permute.xlu0 %2339
    %2341 = vrot.lane.b32.xlu0 %v2205, 96
    %v2342 = vpop.permute.xlu0 %2341
    %2343 = vrot.lane.b32.xlu0 %v2206, 96
    %v2344 = vpop.permute.xlu0 %2343
    %2345 = vrot.lane.b32.xlu0 %v2207, 96
    %v2346 = vpop.permute.xlu0 %2345
    %2347 = vrot.lane.b32.xlu0 %v2208, 96
    %v2348 = vpop.permute.xlu0 %2347
    %2349 = vrot.lane.b32.xlu0 %v2209, 96
    %v2350 = vpop.permute.xlu0 %2349
    %2351 = vrot.lane.b32.xlu0 %v2210, 96
    %v2352 = vpop.permute.xlu0 %2351
    %2353 = vrot.lane.b32.xlu0 %v2211, 96
    %v2354 = vpop.permute.xlu0 %2353
    %2355 = vrot.lane.b32.xlu0 %v2212, 96
    %v2356 = vpop.permute.xlu0 %2355
    %2357 = vrot.lane.b32.xlu0 %v2213, 96
    %v2358 = vpop.permute.xlu0 %2357
    %2359 = vrot.lane.b32.xlu0 %v2214, 96
    %v2360 = vpop.permute.xlu0 %2359
    %2361 = vrot.lane.b32.xlu0 %v2215, 96
    %v2362 = vpop.permute.xlu0 %2361
    %2363 = vrot.lane.b32.xlu0 %v2216, 96
    %v2364 = vpop.permute.xlu0 %2363
    %2365 = vrot.lane.b32.xlu0 %v2217, 96
    %v2366 = vpop.permute.xlu0 %2365
    %2367 = vrot.lane.b32.xlu0 %v2218, 96
    %v2368 = vpop.permute.xlu0 %2367
    %2369 = vrot.lane.b32.xlu0 %v2219, 96
    %v2370 = vpop.permute.xlu0 %2369
    %2371 = vrot.lane.b32.xlu0 %v2220, 96
    %v2372 = vpop.permute.xlu0 %2371
    %2373 = vrot.lane.b32.xlu0 %v2221, 96
    %v2374 = vpop.permute.xlu0 %2373
    %2375 = vrot.lane.b32.xlu0 %v2222, 96
    %v2376 = vpop.permute.xlu0 %2375
    %2377 = vrot.lane.b32.xlu0 %v2223, 96
    %v2378 = vpop.permute.xlu0 %2377
    %2379 = vrot.lane.b32.xlu0 %v2224, 96
    %v2380 = vpop.permute.xlu0 %2379
    %2381 = vrot.lane.b32.xlu0 %v2225, 96
    %v2382 = vpop.permute.xlu0 %2381
    %2383 = vrot.lane.b32.xlu0 %v2226, 96
    %v2384 = vpop.permute.xlu0 %2383
    %2385 = vrot.lane.b32.xlu0 %v2227, 96
    %v2386 = vpop.permute.xlu0 %2385
    %2387 = vrot.lane.b32.xlu0 %v2228, 96
    %v2388 = vpop.permute.xlu0 %2387
    %2389 = vrot.lane.b32.xlu0 %v2229, 96
    %v2390 = vpop.permute.xlu0 %2389
    %2391 = vrot.lane.b32.xlu0 %v2230, 96
    %v2392 = vpop.permute.xlu0 %2391
    %2393 = vrot.lane.b32.xlu0 %v2231, 96
    %v2394 = vpop.permute.xlu0 %2393
    %2395 = vrot.lane.b32.xlu0 %v2232, 96
    %v2396 = vpop.permute.xlu0 %2395
    %2397 = vrot.lane.b32.xlu0 %v2233, 96
    %v2398 = vpop.permute.xlu0 %2397
    %2399 = vrot.lane.b32.xlu0 %v2234, 96
    %v2400 = vpop.permute.xlu0 %2399
    %2401 = vrot.lane.b32.xlu0 %v2235, 96
    %v2402 = vpop.permute.xlu0 %2401
    %2403 = vrot.lane.b32.xlu0 %v2236, 96
    %v2404 = vpop.permute.xlu0 %2403
    %2405 = vrot.lane.b32.xlu0 %v2237, 96
    %v2406 = vpop.permute.xlu0 %2405
    %2407 = vrot.lane.b32.xlu0 %v2238, 96
    %v2408 = vpop.permute.xlu0 %2407
    %2409 = vrot.lane.b32.xlu0 %v2239, 96
    %v2410 = vpop.permute.xlu0 %2409
    %2411 = vrot.lane.b32.xlu0 %v2240, 96
    %v2412 = vpop.permute.xlu0 %2411
    %2413 = vrot.lane.b32.xlu0 %v2241, 96
    %v2414 = vpop.permute.xlu0 %2413
    %2415 = vrot.lane.b32.xlu0 %v2242, 96
    %v2416 = vpop.permute.xlu0 %2415
    %2417 = vrot.lane.b32.xlu0 %v2243, 96
    %v2418 = vpop.permute.xlu0 %2417
    %2419 = vrot.lane.b32.xlu0 %v2244, 96
    %v2420 = vpop.permute.xlu0 %2419
    %2421 = vrot.lane.b32.xlu0 %v2245, 96
    %v2422 = vpop.permute.xlu0 %2421
    %2423 = vrot.lane.b32.xlu0 %v2246, 96
    %v2424 = vpop.permute.xlu0 %2423
    %2425 = vrot.lane.b32.xlu0 %v2247, 96
    %v2426 = vpop.permute.xlu0 %2425
    %2427 = vrot.lane.b32.xlu0 %v2248, 96
    %v2428 = vpop.permute.xlu0 %2427
    %2429 = vrot.lane.b32.xlu0 %v2249, 96
    %v2430 = vpop.permute.xlu0 %2429
    %2431 = vrot.lane.b32.xlu0 %v2250, 96
    %v2432 = vpop.permute.xlu0 %2431
    %2433 = vrot.lane.b32.xlu0 %v2251, 96
    %v2434 = vpop.permute.xlu0 %2433
    %2435 = vrot.lane.b32.xlu0 %v2252, 96
    %v2436 = vpop.permute.xlu0 %2435
    %2437 = vrot.lane.b32.xlu0 %v2253, 96
    %v2438 = vpop.permute.xlu0 %2437
    %2439 = vrot.lane.b32.xlu0 %v2254, 96
    %v2440 = vpop.permute.xlu0 %2439
    %2441 = vrot.lane.b32.xlu0 %v2255, 96
    %v2442 = vpop.permute.xlu0 %2441
    %2443 = vrot.lane.b32.xlu0 %v2256, 96
    %v2444 = vpop.permute.xlu0 %2443
    %2445 = vrot.lane.b32.xlu0 %v2257, 96
    %v2446 = vpop.permute.xlu0 %2445
    %2447 = vrot.lane.b32.xlu0 %v2258, 96
    %v2448 = vpop.permute.xlu0 %2447
    %2449 = vrot.lane.b32.xlu0 %v2259, 96
    %v2450 = vpop.permute.xlu0 %2449
    %2451 = vrot.lane.b32.xlu0 %v2260, 96
    %v2452 = vpop.permute.xlu0 %2451
    %2517 = vst.msk [vmem:[#allocation2 + $0x8] sm:$0xff] %vm1235, %v2326
    %2518 = vst.msk [vmem:[#allocation2 + $0x20] sm:$0xff] %vm1235, %v2328
    %2519 = vst.msk [vmem:[#allocation2 + $0x38] sm:$0xff] %vm1235, %v2330
    %2520 = vst.msk [vmem:[#allocation2 + $0x50] sm:$0xff] %vm1235, %v2332
    %2521 = vst.msk [vmem:[#allocation2 + $0x68] sm:$0xff] %vm1235, %v2334
    %2522 = vst.msk [vmem:[#allocation2 + $0x80] sm:$0xff] %vm1235, %v2336
    %2523 = vst.msk [vmem:[#allocation2 + $0x98] sm:$0xff] %vm1235, %v2338
    %2524 = vst.msk [vmem:[#allocation2 + $0xb0] sm:$0xff] %vm1235, %v2340
    %2525 = vst.msk [vmem:[#allocation2 + $0xc8] sm:$0xff] %vm1235, %v2342
    %2526 = vst.msk [vmem:[#allocation2 + $0xe0] sm:$0xff] %vm1235, %v2344
    %2527 = vst.msk [vmem:[#allocation2 + $0xf8] sm:$0xff] %vm1235, %v2346
    %2528 = vst.msk [vmem:[#allocation2 + $0x110] sm:$0xff] %vm1235, %v2348
    %2529 = vst.msk [vmem:[#allocation2 + $0x128] sm:$0xff] %vm1235, %v2350
    %2530 = vst.msk [vmem:[#allocation2 + $0x140] sm:$0xff] %vm1235, %v2352
    %2531 = vst.msk [vmem:[#allocation2 + $0x158] sm:$0xff] %vm1235, %v2354
    %2532 = vst.msk [vmem:[#allocation2 + $0x170] sm:$0xff] %vm1235, %v2356
    %2533 = vst.msk [vmem:[#allocation2 + $0x188] sm:$0xff] %vm1235, %v2358
    %2534 = vst.msk [vmem:[#allocation2 + $0x1a0] sm:$0xff] %vm1235, %v2360
    %2535 = vst.msk [vmem:[#allocation2 + $0x1b8] sm:$0xff] %vm1235, %v2362
    %2536 = vst.msk [vmem:[#allocation2 + $0x1d0] sm:$0xff] %vm1235, %v2364
    %2537 = vst.msk [vmem:[#allocation2 + $0x1e8] sm:$0xff] %vm1235, %v2366
    %2538 = vst.msk [vmem:[#allocation2 + $0x200] sm:$0xff] %vm1235, %v2368
    %2539 = vst.msk [vmem:[#allocation2 + $0x218] sm:$0xff] %vm1235, %v2370
    %2540 = vst.msk [vmem:[#allocation2 + $0x230] sm:$0xff] %vm1235, %v2372
    %2541 = vst.msk [vmem:[#allocation2 + $0x248] sm:$0xff] %vm1235, %v2374
    %2542 = vst.msk [vmem:[#allocation2 + $0x260] sm:$0xff] %vm1235, %v2376
    %2543 = vst.msk [vmem:[#allocation2 + $0x278] sm:$0xff] %vm1235, %v2378
    %2544 = vst.msk [vmem:[#allocation2 + $0x290] sm:$0xff] %vm1235, %v2380
    %2545 = vst.msk [vmem:[#allocation2 + $0x2a8] sm:$0xff] %vm1235, %v2382
    %2546 = vst.msk [vmem:[#allocation2 + $0x2c0] sm:$0xff] %vm1235, %v2384
    %2547 = vst.msk [vmem:[#allocation2 + $0x2d8] sm:$0xff] %vm1235, %v2386
    %2548 = vst.msk [vmem:[#allocation2 + $0x2f0] sm:$0xff] %vm1235, %v2388
    %2549 = vst.msk [vmem:[#allocation2 + $0x308] sm:$0xff] %vm1235, %v2390
    %2550 = vst.msk [vmem:[#allocation2 + $0x320] sm:$0xff] %vm1235, %v2392
    %2551 = vst.msk [vmem:[#allocation2 + $0x338] sm:$0xff] %vm1235, %v2394
    %2552 = vst.msk [vmem:[#allocation2 + $0x350] sm:$0xff] %vm1235, %v2396
    %2553 = vst.msk [vmem:[#allocation2 + $0x368] sm:$0xff] %vm1235, %v2398
    %2554 = vst.msk [vmem:[#allocation2 + $0x380] sm:$0xff] %vm1235, %v2400
    %2555 = vst.msk [vmem:[#allocation2 + $0x398] sm:$0xff] %vm1235, %v2402
    %2556 = vst.msk [vmem:[#allocation2 + $0x3b0] sm:$0xff] %vm1235, %v2404
    %2557 = vst.msk [vmem:[#allocation2 + $0x3c8] sm:$0xff] %vm1235, %v2406
    %2558 = vst.msk [vmem:[#allocation2 + $0x3e0] sm:$0xff] %vm1235, %v2408
    %2559 = vst.msk [vmem:[#allocation2 + $0x3f8] sm:$0xff] %vm1235, %v2410
    %2560 = vst.msk [vmem:[#allocation2 + $0x410] sm:$0xff] %vm1235, %v2412
    %2561 = vst.msk [vmem:[#allocation2 + $0x428] sm:$0xff] %vm1235, %v2414
    %2562 = vst.msk [vmem:[#allocation2 + $0x440] sm:$0xff] %vm1235, %v2416
    %2563 = vst.msk [vmem:[#allocation2 + $0x458] sm:$0xff] %vm1235, %v2418
    %2564 = vst.msk [vmem:[#allocation2 + $0x470] sm:$0xff] %vm1235, %v2420
    %2565 = vst.msk [vmem:[#allocation2 + $0x488] sm:$0xff] %vm1235, %v2422
    %2566 = vst.msk [vmem:[#allocation2 + $0x4a0] sm:$0xff] %vm1235, %v2424
    %2567 = vst.msk [vmem:[#allocation2 + $0x4b8] sm:$0xff] %vm1235, %v2426
    %2568 = vst.msk [vmem:[#allocation2 + $0x4d0] sm:$0xff] %vm1235, %v2428
    %2569 = vst.msk [vmem:[#allocation2 + $0x4e8] sm:$0xff] %vm1235, %v2430
    %2570 = vst.msk [vmem:[#allocation2 + $0x500] sm:$0xff] %vm1235, %v2432
    %2571 = vst.msk [vmem:[#allocation2 + $0x518] sm:$0xff] %vm1235, %v2434
    %2572 = vst.msk [vmem:[#allocation2 + $0x530] sm:$0xff] %vm1235, %v2436
    %2573 = vst.msk [vmem:[#allocation2 + $0x548] sm:$0xff] %vm1235, %v2438
    %2574 = vst.msk [vmem:[#allocation2 + $0x560] sm:$0xff] %vm1235, %v2440
    %2575 = vst.msk [vmem:[#allocation2 + $0x578] sm:$0xff] %vm1235, %v2442
    %2576 = vst.msk [vmem:[#allocation2 + $0x590] sm:$0xff] %vm1235, %v2444
    %2577 = vst.msk [vmem:[#allocation2 + $0x5a8] sm:$0xff] %vm1235, %v2446
    %2578 = vst.msk [vmem:[#allocation2 + $0x5c0] sm:$0xff] %vm1235, %v2448
    %2579 = vst.msk [vmem:[#allocation2 + $0x5d8] sm:$0xff] %vm1235, %v2450
    %2580 = vst.msk [vmem:[#allocation2 + $0x5f0] sm:$0xff] %vm1235, %v2452
    %v2581 = vld [vmem:[%s1812 + $0x2] sm:$0xff]
    %v2582 = vld [vmem:[%s1812 + $0xa] sm:$0xff]
    %v2583 = vld [vmem:[%s1812 + $0x1a] sm:$0xff]
    %v2584 = vld [vmem:[%s1812 + $0x22] sm:$0xff]
    %v2585 = vld [vmem:[%s1812 + $0x32] sm:$0xff]
    %v2586 = vld [vmem:[%s1812 + $0x3a] sm:$0xff]
    %v2587 = vld [vmem:[%s1812 + $0x4a] sm:$0xff]
    %v2588 = vld [vmem:[%s1812 + $0x52] sm:$0xff]
    %v2589 = vld [vmem:[%s1812 + $0x62] sm:$0xff]
    %v2590 = vld [vmem:[%s1812 + $0x6a] sm:$0xff]
    %v2591 = vld [vmem:[%s1812 + $0x7a] sm:$0xff]
    %v2592 = vld [vmem:[%s1812 + $0x82] sm:$0xff]
    %v2593 = vld [vmem:[%s1812 + $0x92] sm:$0xff]
    %v2594 = vld [vmem:[%s1812 + $0x9a] sm:$0xff]
    %v2595 = vld [vmem:[%s1812 + $0xaa] sm:$0xff]
    %v2596 = vld [vmem:[%s1812 + $0xb2] sm:$0xff]
    %v2597 = vld [vmem:[%s1812 + $0xc2] sm:$0xff]
    %v2598 = vld [vmem:[%s1812 + $0xca] sm:$0xff]
    %v2599 = vld [vmem:[%s1812 + $0xda] sm:$0xff]
    %v2600 = vld [vmem:[%s1812 + $0xe2] sm:$0xff]
    %v2601 = vld [vmem:[%s1812 + $0xf2] sm:$0xff]
    %v2602 = vld [vmem:[%s1812 + $0xfa] sm:$0xff]
    %v2603 = vld [vmem:[%s1812 + $0x10a] sm:$0xff]
    %v2604 = vld [vmem:[%s1812 + $0x112] sm:$0xff]
    %v2605 = vld [vmem:[%s1812 + $0x122] sm:$0xff]
    %v2606 = vld [vmem:[%s1812 + $0x12a] sm:$0xff]
    %v2607 = vld [vmem:[%s1812 + $0x13a] sm:$0xff]
    %v2608 = vld [vmem:[%s1812 + $0x142] sm:$0xff]
    %v2609 = vld [vmem:[%s1812 + $0x152] sm:$0xff]
    %v2610 = vld [vmem:[%s1812 + $0x15a] sm:$0xff]
    %v2611 = vld [vmem:[%s1812 + $0x16a] sm:$0xff]
    %v2612 = vld [vmem:[%s1812 + $0x172] sm:$0xff]
    %v2613 = vld [vmem:[%s1812 + $0x1b2] sm:$0xff]
    %v2614 = vld [vmem:[%s1812 + $0x1ba] sm:$0xff]
    %v2615 = vld [vmem:[%s1812 + $0x1ca] sm:$0xff]
    %v2616 = vld [vmem:[%s1812 + $0x1d2] sm:$0xff]
    %v2617 = vld [vmem:[%s1812 + $0x1e2] sm:$0xff]
    %v2618 = vld [vmem:[%s1812 + $0x1ea] sm:$0xff]
    %v2619 = vld [vmem:[%s1812 + $0x1fa] sm:$0xff]
    %v2620 = vld [vmem:[%s1812 + $0x202] sm:$0xff]
    %v2621 = vld [vmem:[%s1812 + $0x212] sm:$0xff]
    %v2622 = vld [vmem:[%s1812 + $0x21a] sm:$0xff]
    %v2623 = vld [vmem:[%s1812 + $0x22a] sm:$0xff]
    %v2624 = vld [vmem:[%s1812 + $0x232] sm:$0xff]
    %v2625 = vld [vmem:[%s1812 + $0x242] sm:$0xff]
    %v2626 = vld [vmem:[%s1812 + $0x24a] sm:$0xff]
    %v2627 = vld [vmem:[%s1812 + $0x25a] sm:$0xff]
    %v2628 = vld [vmem:[%s1812 + $0x262] sm:$0xff]
    %v2629 = vld [vmem:[%s1812 + $0x272] sm:$0xff]
    %v2630 = vld [vmem:[%s1812 + $0x27a] sm:$0xff]
    %v2631 = vld [vmem:[%s1812 + $0x28a] sm:$0xff]
    %v2632 = vld [vmem:[%s1812 + $0x292] sm:$0xff]
    %v2633 = vld [vmem:[%s1812 + $0x2a2] sm:$0xff]
    %v2634 = vld [vmem:[%s1812 + $0x2aa] sm:$0xff]
    %v2635 = vld [vmem:[%s1812 + $0x2ba] sm:$0xff]
    %v2636 = vld [vmem:[%s1812 + $0x2c2] sm:$0xff]
    %v2637 = vld [vmem:[%s1812 + $0x2d2] sm:$0xff]
    %v2638 = vld [vmem:[%s1812 + $0x2da] sm:$0xff]
    %v2639 = vld [vmem:[%s1812 + $0x2ea] sm:$0xff]
    %v2640 = vld [vmem:[%s1812 + $0x2f2] sm:$0xff]
    %v2641 = vld [vmem:[%s1812 + $0x302] sm:$0xff]
    %v2642 = vld [vmem:[%s1812 + $0x30a] sm:$0xff]
    %v2643 = vld [vmem:[%s1812 + $0x31a] sm:$0xff]
    %v2644 = vld [vmem:[%s1812 + $0x322] sm:$0xff]
    %2645 = vst.msk [vmem:[#allocation2 + $0x10] sm:$0xff] %vm79, %v2581
    %2646 = vst.msk [vmem:[#allocation2 + $0x28] sm:$0xff] %vm79, %v2582
    %2647 = vst.msk [vmem:[#allocation2 + $0x40] sm:$0xff] %vm79, %v2583
    %2648 = vst.msk [vmem:[#allocation2 + $0x58] sm:$0xff] %vm79, %v2584
    %2649 = vst.msk [vmem:[#allocation2 + $0x70] sm:$0xff] %vm79, %v2585
    %2650 = vst.msk [vmem:[#allocation2 + $0x88] sm:$0xff] %vm79, %v2586
    %2651 = vst.msk [vmem:[#allocation2 + $0xa0] sm:$0xff] %vm79, %v2587
    %2652 = vst.msk [vmem:[#allocation2 + $0xb8] sm:$0xff] %vm79, %v2588
    %2653 = vst.msk [vmem:[#allocation2 + $0xd0] sm:$0xff] %vm79, %v2589
    %2654 = vst.msk [vmem:[#allocation2 + $0xe8] sm:$0xff] %vm79, %v2590
    %2655 = vst.msk [vmem:[#allocation2 + $0x100] sm:$0xff] %vm79, %v2591
    %2656 = vst.msk [vmem:[#allocation2 + $0x118] sm:$0xff] %vm79, %v2592
    %2657 = vst.msk [vmem:[#allocation2 + $0x130] sm:$0xff] %vm79, %v2593
    %2658 = vst.msk [vmem:[#allocation2 + $0x148] sm:$0xff] %vm79, %v2594
    %2659 = vst.msk [vmem:[#allocation2 + $0x160] sm:$0xff] %vm79, %v2595
    %2660 = vst.msk [vmem:[#allocation2 + $0x178] sm:$0xff] %vm79, %v2596
    %2661 = vst.msk [vmem:[#allocation2 + $0x190] sm:$0xff] %vm79, %v2597
    %2662 = vst.msk [vmem:[#allocation2 + $0x1a8] sm:$0xff] %vm79, %v2598
    %2663 = vst.msk [vmem:[#allocation2 + $0x1c0] sm:$0xff] %vm79, %v2599
    %2664 = vst.msk [vmem:[#allocation2 + $0x1d8] sm:$0xff] %vm79, %v2600
    %2665 = vst.msk [vmem:[#allocation2 + $0x1f0] sm:$0xff] %vm79, %v2601
    %2666 = vst.msk [vmem:[#allocation2 + $0x208] sm:$0xff] %vm79, %v2602
    %2667 = vst.msk [vmem:[#allocation2 + $0x220] sm:$0xff] %vm79, %v2603
    %2668 = vst.msk [vmem:[#allocation2 + $0x238] sm:$0xff] %vm79, %v2604
    %2669 = vst.msk [vmem:[#allocation2 + $0x250] sm:$0xff] %vm79, %v2605
    %2670 = vst.msk [vmem:[#allocation2 + $0x268] sm:$0xff] %vm79, %v2606
    %2671 = vst.msk [vmem:[#allocation2 + $0x280] sm:$0xff] %vm79, %v2607
    %2672 = vst.msk [vmem:[#allocation2 + $0x298] sm:$0xff] %vm79, %v2608
    %2673 = vst.msk [vmem:[#allocation2 + $0x2b0] sm:$0xff] %vm79, %v2609
    %2674 = vst.msk [vmem:[#allocation2 + $0x2c8] sm:$0xff] %vm79, %v2610
    %2675 = vst.msk [vmem:[#allocation2 + $0x2e0] sm:$0xff] %vm79, %v2611
    %2676 = vst.msk [vmem:[#allocation2 + $0x2f8] sm:$0xff] %vm79, %v2612
    %2677 = vst.msk [vmem:[#allocation2 + $0x310] sm:$0xff] %vm79, %v2613
    %2678 = vst.msk [vmem:[#allocation2 + $0x328] sm:$0xff] %vm79, %v2614
    %2679 = vst.msk [vmem:[#allocation2 + $0x340] sm:$0xff] %vm79, %v2615
    %2680 = vst.msk [vmem:[#allocation2 + $0x358] sm:$0xff] %vm79, %v2616
    %2681 = vst.msk [vmem:[#allocation2 + $0x370] sm:$0xff] %vm79, %v2617
    %2682 = vst.msk [vmem:[#allocation2 + $0x388] sm:$0xff] %vm79, %v2618
    %2683 = vst.msk [vmem:[#allocation2 + $0x3a0] sm:$0xff] %vm79, %v2619
    %2684 = vst.msk [vmem:[#allocation2 + $0x3b8] sm:$0xff] %vm79, %v2620
    %2685 = vst.msk [vmem:[#allocation2 + $0x3d0] sm:$0xff] %vm79, %v2621
    %2686 = vst.msk [vmem:[#allocation2 + $0x3e8] sm:$0xff] %vm79, %v2622
    %2687 = vst.msk [vmem:[#allocation2 + $0x400] sm:$0xff] %vm79, %v2623
    %2688 = vst.msk [vmem:[#allocation2 + $0x418] sm:$0xff] %vm79, %v2624
    %2689 = vst.msk [vmem:[#allocation2 + $0x430] sm:$0xff] %vm79, %v2625
    %2690 = vst.msk [vmem:[#allocation2 + $0x448] sm:$0xff] %vm79, %v2626
    %2691 = vst.msk [vmem:[#allocation2 + $0x460] sm:$0xff] %vm79, %v2627
    %2692 = vst.msk [vmem:[#allocation2 + $0x478] sm:$0xff] %vm79, %v2628
    %2693 = vst.msk [vmem:[#allocation2 + $0x490] sm:$0xff] %vm79, %v2629
    %2694 = vst.msk [vmem:[#allocation2 + $0x4a8] sm:$0xff] %vm79, %v2630
    %2695 = vst.msk [vmem:[#allocation2 + $0x4c0] sm:$0xff] %vm79, %v2631
    %2696 = vst.msk [vmem:[#allocation2 + $0x4d8] sm:$0xff] %vm79, %v2632
    %2697 = vst.msk [vmem:[#allocation2 + $0x4f0] sm:$0xff] %vm79, %v2633
    %2698 = vst.msk [vmem:[#allocation2 + $0x508] sm:$0xff] %vm79, %v2634
    %2699 = vst.msk [vmem:[#allocation2 + $0x520] sm:$0xff] %vm79, %v2635
    %2700 = vst.msk [vmem:[#allocation2 + $0x538] sm:$0xff] %vm79, %v2636
    %2701 = vst.msk [vmem:[#allocation2 + $0x550] sm:$0xff] %vm79, %v2637
    %2702 = vst.msk [vmem:[#allocation2 + $0x568] sm:$0xff] %vm79, %v2638
    %2703 = vst.msk [vmem:[#allocation2 + $0x580] sm:$0xff] %vm79, %v2639
    %2704 = vst.msk [vmem:[#allocation2 + $0x598] sm:$0xff] %vm79, %v2640
    %2705 = vst.msk [vmem:[#allocation2 + $0x5b0] sm:$0xff] %vm79, %v2641
    %2706 = vst.msk [vmem:[#allocation2 + $0x5c8] sm:$0xff] %vm79, %v2642
    %2707 = vst.msk [vmem:[#allocation2 + $0x5e0] sm:$0xff] %vm79, %v2643
    %2708 = vst.msk [vmem:[#allocation2 + $0x5f8] sm:$0xff] %vm79, %v2644
    %v2709 = vld [vmem:[#allocation2] sm:$0xff]
    %v2710 = vld [vmem:[#allocation2 + $0x8] sm:$0xff]
    %v2711 = vld [vmem:[#allocation2 + $0x10] sm:$0xff]
    %v2712 = vld [vmem:[#allocation2 + $0x18] sm:$0xff]
    %v2713 = vld [vmem:[#allocation2 + $0x20] sm:$0xff]
    %v2714 = vld [vmem:[#allocation2 + $0x28] sm:$0xff]
    %v2715 = vld [vmem:[#allocation2 + $0x30] sm:$0xff]
    %v2716 = vld [vmem:[#allocation2 + $0x38] sm:$0xff]
    %v2717 = vld [vmem:[#allocation2 + $0x40] sm:$0xff]
    %v2718 = vld [vmem:[#allocation2 + $0x48] sm:$0xff]
    %v2719 = vld [vmem:[#allocation2 + $0x50] sm:$0xff]
    %v2720 = vld [vmem:[#allocation2 + $0x58] sm:$0xff]
    %v2721 = vld [vmem:[#allocation2 + $0x60] sm:$0xff]
    %v2722 = vld [vmem:[#allocation2 + $0x68] sm:$0xff]
    %v2723 = vld [vmem:[#allocation2 + $0x70] sm:$0xff]
    %v2724 = vld [vmem:[#allocation2 + $0x78] sm:$0xff]
    %v2725 = vld [vmem:[#allocation2 + $0x80] sm:$0xff]
    %v2726 = vld [vmem:[#allocation2 + $0x88] sm:$0xff]
    %v2727 = vld [vmem:[#allocation2 + $0x90] sm:$0xff]
    %v2728 = vld [vmem:[#allocation2 + $0x98] sm:$0xff]
    %v2729 = vld [vmem:[#allocation2 + $0xa0] sm:$0xff]
    %v2730 = vld [vmem:[#allocation2 + $0xa8] sm:$0xff]
    %v2731 = vld [vmem:[#allocation2 + $0xb0] sm:$0xff]
    %v2732 = vld [vmem:[#allocation2 + $0xb8] sm:$0xff]
    %v2733 = vld [vmem:[#allocation2 + $0xc0] sm:$0xff]
    %v2734 = vld [vmem:[#allocation2 + $0xc8] sm:$0xff]
    %v2735 = vld [vmem:[#allocation2 + $0xd0] sm:$0xff]
    %v2736 = vld [vmem:[#allocation2 + $0xd8] sm:$0xff]
    %v2737 = vld [vmem:[#allocation2 + $0xe0] sm:$0xff]
    %v2738 = vld [vmem:[#allocation2 + $0xe8] sm:$0xff]
    %v2739 = vld [vmem:[#allocation2 + $0xf0] sm:$0xff]
    %v2740 = vld [vmem:[#allocation2 + $0xf8] sm:$0xff]
    %v2741 = vld [vmem:[#allocation2 + $0x100] sm:$0xff]
    %v2742 = vld [vmem:[#allocation2 + $0x108] sm:$0xff]
    %v2743 = vld [vmem:[#allocation2 + $0x110] sm:$0xff]
    %v2744 = vld [vmem:[#allocation2 + $0x118] sm:$0xff]
    %v2745 = vld [vmem:[#allocation2 + $0x120] sm:$0xff]
    %v2746 = vld [vmem:[#allocation2 + $0x128] sm:$0xff]
    %v2747 = vld [vmem:[#allocation2 + $0x130] sm:$0xff]
    %v2748 = vld [vmem:[#allocation2 + $0x138] sm:$0xff]
    %v2749 = vld [vmem:[#allocation2 + $0x140] sm:$0xff]
    %v2750 = vld [vmem:[#allocation2 + $0x148] sm:$0xff]
    %v2751 = vld [vmem:[#allocation2 + $0x150] sm:$0xff]
    %v2752 = vld [vmem:[#allocation2 + $0x158] sm:$0xff]
    %v2753 = vld [vmem:[#allocation2 + $0x160] sm:$0xff]
    %v2754 = vld [vmem:[#allocation2 + $0x168] sm:$0xff]
    %v2755 = vld [vmem:[#allocation2 + $0x170] sm:$0xff]
    %v2756 = vld [vmem:[#allocation2 + $0x178] sm:$0xff]
    %v2757 = vld [vmem:[#allocation2 + $0x180] sm:$0xff]
    %v2758 = vld [vmem:[#allocation2 + $0x188] sm:$0xff]
    %v2759 = vld [vmem:[#allocation2 + $0x190] sm:$0xff]
    %v2760 = vld [vmem:[#allocation2 + $0x198] sm:$0xff]
    %v2761 = vld [vmem:[#allocation2 + $0x1a0] sm:$0xff]
    %v2762 = vld [vmem:[#allocation2 + $0x1a8] sm:$0xff]
    %v2763 = vld [vmem:[#allocation2 + $0x1b0] sm:$0xff]
    %v2764 = vld [vmem:[#allocation2 + $0x1b8] sm:$0xff]
    %v2765 = vld [vmem:[#allocation2 + $0x1c0] sm:$0xff]
    %v2766 = vld [vmem:[#allocation2 + $0x1c8] sm:$0xff]
    %v2767 = vld [vmem:[#allocation2 + $0x1d0] sm:$0xff]
    %v2768 = vld [vmem:[#allocation2 + $0x1d8] sm:$0xff]
    %v2769 = vld [vmem:[#allocation2 + $0x1e0] sm:$0xff]
    %v2770 = vld [vmem:[#allocation2 + $0x1e8] sm:$0xff]
    %v2771 = vld [vmem:[#allocation2 + $0x1f0] sm:$0xff]
    %v2772 = vld [vmem:[#allocation2 + $0x1f8] sm:$0xff]
    %v2773 = vld [vmem:[#allocation2 + $0x200] sm:$0xff]
    %v2774 = vld [vmem:[#allocation2 + $0x208] sm:$0xff]
    %v2775 = vld [vmem:[#allocation2 + $0x210] sm:$0xff]
    %v2776 = vld [vmem:[#allocation2 + $0x218] sm:$0xff]
    %v2777 = vld [vmem:[#allocation2 + $0x220] sm:$0xff]
    %v2778 = vld [vmem:[#allocation2 + $0x228] sm:$0xff]
    %v2779 = vld [vmem:[#allocation2 + $0x230] sm:$0xff]
    %v2780 = vld [vmem:[#allocation2 + $0x238] sm:$0xff]
    %v2781 = vld [vmem:[#allocation2 + $0x240] sm:$0xff]
    %v2782 = vld [vmem:[#allocation2 + $0x248] sm:$0xff]
    %v2783 = vld [vmem:[#allocation2 + $0x250] sm:$0xff]
    %v2784 = vld [vmem:[#allocation2 + $0x258] sm:$0xff]
    %v2785 = vld [vmem:[#allocation2 + $0x260] sm:$0xff]
    %v2786 = vld [vmem:[#allocation2 + $0x268] sm:$0xff]
    %v2787 = vld [vmem:[#allocation2 + $0x270] sm:$0xff]
    %v2788 = vld [vmem:[#allocation2 + $0x278] sm:$0xff]
    %v2789 = vld [vmem:[#allocation2 + $0x280] sm:$0xff]
    %v2790 = vld [vmem:[#allocation2 + $0x288] sm:$0xff]
    %v2791 = vld [vmem:[#allocation2 + $0x290] sm:$0xff]
    %v2792 = vld [vmem:[#allocation2 + $0x298] sm:$0xff]
    %v2793 = vld [vmem:[#allocation2 + $0x2a0] sm:$0xff]
    %v2794 = vld [vmem:[#allocation2 + $0x2a8] sm:$0xff]
    %v2795 = vld [vmem:[#allocation2 + $0x2b0] sm:$0xff]
    %v2796 = vld [vmem:[#allocation2 + $0x2b8] sm:$0xff]
    %v2797 = vld [vmem:[#allocation2 + $0x2c0] sm:$0xff]
    %v2798 = vld [vmem:[#allocation2 + $0x2c8] sm:$0xff]
    %v2799 = vld [vmem:[#allocation2 + $0x2d0] sm:$0xff]
    %v2800 = vld [vmem:[#allocation2 + $0x2d8] sm:$0xff]
    %v2801 = vld [vmem:[#allocation2 + $0x2e0] sm:$0xff]
    %v2802 = vld [vmem:[#allocation2 + $0x2e8] sm:$0xff]
    %v2803 = vld [vmem:[#allocation2 + $0x2f0] sm:$0xff]
    %v2804 = vld [vmem:[#allocation2 + $0x2f8] sm:$0xff]
    %v2805 = vld [vmem:[#allocation2 + $0x300] sm:$0xff]
    %v2806 = vld [vmem:[#allocation2 + $0x308] sm:$0xff]
    %v2807 = vld [vmem:[#allocation2 + $0x310] sm:$0xff]
    %v2808 = vld [vmem:[#allocation2 + $0x318] sm:$0xff]
    %v2809 = vld [vmem:[#allocation2 + $0x320] sm:$0xff]
    %v2810 = vld [vmem:[#allocation2 + $0x328] sm:$0xff]
    %v2811 = vld [vmem:[#allocation2 + $0x330] sm:$0xff]
    %v2812 = vld [vmem:[#allocation2 + $0x338] sm:$0xff]
    %v2813 = vld [vmem:[#allocation2 + $0x340] sm:$0xff]
    %v2814 = vld [vmem:[#allocation2 + $0x348] sm:$0xff]
    %v2815 = vld [vmem:[#allocation2 + $0x350] sm:$0xff]
    %v2816 = vld [vmem:[#allocation2 + $0x358] sm:$0xff]
    %v2817 = vld [vmem:[#allocation2 + $0x360] sm:$0xff]
    %v2818 = vld [vmem:[#allocation2 + $0x368] sm:$0xff]
    %v2819 = vld [vmem:[#allocation2 + $0x370] sm:$0xff]
    %v2820 = vld [vmem:[#allocation2 + $0x378] sm:$0xff]
    %v2821 = vld [vmem:[#allocation2 + $0x380] sm:$0xff]
    %v2822 = vld [vmem:[#allocation2 + $0x388] sm:$0xff]
    %v2823 = vld [vmem:[#allocation2 + $0x390] sm:$0xff]
    %v2824 = vld [vmem:[#allocation2 + $0x398] sm:$0xff]
    %v2825 = vld [vmem:[#allocation2 + $0x3a0] sm:$0xff]
    %v2826 = vld [vmem:[#allocation2 + $0x3a8] sm:$0xff]
    %v2827 = vld [vmem:[#allocation2 + $0x3b0] sm:$0xff]
    %v2828 = vld [vmem:[#allocation2 + $0x3b8] sm:$0xff]
    %v2829 = vld [vmem:[#allocation2 + $0x3c0] sm:$0xff]
    %v2830 = vld [vmem:[#allocation2 + $0x3c8] sm:$0xff]
    %v2831 = vld [vmem:[#allocation2 + $0x3d0] sm:$0xff]
    %v2832 = vld [vmem:[#allocation2 + $0x3d8] sm:$0xff]
    %v2833 = vld [vmem:[#allocation2 + $0x3e0] sm:$0xff]
    %v2834 = vld [vmem:[#allocation2 + $0x3e8] sm:$0xff]
    %v2835 = vld [vmem:[#allocation2 + $0x3f0] sm:$0xff]
    %v2836 = vld [vmem:[#allocation2 + $0x3f8] sm:$0xff]
    %v2837 = vld [vmem:[#allocation2 + $0x400] sm:$0xff]
    %v2838 = vld [vmem:[#allocation2 + $0x408] sm:$0xff]
    %v2839 = vld [vmem:[#allocation2 + $0x410] sm:$0xff]
    %v2840 = vld [vmem:[#allocation2 + $0x418] sm:$0xff]
    %v2841 = vld [vmem:[#allocation2 + $0x420] sm:$0xff]
    %v2842 = vld [vmem:[#allocation2 + $0x428] sm:$0xff]
    %v2843 = vld [vmem:[#allocation2 + $0x430] sm:$0xff]
    %v2844 = vld [vmem:[#allocation2 + $0x438] sm:$0xff]
    %v2845 = vld [vmem:[#allocation2 + $0x440] sm:$0xff]
    %v2846 = vld [vmem:[#allocation2 + $0x448] sm:$0xff]
    %v2847 = vld [vmem:[#allocation2 + $0x450] sm:$0xff]
    %v2848 = vld [vmem:[#allocation2 + $0x458] sm:$0xff]
    %v2849 = vld [vmem:[#allocation2 + $0x460] sm:$0xff]
    %v2850 = vld [vmem:[#allocation2 + $0x468] sm:$0xff]
    %v2851 = vld [vmem:[#allocation2 + $0x470] sm:$0xff]
    %v2852 = vld [vmem:[#allocation2 + $0x478] sm:$0xff]
    %v2853 = vld [vmem:[#allocation2 + $0x480] sm:$0xff]
    %v2854 = vld [vmem:[#allocation2 + $0x488] sm:$0xff]
    %v2855 = vld [vmem:[#allocation2 + $0x490] sm:$0xff]
    %v2856 = vld [vmem:[#allocation2 + $0x498] sm:$0xff]
    %v2857 = vld [vmem:[#allocation2 + $0x4a0] sm:$0xff]
    %v2858 = vld [vmem:[#allocation2 + $0x4a8] sm:$0xff]
    %v2859 = vld [vmem:[#allocation2 + $0x4b0] sm:$0xff]
    %v2860 = vld [vmem:[#allocation2 + $0x4b8] sm:$0xff]
    %v2861 = vld [vmem:[#allocation2 + $0x4c0] sm:$0xff]
    %v2862 = vld [vmem:[#allocation2 + $0x4c8] sm:$0xff]
    %v2863 = vld [vmem:[#allocation2 + $0x4d0] sm:$0xff]
    %v2864 = vld [vmem:[#allocation2 + $0x4d8] sm:$0xff]
    %v2865 = vld [vmem:[#allocation2 + $0x4e0] sm:$0xff]
    %v2866 = vld [vmem:[#allocation2 + $0x4e8] sm:$0xff]
    %v2867 = vld [vmem:[#allocation2 + $0x4f0] sm:$0xff]
    %v2868 = vld [vmem:[#allocation2 + $0x4f8] sm:$0xff]
    %v2869 = vld [vmem:[#allocation2 + $0x500] sm:$0xff]
    %v2870 = vld [vmem:[#allocation2 + $0x508] sm:$0xff]
    %v2871 = vld [vmem:[#allocation2 + $0x510] sm:$0xff]
    %v2872 = vld [vmem:[#allocation2 + $0x518] sm:$0xff]
    %v2873 = vld [vmem:[#allocation2 + $0x520] sm:$0xff]
    %v2874 = vld [vmem:[#allocation2 + $0x528] sm:$0xff]
    %v2875 = vld [vmem:[#allocation2 + $0x530] sm:$0xff]
    %v2876 = vld [vmem:[#allocation2 + $0x538] sm:$0xff]
    %v2877 = vld [vmem:[#allocation2 + $0x540] sm:$0xff]
    %v2878 = vld [vmem:[#allocation2 + $0x548] sm:$0xff]
    %v2879 = vld [vmem:[#allocation2 + $0x550] sm:$0xff]
    %v2880 = vld [vmem:[#allocation2 + $0x558] sm:$0xff]
    %v2881 = vld [vmem:[#allocation2 + $0x560] sm:$0xff]
    %v2882 = vld [vmem:[#allocation2 + $0x568] sm:$0xff]
    %v2883 = vld [vmem:[#allocation2 + $0x570] sm:$0xff]
    %v2884 = vld [vmem:[#allocation2 + $0x578] sm:$0xff]
    %v2885 = vld [vmem:[#allocation2 + $0x580] sm:$0xff]
    %v2886 = vld [vmem:[#allocation2 + $0x588] sm:$0xff]
    %v2887 = vld [vmem:[#allocation2 + $0x590] sm:$0xff]
    %v2888 = vld [vmem:[#allocation2 + $0x598] sm:$0xff]
    %v2889 = vld [vmem:[#allocation2 + $0x5a0] sm:$0xff]
    %v2890 = vld [vmem:[#allocation2 + $0x5a8] sm:$0xff]
    %v2891 = vld [vmem:[#allocation2 + $0x5b0] sm:$0xff]
    %v2892 = vld [vmem:[#allocation2 + $0x5b8] sm:$0xff]
    %v2893 = vld [vmem:[#allocation2 + $0x5c0] sm:$0xff]
    %v2894 = vld [vmem:[#allocation2 + $0x5c8] sm:$0xff]
    %v2895 = vld [vmem:[#allocation2 + $0x5d0] sm:$0xff]
    %v2896 = vld [vmem:[#allocation2 + $0x5d8] sm:$0xff]
    %v2897 = vld [vmem:[#allocation2 + $0x5e0] sm:$0xff]
    %v2898 = vld [vmem:[#allocation2 + $0x5e8] sm:$0xff]
    %v2899 = vld [vmem:[#allocation2 + $0x5f0] sm:$0xff]
    %v2900 = vld [vmem:[#allocation2 + $0x5f8] sm:$0xff]
    %v2901 = vld [vmem:[%s1] sm:$0xff]
    %v2902 = vld [vmem:[%s1 + $0x8] sm:$0xf]
    %2905 = vst [vmem:[#allocation1] ss:$2 sm:$0xff] %v2901
    %s2906 = scalar_lea.vmem [#allocation1], 16
    %2907 = vst [vmem:[%s2906] ss:$2 sm:$0xff] %v2902
    %v2908 = vld.sshfl [vmem:[#allocation1] sm:$0xff pattern:$0x75316420]
    %v2909 = vld.sshfl [vmem:[#allocation1 + $0x8] sm:$0xff pattern:$0x75316420]
    %v2910 = vld.sshfl [vmem:[#allocation1 + $0x10] sm:$0xff pattern:$0x75316420]
    %v2913 = vsel %vm79, %v2910, 0
    %v2916 = vsel %vm79, %v2711, 0
    %v2919 = vsel %vm79, %v2714, 0
    %v2922 = vsel %vm79, %v2717, 0
    %v2925 = vsel %vm79, %v2720, 0
    %v2928 = vsel %vm79, %v2723, 0
    %v2931 = vsel %vm79, %v2726, 0
    %v2934 = vsel %vm79, %v2729, 0
    %v2937 = vsel %vm79, %v2732, 0
    %v2940 = vsel %vm79, %v2735, 0
    %v2943 = vsel %vm79, %v2738, 0
    %v2946 = vsel %vm79, %v2741, 0
    %v2949 = vsel %vm79, %v2744, 0
    %v2952 = vsel %vm79, %v2747, 0
    %v2955 = vsel %vm79, %v2750, 0
    %v2958 = vsel %vm79, %v2753, 0
    %v2961 = vsel %vm79, %v2756, 0
    %v2964 = vsel %vm79, %v2759, 0
    %v2967 = vsel %vm79, %v2762, 0
    %v2970 = vsel %vm79, %v2765, 0
    %v2973 = vsel %vm79, %v2768, 0
    %v2976 = vsel %vm79, %v2771, 0
    %v2979 = vsel %vm79, %v2774, 0
    %v2982 = vsel %vm79, %v2777, 0
    %v2985 = vsel %vm79, %v2780, 0
    %v2988 = vsel %vm79, %v2783, 0
    %v2991 = vsel %vm79, %v2786, 0
    %v2994 = vsel %vm79, %v2789, 0
    %v2997 = vsel %vm79, %v2792, 0
    %v3000 = vsel %vm79, %v2795, 0
    %v3003 = vsel %vm79, %v2798, 0
    %v3006 = vsel %vm79, %v2801, 0
    %v3009 = vsel %vm79, %v2804, 0
    %v3012 = vsel %vm79, %v2807, 0
    %v3015 = vsel %vm79, %v2810, 0
    %v3018 = vsel %vm79, %v2813, 0
    %v3021 = vsel %vm79, %v2816, 0
    %v3024 = vsel %vm79, %v2819, 0
    %v3027 = vsel %vm79, %v2822, 0
    %v3030 = vsel %vm79, %v2825, 0
    %v3033 = vsel %vm79, %v2828, 0
    %v3036 = vsel %vm79, %v2831, 0
    %v3039 = vsel %vm79, %v2834, 0
    %v3042 = vsel %vm79, %v2837, 0
    %v3045 = vsel %vm79, %v2840, 0
    %v3048 = vsel %vm79, %v2843, 0
    %v3051 = vsel %vm79, %v2846, 0
    %v3054 = vsel %vm79, %v2849, 0
    %v3057 = vsel %vm79, %v2852, 0
    %v3060 = vsel %vm79, %v2855, 0
    %v3063 = vsel %vm79, %v2858, 0
    %v3066 = vsel %vm79, %v2861, 0
    %v3069 = vsel %vm79, %v2864, 0
    %v3072 = vsel %vm79, %v2867, 0
    %v3075 = vsel %vm79, %v2870, 0
    %v3078 = vsel %vm79, %v2873, 0
    %v3081 = vsel %vm79, %v2876, 0
    %v3084 = vsel %vm79, %v2879, 0
    %v3087 = vsel %vm79, %v2882, 0
    %v3090 = vsel %vm79, %v2885, 0
    %v3093 = vsel %vm79, %v2888, 0
    %v3096 = vsel %vm79, %v2891, 0
    %v3099 = vsel %vm79, %v2894, 0
    %v3102 = vsel %vm79, %v2897, 0
    %v3105 = vsel %vm79, %v2900, 0
    %3107 = vmatpush.xpose.msra.mxu0 %v2754
    %3108 = vmatpush.xpose.msra.mxu0 %v2751
    %3109 = vmatpush.xpose.msra.mxu0 %v2748
    %3110 = vmatpush.xpose.msra.mxu0 %v2745
    %3111 = vmatpush.xpose.msra.mxu0 %v2742
    %3112 = vmatpush.xpose.msra.mxu0 %v2739
    %3113 = vmatpush.xpose.msra.mxu0 %v2736
    %3114 = vmatpush.xpose.msra.mxu0 %v2733
    %3115 = vmatpush.xpose.msra.mxu0 %v2730
    %3116 = vmatpush.xpose.msra.mxu0 %v2727
    %3117 = vmatpush.xpose.msra.mxu0 %v2724
    %3118 = vmatpush.xpose.msra.mxu0 %v2721
    %3119 = vmatpush.xpose.msra.mxu0 %v2718
    %3120 = vmatpush.xpose.msra.mxu0 %v2715
    %3121 = vmatpush.xpose.msra.mxu0 %v2712
    %3122 = vmatpush.xpose.msra.mxu0 %v2709
    %3123 = vmatmul.f32.gmra.mxu0 %v2908
    %v3124 = vpop.f32.mrf.mxu0
    %v3125 = vadd.f32 0.0, %v3124
    %3126 = vdwg.mxu0
    %3127 = vmatpush.xpose.msra.mxu0 %v2755
    %3128 = vmatpush.xpose.msra.mxu0 %v2752
    %3129 = vmatpush.xpose.msra.mxu0 %v2749
    %3130 = vmatpush.xpose.msra.mxu0 %v2746
    %3131 = vmatpush.xpose.msra.mxu0 %v2743
    %3132 = vmatpush.xpose.msra.mxu0 %v2740
    %3133 = vmatpush.xpose.msra.mxu0 %v2737
    %3134 = vmatpush.xpose.msra.mxu0 %v2734
    %3135 = vmatpush.xpose.msra.mxu0 %v2731
    %3136 = vmatpush.xpose.msra.mxu0 %v2728
    %3137 = vmatpush.xpose.msra.mxu0 %v2725
    %3138 = vmatpush.xpose.msra.mxu0 %v2722
    %3139 = vmatpush.xpose.msra.mxu0 %v2719
    %3140 = vmatpush.xpose.msra.mxu0 %v2716
    %3141 = vmatpush.xpose.msra.mxu0 %v2713
    %3142 = vmatpush.xpose.msra.mxu0 %v2710
    %3143 = vmatmul.f32.gmra.mxu0 %v2909
    %v3144 = vpop.f32.mrf.mxu0
    %v3145 = vadd.f32 %v3125, %v3144
    %3146 = vdwg.mxu0
    %3147 = vmatpush.xpose.msra.mxu0 %v2961
    %3148 = vmatpush.xpose.msra.mxu0 %v2958
    %3149 = vmatpush.xpose.msra.mxu0 %v2955
    %3150 = vmatpush.xpose.msra.mxu0 %v2952
    %3151 = vmatpush.xpose.msra.mxu0 %v2949
    %3152 = vmatpush.xpose.msra.mxu0 %v2946
    %3153 = vmatpush.xpose.msra.mxu0 %v2943
    %3154 = vmatpush.xpose.msra.mxu0 %v2940
    %3155 = vmatpush.xpose.msra.mxu0 %v2937
    %3156 = vmatpush.xpose.msra.mxu0 %v2934
    %3157 = vmatpush.xpose.msra.mxu0 %v2931
    %3158 = vmatpush.xpose.msra.mxu0 %v2928
    %3159 = vmatpush.xpose.msra.mxu0 %v2925
    %3160 = vmatpush.xpose.msra.mxu0 %v2922
    %3161 = vmatpush.xpose.msra.mxu0 %v2919
    %3162 = vmatpush.xpose.msra.mxu0 %v2916
    %3163 = vmatmul.f32.gmra.mxu0 %v2913
    %v3164 = vpop.f32.mrf.mxu0
    %v3165 = vadd.f32 %v3145, %v3164
    %3166 = vdwg.mxu0
    %3167 = vmatpush.xpose.msra.mxu0 %v2802
    %3168 = vmatpush.xpose.msra.mxu0 %v2799
    %3169 = vmatpush.xpose.msra.mxu0 %v2796
    %3170 = vmatpush.xpose.msra.mxu0 %v2793
    %3171 = vmatpush.xpose.msra.mxu0 %v2790
    %3172 = vmatpush.xpose.msra.mxu0 %v2787
    %3173 = vmatpush.xpose.msra.mxu0 %v2784
    %3174 = vmatpush.xpose.msra.mxu0 %v2781
    %3175 = vmatpush.xpose.msra.mxu0 %v2778
    %3176 = vmatpush.xpose.msra.mxu0 %v2775
    %3177 = vmatpush.xpose.msra.mxu0 %v2772
    %3178 = vmatpush.xpose.msra.mxu0 %v2769
    %3179 = vmatpush.xpose.msra.mxu0 %v2766
    %3180 = vmatpush.xpose.msra.mxu0 %v2763
    %3181 = vmatpush.xpose.msra.mxu0 %v2760
    %3182 = vmatpush.xpose.msra.mxu0 %v2757
    %3183 = vmatmul.f32.gmra.mxu0 %v2908
    %v3184 = vpop.f32.mrf.mxu0
    %v3185 = vadd.f32 0.0, %v3184
    %3186 = vdwg.mxu0
    %3187 = vmatpush.xpose.msra.mxu0 %v2803
    %3188 = vmatpush.xpose.msra.mxu0 %v2800
    %3189 = vmatpush.xpose.msra.mxu0 %v2797
    %3190 = vmatpush.xpose.msra.mxu0 %v2794
    %3191 = vmatpush.xpose.msra.mxu0 %v2791
    %3192 = vmatpush.xpose.msra.mxu0 %v2788
    %3193 = vmatpush.xpose.msra.mxu0 %v2785
    %3194 = vmatpush.xpose.msra.mxu0 %v2782
    %3195 = vmatpush.xpose.msra.mxu0 %v2779
    %3196 = vmatpush.xpose.msra.mxu0 %v2776
    %3197 = vmatpush.xpose.msra.mxu0 %v2773
    %3198 = vmatpush.xpose.msra.mxu0 %v2770
    %3199 = vmatpush.xpose.msra.mxu0 %v2767
    %3200 = vmatpush.xpose.msra.mxu0 %v2764
    %3201 = vmatpush.xpose.msra.mxu0 %v2761
    %3202 = vmatpush.xpose.msra.mxu0 %v2758
    %3203 = vmatmul.f32.gmra.mxu0 %v2909
    %v3204 = vpop.f32.mrf.mxu0
    %v3205 = vadd.f32 %v3185, %v3204
    %3206 = vdwg.mxu0
    %3207 = vmatpush.xpose.msra.mxu0 %v3009
    %3208 = vmatpush.xpose.msra.mxu0 %v3006
    %3209 = vmatpush.xpose.msra.mxu0 %v3003
    %3210 = vmatpush.xpose.msra.mxu0 %v3000
    %3211 = vmatpush.xpose.msra.mxu0 %v2997
    %3212 = vmatpush.xpose.msra.mxu0 %v2994
    %3213 = vmatpush.xpose.msra.mxu0 %v2991
    %3214 = vmatpush.xpose.msra.mxu0 %v2988
    %3215 = vmatpush.xpose.msra.mxu0 %v2985
    %3216 = vmatpush.xpose.msra.mxu0 %v2982
    %3217 = vmatpush.xpose.msra.mxu0 %v2979
    %3218 = vmatpush.xpose.msra.mxu0 %v2976
    %3219 = vmatpush.xpose.msra.mxu0 %v2973
    %3220 = vmatpush.xpose.msra.mxu0 %v2970
    %3221 = vmatpush.xpose.msra.mxu0 %v2967
    %3222 = vmatpush.xpose.msra.mxu0 %v2964
    %3223 = vmatmul.f32.gmra.mxu0 %v2913
    %v3224 = vpop.f32.mrf.mxu0
    %v3225 = vadd.f32 %v3205, %v3224
    %3226 = vdwg.mxu0
    %3227 = vmatpush.xpose.msra.mxu0 %v2850
    %3228 = vmatpush.xpose.msra.mxu0 %v2847
    %3229 = vmatpush.xpose.msra.mxu0 %v2844
    %3230 = vmatpush.xpose.msra.mxu0 %v2841
    %3231 = vmatpush.xpose.msra.mxu0 %v2838
    %3232 = vmatpush.xpose.msra.mxu0 %v2835
    %3233 = vmatpush.xpose.msra.mxu0 %v2832
    %3234 = vmatpush.xpose.msra.mxu0 %v2829
    %3235 = vmatpush.xpose.msra.mxu0 %v2826
    %3236 = vmatpush.xpose.msra.mxu0 %v2823
    %3237 = vmatpush.xpose.msra.mxu0 %v2820
    %3238 = vmatpush.xpose.msra.mxu0 %v2817
    %3239 = vmatpush.xpose.msra.mxu0 %v2814
    %3240 = vmatpush.xpose.msra.mxu0 %v2811
    %3241 = vmatpush.xpose.msra.mxu0 %v2808
    %3242 = vmatpush.xpose.msra.mxu0 %v2805
    %3243 = vmatmul.f32.gmra.mxu0 %v2908
    %v3244 = vpop.f32.mrf.mxu0
    %v3245 = vadd.f32 0.0, %v3244
    %3246 = vdwg.mxu0
    %3247 = vmatpush.xpose.msra.mxu0 %v2851
    %3248 = vmatpush.xpose.msra.mxu0 %v2848
    %3249 = vmatpush.xpose.msra.mxu0 %v2845
    %3250 = vmatpush.xpose.msra.mxu0 %v2842
    %3251 = vmatpush.xpose.msra.mxu0 %v2839
    %3252 = vmatpush.xpose.msra.mxu0 %v2836
    %3253 = vmatpush.xpose.msra.mxu0 %v2833
    %3254 = vmatpush.xpose.msra.mxu0 %v2830
    %3255 = vmatpush.xpose.msra.mxu0 %v2827
    %3256 = vmatpush.xpose.msra.mxu0 %v2824
    %3257 = vmatpush.xpose.msra.mxu0 %v2821
    %3258 = vmatpush.xpose.msra.mxu0 %v2818
    %3259 = vmatpush.xpose.msra.mxu0 %v2815
    %3260 = vmatpush.xpose.msra.mxu0 %v2812
    %3261 = vmatpush.xpose.msra.mxu0 %v2809
    %3262 = vmatpush.xpose.msra.mxu0 %v2806
    %3263 = vmatmul.f32.gmra.mxu0 %v2909
    %v3264 = vpop.f32.mrf.mxu0
    %v3265 = vadd.f32 %v3245, %v3264
    %3266 = vdwg.mxu0
    %3267 = vmatpush.xpose.msra.mxu0 %v3057
    %3268 = vmatpush.xpose.msra.mxu0 %v3054
    %3269 = vmatpush.xpose.msra.mxu0 %v3051
    %3270 = vmatpush.xpose.msra.mxu0 %v3048
    %3271 = vmatpush.xpose.msra.mxu0 %v3045
    %3272 = vmatpush.xpose.msra.mxu0 %v3042
    %3273 = vmatpush.xpose.msra.mxu0 %v3039
    %3274 = vmatpush.xpose.msra.mxu0 %v3036
    %3275 = vmatpush.xpose.msra.mxu0 %v3033
    %3276 = vmatpush.xpose.msra.mxu0 %v3030
    %3277 = vmatpush.xpose.msra.mxu0 %v3027
    %3278 = vmatpush.xpose.msra.mxu0 %v3024
    %3279 = vmatpush.xpose.msra.mxu0 %v3021
    %3280 = vmatpush.xpose.msra.mxu0 %v3018
    %3281 = vmatpush.xpose.msra.mxu0 %v3015
    %3282 = vmatpush.xpose.msra.mxu0 %v3012
    %3283 = vmatmul.f32.gmra.mxu0 %v2913
    %v3284 = vpop.f32.mrf.mxu0
    %v3285 = vadd.f32 %v3265, %v3284
    %3286 = vdwg.mxu0
    %3287 = vmatpush.xpose.msra.mxu0 %v2898
    %3288 = vmatpush.xpose.msra.mxu0 %v2895
    %3289 = vmatpush.xpose.msra.mxu0 %v2892
    %3290 = vmatpush.xpose.msra.mxu0 %v2889
    %3291 = vmatpush.xpose.msra.mxu0 %v2886
    %3292 = vmatpush.xpose.msra.mxu0 %v2883
    %3293 = vmatpush.xpose.msra.mxu0 %v2880
    %3294 = vmatpush.xpose.msra.mxu0 %v2877
    %3295 = vmatpush.xpose.msra.mxu0 %v2874
    %3296 = vmatpush.xpose.msra.mxu0 %v2871
    %3297 = vmatpush.xpose.msra.mxu0 %v2868
    %3298 = vmatpush.xpose.msra.mxu0 %v2865
    %3299 = vmatpush.xpose.msra.mxu0 %v2862
    %3300 = vmatpush.xpose.msra.mxu0 %v2859
    %3301 = vmatpush.xpose.msra.mxu0 %v2856
    %3302 = vmatpush.xpose.msra.mxu0 %v2853
    %3303 = vmatmul.f32.gmra.mxu0 %v2908
    %v3304 = vpop.f32.mrf.mxu0
    %v3305 = vadd.f32 0.0, %v3304
    %3306 = vdwg.mxu0
    %3307 = vmatpush.xpose.msra.mxu0 %v2899
    %3308 = vmatpush.xpose.msra.mxu0 %v2896
    %3309 = vmatpush.xpose.msra.mxu0 %v2893
    %3310 = vmatpush.xpose.msra.mxu0 %v2890
    %3311 = vmatpush.xpose.msra.mxu0 %v2887
    %3312 = vmatpush.xpose.msra.mxu0 %v2884
    %3313 = vmatpush.xpose.msra.mxu0 %v2881
    %3314 = vmatpush.xpose.msra.mxu0 %v2878
    %3315 = vmatpush.xpose.msra.mxu0 %v2875
    %3316 = vmatpush.xpose.msra.mxu0 %v2872
    %3317 = vmatpush.xpose.msra.mxu0 %v2869
    %3318 = vmatpush.xpose.msra.mxu0 %v2866
    %3319 = vmatpush.xpose.msra.mxu0 %v2863
    %3320 = vmatpush.xpose.msra.mxu0 %v2860
    %3321 = vmatpush.xpose.msra.mxu0 %v2857
    %3322 = vmatpush.xpose.msra.mxu0 %v2854
    %3323 = vmatmul.f32.gmra.mxu0 %v2909
    %v3324 = vpop.f32.mrf.mxu0
    %v3325 = vadd.f32 %v3305, %v3324
    %3326 = vdwg.mxu0
    %3327 = vmatpush.xpose.msra.mxu0 %v3105
    %3328 = vmatpush.xpose.msra.mxu0 %v3102
    %3329 = vmatpush.xpose.msra.mxu0 %v3099
    %3330 = vmatpush.xpose.msra.mxu0 %v3096
    %3331 = vmatpush.xpose.msra.mxu0 %v3093
    %3332 = vmatpush.xpose.msra.mxu0 %v3090
    %3333 = vmatpush.xpose.msra.mxu0 %v3087
    %3334 = vmatpush.xpose.msra.mxu0 %v3084
    %3335 = vmatpush.xpose.msra.mxu0 %v3081
    %3336 = vmatpush.xpose.msra.mxu0 %v3078
    %3337 = vmatpush.xpose.msra.mxu0 %v3075
    %3338 = vmatpush.xpose.msra.mxu0 %v3072
    %3339 = vmatpush.xpose.msra.mxu0 %v3069
    %3340 = vmatpush.xpose.msra.mxu0 %v3066
    %3341 = vmatpush.xpose.msra.mxu0 %v3063
    %3342 = vmatpush.xpose.msra.mxu0 %v3060
    %3343 = vmatmul.f32.gmra.mxu0 %v2913
    %v3344 = vpop.f32.mrf.mxu0
    %v3345 = vadd.f32 %v3325, %v3344
    %3346 = vdwg.mxu0
    %v3347 = vld [vmem:[%s2] sm:$0xff]
    %v3348 = vld [vmem:[%s2 + $0x8] sm:$0xff]
    %v3349 = vld [vmem:[%s2 + $0x10] sm:$0xff]
    %v3350 = vld [vmem:[%s2 + $0x18] sm:$0xff]
    %v3351 = vld [vmem:[%s2 + $0x20] sm:$0xff]
    %v3352 = vld [vmem:[%s2 + $0x28] sm:$0xff]
    %v3353 = vld [vmem:[%s2 + $0x30] sm:$0xff]
    %v3354 = vld [vmem:[%s2 + $0x38] sm:$0xff]
    %vm3355 = vcmask 31744
    %v3357 = vsel %vm3355, %v3347, 0
    %v3360 = vsel %vm3355, %v3348, 0
    %v3363 = vsel %vm3355, %v3349, 0
    %v3366 = vsel %vm3355, %v3350, 0
    %v3369 = vsel %vm3355, %v3351, 0
    %v3372 = vsel %vm3355, %v3352, 0
    %v3375 = vsel %vm3355, %v3353, 0
    %v3378 = vsel %vm3355, %v3354, 0
    %vm3380 = vcmask 1043456
    %v3382 = vsel %vm3380, %v3165, 0
    %v3385 = vsel %vm3380, %v3225, 0
    %v3388 = vsel %vm3380, %v3285, 0
    %v3391 = vsel %vm3380, %v3345, 0
    %3393 = vmatpush.msra.mxu0 0.0
    %3394 = vmatpush.msra.mxu0 0.0
    %3395 = vmatpush.msra.mxu0 0.0
    %3396 = vmatpush.msra.mxu0 0.0
    %3397 = vmatpush.msra.mxu0 0.0
    %3398 = vmatpush.msra.mxu0 0.0
    %3399 = vmatpush.msra.mxu0 0.0
    %3400 = vmatpush.msra.mxu0 0.0
    %3401 = vmatpush.msra.mxu0 0.0
    %3402 = vmatpush.msra.mxu0 0.0
    %3403 = vmatpush.msra.mxu0 0.0
    %3404 = vmatpush.msra.mxu0 0.0
    %3405 = vmatpush.msra.mxu0 0.0
    %3406 = vmatpush.msra.mxu0 0.0
    %3407 = vmatpush.msra.mxu0 0.0
    %3408 = vmatpush.msra.mxu0 %v3382
    %3409 = vmatmul.f32.gmra.mxu0 %v3357
    %v3410 = vpop.f32.mrf.mxu0
    %v3411 = vadd.f32 0.0, %v3410
    %3412 = vmatmul.f32.gmra.mxu0 %v3360
    %v3413 = vpop.f32.mrf.mxu0
    %v3414 = vadd.f32 0.0, %v3413
    %3415 = vmatmul.f32.gmra.mxu0 %v3363
    %v3416 = vpop.f32.mrf.mxu0
    %v3417 = vadd.f32 0.0, %v3416
    %3418 = vmatmul.f32.gmra.mxu0 %v3366
    %v3419 = vpop.f32.mrf.mxu0
    %v3420 = vadd.f32 0.0, %v3419
    %3421 = vmatmul.f32.gmra.mxu0 %v3369
    %v3422 = vpop.f32.mrf.mxu0
    %v3423 = vadd.f32 0.0, %v3422
    %3424 = vmatmul.f32.gmra.mxu0 %v3372
    %v3425 = vpop.f32.mrf.mxu0
    %v3426 = vadd.f32 0.0, %v3425
    %3427 = vmatmul.f32.gmra.mxu0 %v3375
    %v3428 = vpop.f32.mrf.mxu0
    %v3429 = vadd.f32 0.0, %v3428
    %3430 = vmatmul.f32.gmra.mxu0 %v3378
    %v3431 = vpop.f32.mrf.mxu0
    %v3432 = vadd.f32 0.0, %v3431
    %3433 = vdwg.mxu0
    %3434 = vmatpush.msra.mxu0 0.0
    %3435 = vmatpush.msra.mxu0 0.0
    %3436 = vmatpush.msra.mxu0 0.0
    %3437 = vmatpush.msra.mxu0 0.0
    %3438 = vmatpush.msra.mxu0 0.0
    %3439 = vmatpush.msra.mxu0 0.0
    %3440 = vmatpush.msra.mxu0 0.0
    %3441 = vmatpush.msra.mxu0 0.0
    %3442 = vmatpush.msra.mxu0 0.0
    %3443 = vmatpush.msra.mxu0 0.0
    %3444 = vmatpush.msra.mxu0 0.0
    %3445 = vmatpush.msra.mxu0 0.0
    %3446 = vmatpush.msra.mxu0 0.0
    %3447 = vmatpush.msra.mxu0 0.0
    %3448 = vmatpush.msra.mxu0 0.0
    %3449 = vmatpush.msra.mxu0 %v3385
    %3450 = vmatmul.f32.gmra.mxu0 %v3357
    %v3451 = vpop.f32.mrf.mxu0
    %v3452 = vadd.f32 0.0, %v3451
    %3453 = vmatmul.f32.gmra.mxu0 %v3360
    %v3454 = vpop.f32.mrf.mxu0
    %v3455 = vadd.f32 0.0, %v3454
    %3456 = vmatmul.f32.gmra.mxu0 %v3363
    %v3457 = vpop.f32.mrf.mxu0
    %v3458 = vadd.f32 0.0, %v3457
    %3459 = vmatmul.f32.gmra.mxu0 %v3366
    %v3460 = vpop.f32.mrf.mxu0
    %v3461 = vadd.f32 0.0, %v3460
    %3462 = vmatmul.f32.gmra.mxu0 %v3369
    %v3463 = vpop.f32.mrf.mxu0
    %v3464 = vadd.f32 0.0, %v3463
    %3465 = vmatmul.f32.gmra.mxu0 %v3372
    %v3466 = vpop.f32.mrf.mxu0
    %v3467 = vadd.f32 0.0, %v3466
    %3468 = vmatmul.f32.gmra.mxu0 %v3375
    %v3469 = vpop.f32.mrf.mxu0
    %v3470 = vadd.f32 0.0, %v3469
    %3471 = vmatmul.f32.gmra.mxu0 %v3378
    %v3472 = vpop.f32.mrf.mxu0
    %v3473 = vadd.f32 0.0, %v3472
    %3474 = vdwg.mxu0
    %3475 = vmatpush.msra.mxu0 0.0
    %3476 = vmatpush.msra.mxu0 0.0
    %3477 = vmatpush.msra.mxu0 0.0
    %3478 = vmatpush.msra.mxu0 0.0
    %3479 = vmatpush.msra.mxu0 0.0
    %3480 = vmatpush.msra.mxu0 0.0
    %3481 = vmatpush.msra.mxu0 0.0
    %3482 = vmatpush.msra.mxu0 0.0
    %3483 = vmatpush.msra.mxu0 0.0
    %3484 = vmatpush.msra.mxu0 0.0
    %3485 = vmatpush.msra.mxu0 0.0
    %3486 = vmatpush.msra.mxu0 0.0
    %3487 = vmatpush.msra.mxu0 0.0
    %3488 = vmatpush.msra.mxu0 0.0
    %3489 = vmatpush.msra.mxu0 0.0
    %3490 = vmatpush.msra.mxu0 %v3388
    %3491 = vmatmul.f32.gmra.mxu0 %v3357
    %v3492 = vpop.f32.mrf.mxu0
    %v3493 = vadd.f32 0.0, %v3492
    %3494 = vmatmul.f32.gmra.mxu0 %v3360
    %v3495 = vpop.f32.mrf.mxu0
    %v3496 = vadd.f32 0.0, %v3495
    %3497 = vmatmul.f32.gmra.mxu0 %v3363
    %v3498 = vpop.f32.mrf.mxu0
    %v3499 = vadd.f32 0.0, %v3498
    %3500 = vmatmul.f32.gmra.mxu0 %v3366
    %v3501 = vpop.f32.mrf.mxu0
    %v3502 = vadd.f32 0.0, %v3501
    %3503 = vmatmul.f32.gmra.mxu0 %v3369
    %v3504 = vpop.f32.mrf.mxu0
    %v3505 = vadd.f32 0.0, %v3504
    %3506 = vmatmul.f32.gmra.mxu0 %v3372
    %v3507 = vpop.f32.mrf.mxu0
    %v3508 = vadd.f32 0.0, %v3507
    %3509 = vmatmul.f32.gmra.mxu0 %v3375
    %v3510 = vpop.f32.mrf.mxu0
    %v3511 = vadd.f32 0.0, %v3510
    %3512 = vmatmul.f32.gmra.mxu0 %v3378
    %v3513 = vpop.f32.mrf.mxu0
    %v3514 = vadd.f32 0.0, %v3513
    %3515 = vdwg.mxu0
    %3516 = vmatpush.msra.mxu0 0.0
    %3517 = vmatpush.msra.mxu0 0.0
    %3518 = vmatpush.msra.mxu0 0.0
    %3519 = vmatpush.msra.mxu0 0.0
    %3520 = vmatpush.msra.mxu0 0.0
    %3521 = vmatpush.msra.mxu0 0.0
    %3522 = vmatpush.msra.mxu0 0.0
    %3523 = vmatpush.msra.mxu0 0.0
    %3524 = vmatpush.msra.mxu0 0.0
    %3525 = vmatpush.msra.mxu0 0.0
    %3526 = vmatpush.msra.mxu0 0.0
    %3527 = vmatpush.msra.mxu0 0.0
    %3528 = vmatpush.msra.mxu0 0.0
    %3529 = vmatpush.msra.mxu0 0.0
    %3530 = vmatpush.msra.mxu0 0.0
    %3531 = vmatpush.msra.mxu0 %v3391
    %3532 = vmatmul.f32.gmra.mxu0 %v3357
    %v3533 = vpop.f32.mrf.mxu0
    %v3534 = vadd.f32 0.0, %v3533
    %3535 = vmatmul.f32.gmra.mxu0 %v3360
    %v3536 = vpop.f32.mrf.mxu0
    %v3537 = vadd.f32 0.0, %v3536
    %3538 = vmatmul.f32.gmra.mxu0 %v3363
    %v3539 = vpop.f32.mrf.mxu0
    %v3540 = vadd.f32 0.0, %v3539
    %3541 = vmatmul.f32.gmra.mxu0 %v3366
    %v3542 = vpop.f32.mrf.mxu0
    %v3543 = vadd.f32 0.0, %v3542
    %3544 = vmatmul.f32.gmra.mxu0 %v3369
    %v3545 = vpop.f32.mrf.mxu0
    %v3546 = vadd.f32 0.0, %v3545
    %3547 = vmatmul.f32.gmra.mxu0 %v3372
    %v3548 = vpop.f32.mrf.mxu0
    %v3549 = vadd.f32 0.0, %v3548
    %3550 = vmatmul.f32.gmra.mxu0 %v3375
    %v3551 = vpop.f32.mrf.mxu0
    %v3552 = vadd.f32 0.0, %v3551
    %3553 = vmatmul.f32.gmra.mxu0 %v3378
    %v3554 = vpop.f32.mrf.mxu0
    %v3555 = vadd.f32 0.0, %v3554
    %3556 = vdwg.mxu0
    %3557 = vst [vmem:[#allocation3] sm:$0xff] %v3411
    %3558 = vst [vmem:[#allocation3 + $0x8] sm:$0xff] %v3452
    %3559 = vst [vmem:[#allocation3 + $0x10] sm:$0xff] %v3414
    %3560 = vst [vmem:[#allocation3 + $0x18] sm:$0xff] %v3455
    %3561 = vst [vmem:[#allocation3 + $0x20] sm:$0xff] %v3417
    %3562 = vst [vmem:[#allocation3 + $0x28] sm:$0xff] %v3458
    %3563 = vst [vmem:[#allocation3 + $0x30] sm:$0xff] %v3420
    %3564 = vst [vmem:[#allocation3 + $0x38] sm:$0xff] %v3461
    %3565 = vst [vmem:[#allocation3 + $0x40] sm:$0xff] %v3423
    %3566 = vst [vmem:[#allocation3 + $0x48] sm:$0xff] %v3464
    %3567 = vst [vmem:[#allocation3 + $0x50] sm:$0xff] %v3426
    %3568 = vst [vmem:[#allocation3 + $0x58] sm:$0xff] %v3467
    %3569 = vst [vmem:[#allocation3 + $0x60] sm:$0xff] %v3429
    %3570 = vst [vmem:[#allocation3 + $0x68] sm:$0xff] %v3470
    %3571 = vst [vmem:[#allocation3 + $0x70] sm:$0xff] %v3432
    %3572 = vst [vmem:[#allocation3 + $0x78] sm:$0xff] %v3473
    %s3573 = scalar_lea.vmem [#allocation3], 128
    %3574 = vst [vmem:[%s3573] sm:$0xff] %v3493
    %3575 = vst [vmem:[%s3573 + $0x8] sm:$0xff] %v3534
    %3576 = vst [vmem:[%s3573 + $0x10] sm:$0xff] %v3496
    %3577 = vst [vmem:[%s3573 + $0x18] sm:$0xff] %v3537
    %3578 = vst [vmem:[%s3573 + $0x20] sm:$0xff] %v3499
    %3579 = vst [vmem:[%s3573 + $0x28] sm:$0xff] %v3540
    %3580 = vst [vmem:[%s3573 + $0x30] sm:$0xff] %v3502
    %3581 = vst [vmem:[%s3573 + $0x38] sm:$0xff] %v3543
    %3582 = vst [vmem:[%s3573 + $0x40] sm:$0xff] %v3505
    %3583 = vst [vmem:[%s3573 + $0x48] sm:$0xff] %v3546
    %3584 = vst [vmem:[%s3573 + $0x50] sm:$0xff] %v3508
    %3585 = vst [vmem:[%s3573 + $0x58] sm:$0xff] %v3549
    %3586 = vst [vmem:[%s3573 + $0x60] sm:$0xff] %v3511
    %3587 = vst [vmem:[%s3573 + $0x68] sm:$0xff] %v3552
    %3588 = vst [vmem:[%s3573 + $0x70] sm:$0xff] %v3514
    %3589 = vst [vmem:[%s3573 + $0x78] sm:$0xff] %v3555
    // Predicated region
    $region14: #{tpu_custom_call.1} parent=1 // pred_check
      _
    $region15: #{tpu_custom_call.1} parent=1 // pred_check_branch
      %3591 = sbr.rel (0) target = $region17
    $region16: #{tpu_custom_call.1} parent=1 // pred_region
      %3593 = vsyncadd [#allocation4], 0
      %s3594 = sshll.u32 [#allocation3], 4
      %s3595 = int_to_ptr.vmem [resolvable:$true] %s3594
      %s3596 = sshll.u32 %s3, 4
      %s3597 = int_to_ptr.hbm [resolvable:$true] %s3596
      %3602 = dma.vmem_to_hbm [thread:$0]  %s3595, 4096, %s3597, [#allocation4], 256, 256, 16
    $region17: #{tpu_custom_call.1} parent=1 // pred_fallthru
      _
    // Predicated region
    $region18: #{tpu_custom_call.1} parent=1 // pred_check
      _
    $region19: #{tpu_custom_call.1} parent=1 // pred_check_branch
      %3604 = sbr.rel (0) target = $region21
    $region20: #{tpu_custom_call.1} parent=1 // pred_region
      %3606 = dma.done [#allocation4], 4096
    $region21: #{tpu_custom_call.1} parent=1 // pred_fallthru
      _
    %3607 = vsyncpa [#allocation4], 1

</llo_original>
